<compile_context>
chip_gen: v5e
topology: v5e:2x2
jax: 0.10.0
libtpu: 0.0.40
codegen_flags: <defaults>
</compile_context>

<pallas_src>
import functools

import jax
import jax.numpy as jnp
from jax.experimental import pallas as pl
from jax.experimental.pallas import tpu as pltpu

# ----------------------------- configuration ------------------------------
BATCH = 2
IN_CHANNELS = 4          # != 3 -> conv bias=False branch of the module
IMAGE_SIZE = 16
PATCH = 8
GRID_HW = IMAGE_SIZE // PATCH
NUM_PATCHES = GRID_HW * GRID_HW          # 4
SEQ = NUM_PATCHES + 1                    # cls token + patches = 5
D = 32                                   # embed_dim
NUM_HEADS = 4
HEAD_DIM = D // NUM_HEADS                # 8
SCALE = HEAD_DIM ** -0.5
DEPTH = 2                                # transformer blocks
MLP = 4 * D                              # mlp hidden (mlp_ratio=4)
P_DIM = IN_CHANNELS * PATCH * PATCH      # im2col patch vector length = 256
LN_EPS = 1e-6
NEG_INF = -1e30


# ------------------------------ kernel body -------------------------------
def _layernorm(x, w, b, eps=LN_EPS):
    mu = jnp.mean(x, axis=-1, keepdims=True)
    xc = x - mu
    var = jnp.mean(xc * xc, axis=-1, keepdims=True)
    return xc * jax.lax.rsqrt(var + eps) * w + b


def _gelu(x):
    # TODO(synk): timm default GELU is exact (erf-based); tanh approximation is
    # used because erf lowering is not guaranteed in Mosaic.
    c = 0.7978845608028654  # sqrt(2/pi)
    return 0.5 * x * (1.0 + jnp.tanh(c * (x + 0.044715 * x * x * x)))


def vit_kernel(xp_ref, cls_ref, posp_ref, posf_ref, bias_ref, pw_ref,
               ln1w_ref, ln1b_ref,
               qw_ref, kw_ref, vw_ref, qb_ref, kb_ref, vb_ref,
               projw_ref, projb_ref,
               ln2w_ref, ln2b_ref,
               fc1w_ref, fc1b_ref, fc2w_ref, fc2b_ref,
               nw_ref, nb_ref,
               out_ref, *, batch, need_token):
    # patch_embed for the whole batch: one (B*Np, P_DIM) @ (P_DIM, D) matmul
    # (conv with kernel=stride=patch == im2col patches @ W^T, no bias).
    patches = jnp.dot(xp_ref[...], pw_ref[...],
                      preferred_element_type=jnp.float32)          # (B*Np, D)
    # x = x + pos_embed[:, 1:, :]  (pre-cat add, matches the modified forward)
    patches = patches + posp_ref[...]

    # cat((cls_token, x), dim=1) per image along the sublane axis, then the
    # full pos_embed is added again (patch tokens get pos twice, cls once --
    # exactly as the reference forward does).
    cls_row = cls_ref[...]                                          # (1, D)
    pieces = []
    for b in range(batch):
        pieces.append(cls_row)
        pieces.append(patches[b * NUM_PATCHES:(b + 1) * NUM_PATCHES, :])
    x = jnp.concatenate(pieces, axis=0) + posf_ref[...]             # (B*SEQ, D)

    bias = bias_ref[...]                                            # (B*SEQ, B*SEQ)

    for l in range(DEPTH):
        # ---- attention branch (pre-norm), fused over the whole batch ----
        h_in = _layernorm(x, ln1w_ref[l], ln1b_ref[l])              # (B*SEQ, D)

        qw_l, kw_l, vw_l = qw_ref[l], kw_ref[l], vw_ref[l]          # (H, D, hd)
        qb_l, kb_l, vb_l = qb_ref[l], kb_ref[l], vb_ref[l]          # (H, 1, hd)

        # Per-head weight slabs: q/k/v come straight out of the MXU in
        # (H, B*SEQ, hd) layout; no lane-slicing of activations, no relayouts.
        q = jnp.stack(
            [jnp.dot(h_in, qw_l[h], preferred_element_type=jnp.float32)
             for h in range(NUM_HEADS)], axis=0) + qb_l             # (H, N, hd)
        k = jnp.stack(
            [jnp.dot(h_in, kw_l[h], preferred_element_type=jnp.float32)
             for h in range(NUM_HEADS)], axis=0) + kb_l
        v = jnp.stack(
            [jnp.dot(h_in, vw_l[h], preferred_element_type=jnp.float32)
             for h in range(NUM_HEADS)], axis=0) + vb_l
        q = q * SCALE

        # Scores over the fused batch; the block-diagonal bias masks
        # cross-image pairs, so the softmax is one vectorized pass over all
        # B*H rows (single max / exp / sum / reciprocal).
        s = jnp.einsum('hqd,hkd->hqk', q, k,
                       preferred_element_type=jnp.float32) + bias   # (H, N, N)
        s = s - jnp.max(s, axis=-1, keepdims=True)
        p = jnp.exp(s)
        p = p * pl.reciprocal(jnp.sum(p, axis=-1, keepdims=True), approx=True)
        o = jnp.einsum('hqk,hkd->hqd', p, v,
                       preferred_element_type=jnp.float32)          # (H, N, hd)

        # Head merge fused into the output projection: accumulate per-head
        # (hd, D) matmuls instead of a lane-axis concatenate.
        pw_l = projw_ref[l]                                         # (H, hd, D)
        attn = jnp.dot(o[0], pw_l[0], preferred_element_type=jnp.float32)
        for h in range(1, NUM_HEADS):
            attn = attn + jnp.dot(o[h], pw_l[h],
                                  preferred_element_type=jnp.float32)
        x = x + attn + projb_ref[l]

        # ---- MLP branch (pre-norm) ----
        h2 = _layernorm(x, ln2w_ref[l], ln2b_ref[l])
        m = jnp.dot(h2, fc1w_ref[l],
                    preferred_element_type=jnp.float32) + fc1b_ref[l]
        m = _gelu(m)
        x = x + jnp.dot(m, fc2w_ref[l],
                        preferred_element_type=jnp.float32) + fc2b_ref[l]

    if need_token:
        # final encoder norm on all tokens, written as one (B*SEQ, D) slab.
        out_ref[...] = _layernorm(x, nw_ref[...], nb_ref[...])
    else:
        # cls pooling path: final norm only on the cls rows -> (B, D) output.
        cls_tok = jnp.concatenate(
            [x[b * SEQ:b * SEQ + 1, :] for b in range(batch)], axis=0)
        out_ref[...] = _layernorm(cls_tok, nw_ref[...], nb_ref[...])


# ------------------------------ host wrapper -------------------------------
def vit_forward(x_nchw, params, need_token=False):
    B, C, H, W = x_nchw.shape
    gh, gw = H // PATCH, W // PATCH
    # im2col (glue): NCHW -> [B*num_patches, C*ph*pw], matching
    # conv_weight.reshape(D, C*ph*pw) flattening order (c, kh, kw).
    xp = x_nchw.reshape(B, C, gh, PATCH, gw, PATCH)
    xp = xp.transpose(0, 2, 4, 1, 3, 5).reshape(B * gh * gw, C * PATCH * PATCH)
    xp = xp.astype(jnp.float32)

    pos = params['pos']                                   # (SEQ, D)
    pos_patch = jnp.tile(pos[1:], (B, 1))                 # (B*Np, D)
    pos_full = jnp.tile(pos, (B, 1))                      # (B*SEQ, D)

    # Block-diagonal additive attention bias for the fused batch.
    bid = jnp.arange(B * SEQ) // SEQ
    attn_bias = jnp.where(bid[:, None] == bid[None, :], 0.0, NEG_INF)
    attn_bias = attn_bias.astype(jnp.float32)             # (B*SEQ, B*SEQ)

    # Host-side per-head weight slabs (pure layout glue): fuses the head
    # split/merge into the weight layout so the kernel never lane-slices.
    def _head_w(w):   # (DEPTH, D, D) -> (DEPTH, H, D, hd)
        return w.reshape(DEPTH, D, NUM_HEADS, HEAD_DIM).transpose(0, 2, 1, 3)

    def _head_b(b):   # (DEPTH, 1, D) -> (DEPTH, H, 1, hd)
        return b.reshape(DEPTH, 1, NUM_HEADS, HEAD_DIM).transpose(0, 2, 1, 3)

    qkv_w, qkv_b = params['qkv_w'], params['qkv_b']
    q_w = _head_w(qkv_w[..., :D])
    k_w = _head_w(qkv_w[..., D:2 * D])
    v_w = _head_w(qkv_w[..., 2 * D:])
    q_b = _head_b(qkv_b[..., :D])
    k_b = _head_b(qkv_b[..., D:2 * D])
    v_b = _head_b(qkv_b[..., 2 * D:])
    proj_hw = params['proj_w'].reshape(DEPTH, NUM_HEADS, HEAD_DIM, D)

    inputs = [xp, params['cls'], pos_patch, pos_full, attn_bias,
              params['patch_w'],
              params['ln1_w'], params['ln1_b'],
              q_w, k_w, v_w, q_b, k_b, v_b,
              proj_hw, params['proj_b'],
              params['ln2_w'], params['ln2_b'],
              params['fc1_w'], params['fc1_b'],
              params['fc2_w'], params['fc2_b'],
              params['norm_w'], params['norm_b']]

    out_shape = (jax.ShapeDtypeStruct((B * SEQ, D), jnp.float32) if need_token
                 else jax.ShapeDtypeStruct((B, D), jnp.float32))

    vmem = pltpu.MemorySpace.VMEM
    out = pl.pallas_call(
        functools.partial(vit_kernel, batch=B, need_token=need_token),
        out_shape=out_shape,
        in_specs=[pl.BlockSpec(memory_space=vmem)] * len(inputs),
        out_specs=pl.BlockSpec(memory_space=vmem),
    )(*inputs)

    if need_token:
        tokens = out.reshape(B, SEQ, D)
        return tokens[:, 0], tokens[:, 1:]      # (global cls, patch tokens)
    return out                                   # pool_method == 'cls'


# --------------------------- deterministic params --------------------------
def init_params(key):
    keys = jax.random.split(key, 12)

    def nrm(k, shape, scale=0.02):
        return (scale * jax.random.normal(k, shape)).astype(jnp.float32)

    return dict(
        # conv weight (D, C, ph, pw) stored pre-flattened & transposed: (C*ph*pw, D)
        patch_w=nrm(keys[0], (P_DIM, D)),
        cls=nrm(keys[1], (1, D)),
        pos=nrm(keys[2], (SEQ, D)),
        ln1_w=jnp.ones((DEPTH, 1, D), jnp.float32),
        ln1_b=jnp.zeros((DEPTH, 1, D), jnp.float32),
        qkv_w=nrm(keys[3], (DEPTH, D, 3 * D)),
        qkv_b=nrm(keys[4], (DEPTH, 1, 3 * D)),
        proj_w=nrm(keys[5], (DEPTH, D, D)),
        proj_b=nrm(keys[6], (DEPTH, 1, D)),
        ln2_w=jnp.ones((DEPTH, 1, D), jnp.float32),
        ln2_b=jnp.zeros((DEPTH, 1, D), jnp.float32),
        fc1_w=nrm(keys[7], (DEPTH, D, MLP)),
        fc1_b=nrm(keys[8], (DEPTH, 1, MLP)),
        fc2_w=nrm(keys[9], (DEPTH, MLP, D)),
        fc2_b=nrm(keys[10], (DEPTH, 1, D)),
        norm_w=jnp.ones((1, D), jnp.float32),
        norm_b=jnp.zeros((1, D), jnp.float32),
    )


if __name__ == "__main__":
    key = jax.random.PRNGKey(0)
    kx, kp = jax.random.split(key)
    x = jax.random.normal(kx, (BATCH, IN_CHANNELS, IMAGE_SIZE, IMAGE_SIZE),
                          dtype=jnp.float32)
    params = init_params(kp)

    global_x = vit_forward(x, params)                     # default: need_token=False
    global_x = jax.block_until_ready(global_x)
    assert global_x.shape == (BATCH, D)

    g2, toks = vit_forward(x, params, need_token=True)
    jax.block_until_ready((g2, toks))
    assert g2.shape == (BATCH, D)
    assert toks.shape == (BATCH, NUM_PATCHES, D)

    print("KERNEL_OK")
</pallas_src>

<mosaic_0001>
module attributes {stable_mosaic.version = 11 : i64} {
  func.func @vit_kernel(%arg0: memref<8x256xf32, #tpu.memory_space<vmem>>, %arg1: memref<1x32xf32, #tpu.memory_space<vmem>>, %arg2: memref<8x32xf32, #tpu.memory_space<vmem>>, %arg3: memref<10x32xf32, #tpu.memory_space<vmem>>, %arg4: memref<10x10xf32, #tpu.memory_space<vmem>>, %arg5: memref<256x32xf32, #tpu.memory_space<vmem>>, %arg6: memref<2x1x32xf32, #tpu.memory_space<vmem>>, %arg7: memref<2x1x32xf32, #tpu.memory_space<vmem>>, %arg8: memref<2x4x32x8xf32, #tpu.memory_space<vmem>>, %arg9: memref<2x4x32x8xf32, #tpu.memory_space<vmem>>, %arg10: memref<2x4x32x8xf32, #tpu.memory_space<vmem>>, %arg11: memref<2x4x1x8xf32, #tpu.memory_space<vmem>>, %arg12: memref<2x4x1x8xf32, #tpu.memory_space<vmem>>, %arg13: memref<2x4x1x8xf32, #tpu.memory_space<vmem>>, %arg14: memref<2x4x8x32xf32, #tpu.memory_space<vmem>>, %arg15: memref<2x1x32xf32, #tpu.memory_space<vmem>>, %arg16: memref<2x1x32xf32, #tpu.memory_space<vmem>>, %arg17: memref<2x1x32xf32, #tpu.memory_space<vmem>>, %arg18: memref<2x32x128xf32, #tpu.memory_space<vmem>>, %arg19: memref<2x1x128xf32, #tpu.memory_space<vmem>>, %arg20: memref<2x128x32xf32, #tpu.memory_space<vmem>>, %arg21: memref<2x1x32xf32, #tpu.memory_space<vmem>>, %arg22: memref<1x32xf32, #tpu.memory_space<vmem>>, %arg23: memref<1x32xf32, #tpu.memory_space<vmem>>, %arg24: memref<2x32xf32, #tpu.memory_space<vmem>>) attributes {dimension_semantics = [], scalar_prefetch = 0 : i64, scratch_operands = 0 : i64, tpu.core_type = #tpu.core_type<tc>} {
    %c0 = arith.constant 0 : index
    %c0_0 = arith.constant 0 : index
    %0 = vector.load %arg0[%c0, %c0_0] : memref<8x256xf32, #tpu.memory_space<vmem>>, vector<8x256xf32>
    %c0_1 = arith.constant 0 : index
    %c0_2 = arith.constant 0 : index
    %1 = vector.load %arg5[%c0_1, %c0_2] : memref<256x32xf32, #tpu.memory_space<vmem>>, vector<256x32xf32>
    %cst = arith.constant dense<0.000000e+00> : vector<8x32xf32>
    %2 = tpu.matmul %0, %1, %cst {dimension_numbers = #tpu.dot_dimension_numbers<[1], [0], [0], [1], [0, 0, 1, 1], [], []>} : vector<8x256xf32>, vector<256x32xf32>, vector<8x32xf32> -> vector<8x32xf32>
    %c0_3 = arith.constant 0 : index
    %c0_4 = arith.constant 0 : index
    %3 = vector.load %arg2[%c0_3, %c0_4] : memref<8x32xf32, #tpu.memory_space<vmem>>, vector<8x32xf32>
    %4 = arith.addf %2, %3 : vector<8x32xf32>
    %c0_5 = arith.constant 0 : index
    %c0_6 = arith.constant 0 : index
    %5 = vector.load %arg1[%c0_5, %c0_6] : memref<1x32xf32, #tpu.memory_space<vmem>>, vector<1x32xf32>
    %6 = vector.extract_strided_slice %4 {offsets = [0, 0], sizes = [4, 32], strides = [1, 1]} : vector<8x32xf32> to vector<4x32xf32>
    %7 = vector.extract_strided_slice %4 {offsets = [4, 0], sizes = [4, 32], strides = [1, 1]} : vector<8x32xf32> to vector<4x32xf32>
    %8 = tpu.concatenate %5, %6, %5, %7 in 0 : vector<1x32xf32>, vector<4x32xf32>, vector<1x32xf32>, vector<4x32xf32> -> vector<10x32xf32>
    %c0_7 = arith.constant 0 : index
    %c0_8 = arith.constant 0 : index
    %9 = vector.load %arg3[%c0_7, %c0_8] : memref<10x32xf32, #tpu.memory_space<vmem>>, vector<10x32xf32>
    %10 = arith.addf %8, %9 : vector<10x32xf32>
    %c0_9 = arith.constant 0 : index
    %c0_10 = arith.constant 0 : index
    %11 = vector.load %arg4[%c0_9, %c0_10] : memref<10x10xf32, #tpu.memory_space<vmem>>, vector<10x10xf32>
    %c0_11 = arith.constant 0 : index
    %c0_12 = arith.constant 0 : index
    %c0_13 = arith.constant 0 : index
    %12 = vector.load %arg6[%c0_11, %c0_12, %c0_13] : memref<2x1x32xf32, #tpu.memory_space<vmem>>, vector<1x1x32xf32>
    %13 = vector.shape_cast %12 : vector<1x1x32xf32> to vector<1x32xf32>
    %c0_14 = arith.constant 0 : index
    %c0_15 = arith.constant 0 : index
    %c0_16 = arith.constant 0 : index
    %14 = vector.load %arg7[%c0_14, %c0_15, %c0_16] : memref<2x1x32xf32, #tpu.memory_space<vmem>>, vector<1x1x32xf32>
    %15 = vector.shape_cast %14 : vector<1x1x32xf32> to vector<1x32xf32>
    %cst_17 = arith.constant dense<0.000000e+00> : vector<10xf32>
    %16 = vector.multi_reduction <add>, %10, %cst_17 [1] : vector<10x32xf32> to vector<10xf32>
    %17 = vector.shape_cast %16 : vector<10xf32> to vector<10x1xf32>
    %cst_18 = arith.constant 3.200000e+01 : f32
    %18 = vector.broadcast %cst_18 : f32 to vector<10x1xf32>
    %19 = arith.divf %17, %18 : vector<10x1xf32>
    %20 = vector.broadcast %19 : vector<10x1xf32> to vector<10x32xf32>
    %21 = arith.subf %10, %20 : vector<10x32xf32>
    %22 = arith.mulf %21, %21 : vector<10x32xf32>
    %cst_19 = arith.constant dense<0.000000e+00> : vector<10xf32>
    %23 = vector.multi_reduction <add>, %22, %cst_19 [1] : vector<10x32xf32> to vector<10xf32>
    %24 = vector.shape_cast %23 : vector<10xf32> to vector<10x1xf32>
    %cst_20 = arith.constant 3.200000e+01 : f32
    %25 = vector.broadcast %cst_20 : f32 to vector<10x1xf32>
    %26 = arith.divf %24, %25 : vector<10x1xf32>
    %cst_21 = arith.constant 9.99999997E-7 : f32
    %27 = vector.broadcast %cst_21 : f32 to vector<10x1xf32>
    %28 = arith.addf %26, %27 : vector<10x1xf32>
    %29 = math.rsqrt %28 : vector<10x1xf32>
    %30 = vector.broadcast %29 : vector<10x1xf32> to vector<10x32xf32>
    %31 = arith.mulf %21, %30 : vector<10x32xf32>
    %32 = vector.broadcast %13 : vector<1x32xf32> to vector<10x32xf32>
    %33 = arith.mulf %31, %32 : vector<10x32xf32>
    %34 = vector.broadcast %15 : vector<1x32xf32> to vector<10x32xf32>
    %35 = arith.addf %33, %34 : vector<10x32xf32>
    %c0_22 = arith.constant 0 : index
    %c0_23 = arith.constant 0 : index
    %c0_24 = arith.constant 0 : index
    %c0_25 = arith.constant 0 : index
    %36 = vector.load %arg8[%c0_22, %c0_23, %c0_24, %c0_25] : memref<2x4x32x8xf32, #tpu.memory_space<vmem>>, vector<1x4x32x8xf32>
    %37 = vector.shape_cast %36 : vector<1x4x32x8xf32> to vector<4x32x8xf32>
    %c0_26 = arith.constant 0 : index
    %c0_27 = arith.constant 0 : index
    %c0_28 = arith.constant 0 : index
    %c0_29 = arith.constant 0 : index
    %38 = vector.load %arg9[%c0_26, %c0_27, %c0_28, %c0_29] : memref<2x4x32x8xf32, #tpu.memory_space<vmem>>, vector<1x4x32x8xf32>
    %39 = vector.shape_cast %38 : vector<1x4x32x8xf32> to vector<4x32x8xf32>
    %c0_30 = arith.constant 0 : index
    %c0_31 = arith.constant 0 : index
    %c0_32 = arith.constant 0 : index
    %c0_33 = arith.constant 0 : index
    %40 = vector.load %arg10[%c0_30, %c0_31, %c0_32, %c0_33] : memref<2x4x32x8xf32, #tpu.memory_space<vmem>>, vector<1x4x32x8xf32>
    %41 = vector.shape_cast %40 : vector<1x4x32x8xf32> to vector<4x32x8xf32>
    %c0_34 = arith.constant 0 : index
    %c0_35 = arith.constant 0 : index
    %c0_36 = arith.constant 0 : index
    %c0_37 = arith.constant 0 : index
    %42 = vector.load %arg11[%c0_34, %c0_35, %c0_36, %c0_37] : memref<2x4x1x8xf32, #tpu.memory_space<vmem>>, vector<1x4x1x8xf32>
    %43 = vector.shape_cast %42 : vector<1x4x1x8xf32> to vector<4x1x8xf32>
    %c0_38 = arith.constant 0 : index
    %c0_39 = arith.constant 0 : index
    %c0_40 = arith.constant 0 : index
    %c0_41 = arith.constant 0 : index
    %44 = vector.load %arg12[%c0_38, %c0_39, %c0_40, %c0_41] : memref<2x4x1x8xf32, #tpu.memory_space<vmem>>, vector<1x4x1x8xf32>
    %45 = vector.shape_cast %44 : vector<1x4x1x8xf32> to vector<4x1x8xf32>
    %c0_42 = arith.constant 0 : index
    %c0_43 = arith.constant 0 : index
    %c0_44 = arith.constant 0 : index
    %c0_45 = arith.constant 0 : index
    %46 = vector.load %arg13[%c0_42, %c0_43, %c0_44, %c0_45] : memref<2x4x1x8xf32, #tpu.memory_space<vmem>>, vector<1x4x1x8xf32>
    %47 = vector.shape_cast %46 : vector<1x4x1x8xf32> to vector<4x1x8xf32>
    %48 = vector.extract_strided_slice %37 {offsets = [0, 0, 0], sizes = [1, 32, 8], strides = [1, 1, 1]} : vector<4x32x8xf32> to vector<1x32x8xf32>
    %49 = vector.shape_cast %48 : vector<1x32x8xf32> to vector<32x8xf32>
    %cst_46 = arith.constant dense<0.000000e+00> : vector<10x8xf32>
    %50 = tpu.matmul %35, %49, %cst_46 {dimension_numbers = #tpu.dot_dimension_numbers<[1], [0], [0], [1], [0, 0, 1, 1], [], []>} : vector<10x32xf32>, vector<32x8xf32>, vector<10x8xf32> -> vector<10x8xf32>
    %51 = vector.extract_strided_slice %37 {offsets = [1, 0, 0], sizes = [1, 32, 8], strides = [1, 1, 1]} : vector<4x32x8xf32> to vector<1x32x8xf32>
    %52 = vector.shape_cast %51 : vector<1x32x8xf32> to vector<32x8xf32>
    %cst_47 = arith.constant dense<0.000000e+00> : vector<10x8xf32>
    %53 = tpu.matmul %35, %52, %cst_47 {dimension_numbers = #tpu.dot_dimension_numbers<[1], [0], [0], [1], [0, 0, 1, 1], [], []>} : vector<10x32xf32>, vector<32x8xf32>, vector<10x8xf32> -> vector<10x8xf32>
    %54 = vector.extract_strided_slice %37 {offsets = [2, 0, 0], sizes = [1, 32, 8], strides = [1, 1, 1]} : vector<4x32x8xf32> to vector<1x32x8xf32>
    %55 = vector.shape_cast %54 : vector<1x32x8xf32> to vector<32x8xf32>
    %cst_48 = arith.constant dense<0.000000e+00> : vector<10x8xf32>
    %56 = tpu.matmul %35, %55, %cst_48 {dimension_numbers = #tpu.dot_dimension_numbers<[1], [0], [0], [1], [0, 0, 1, 1], [], []>} : vector<10x32xf32>, vector<32x8xf32>, vector<10x8xf32> -> vector<10x8xf32>
    %57 = vector.extract_strided_slice %37 {offsets = [3, 0, 0], sizes = [1, 32, 8], strides = [1, 1, 1]} : vector<4x32x8xf32> to vector<1x32x8xf32>
    %58 = vector.shape_cast %57 : vector<1x32x8xf32> to vector<32x8xf32>
    %cst_49 = arith.constant dense<0.000000e+00> : vector<10x8xf32>
    %59 = tpu.matmul %35, %58, %cst_49 {dimension_numbers = #tpu.dot_dimension_numbers<[1], [0], [0], [1], [0, 0, 1, 1], [], []>} : vector<10x32xf32>, vector<32x8xf32>, vector<10x8xf32> -> vector<10x8xf32>
    %60 = vector.shape_cast %50 : vector<10x8xf32> to vector<1x10x8xf32>
    %61 = vector.shape_cast %53 : vector<10x8xf32> to vector<1x10x8xf32>
    %62 = vector.shape_cast %56 : vector<10x8xf32> to vector<1x10x8xf32>
    %63 = vector.shape_cast %59 : vector<10x8xf32> to vector<1x10x8xf32>
    %64 = tpu.concatenate %60, %61, %62, %63 in 0 : vector<1x10x8xf32>, vector<1x10x8xf32>, vector<1x10x8xf32>, vector<1x10x8xf32> -> vector<4x10x8xf32>
    %65 = vector.broadcast %43 : vector<4x1x8xf32> to vector<4x10x8xf32>
    %66 = arith.addf %64, %65 : vector<4x10x8xf32>
    %67 = vector.extract_strided_slice %39 {offsets = [0, 0, 0], sizes = [1, 32, 8], strides = [1, 1, 1]} : vector<4x32x8xf32> to vector<1x32x8xf32>
    %68 = vector.shape_cast %67 : vector<1x32x8xf32> to vector<32x8xf32>
    %cst_50 = arith.constant dense<0.000000e+00> : vector<10x8xf32>
    %69 = tpu.matmul %35, %68, %cst_50 {dimension_numbers = #tpu.dot_dimension_numbers<[1], [0], [0], [1], [0, 0, 1, 1], [], []>} : vector<10x32xf32>, vector<32x8xf32>, vector<10x8xf32> -> vector<10x8xf32>
    %70 = vector.extract_strided_slice %39 {offsets = [1, 0, 0], sizes = [1, 32, 8], strides = [1, 1, 1]} : vector<4x32x8xf32> to vector<1x32x8xf32>
    %71 = vector.shape_cast %70 : vector<1x32x8xf32> to vector<32x8xf32>
    %cst_51 = arith.constant dense<0.000000e+00> : vector<10x8xf32>
    %72 = tpu.matmul %35, %71, %cst_51 {dimension_numbers = #tpu.dot_dimension_numbers<[1], [0], [0], [1], [0, 0, 1, 1], [], []>} : vector<10x32xf32>, vector<32x8xf32>, vector<10x8xf32> -> vector<10x8xf32>
    %73 = vector.extract_strided_slice %39 {offsets = [2, 0, 0], sizes = [1, 32, 8], strides = [1, 1, 1]} : vector<4x32x8xf32> to vector<1x32x8xf32>
    %74 = vector.shape_cast %73 : vector<1x32x8xf32> to vector<32x8xf32>
    %cst_52 = arith.constant dense<0.000000e+00> : vector<10x8xf32>
    %75 = tpu.matmul %35, %74, %cst_52 {dimension_numbers = #tpu.dot_dimension_numbers<[1], [0], [0], [1], [0, 0, 1, 1], [], []>} : vector<10x32xf32>, vector<32x8xf32>, vector<10x8xf32> -> vector<10x8xf32>
    %76 = vector.extract_strided_slice %39 {offsets = [3, 0, 0], sizes = [1, 32, 8], strides = [1, 1, 1]} : vector<4x32x8xf32> to vector<1x32x8xf32>
    %77 = vector.shape_cast %76 : vector<1x32x8xf32> to vector<32x8xf32>
    %cst_53 = arith.constant dense<0.000000e+00> : vector<10x8xf32>
    %78 = tpu.matmul %35, %77, %cst_53 {dimension_numbers = #tpu.dot_dimension_numbers<[1], [0], [0], [1], [0, 0, 1, 1], [], []>} : vector<10x32xf32>, vector<32x8xf32>, vector<10x8xf32> -> vector<10x8xf32>
    %79 = vector.shape_cast %69 : vector<10x8xf32> to vector<1x10x8xf32>
    %80 = vector.shape_cast %72 : vector<10x8xf32> to vector<1x10x8xf32>
    %81 = vector.shape_cast %75 : vector<10x8xf32> to vector<1x10x8xf32>
    %82 = vector.shape_cast %78 : vector<10x8xf32> to vector<1x10x8xf32>
    %83 = tpu.concatenate %79, %80, %81, %82 in 0 : vector<1x10x8xf32>, vector<1x10x8xf32>, vector<1x10x8xf32>, vector<1x10x8xf32> -> vector<4x10x8xf32>
    %84 = vector.broadcast %45 : vector<4x1x8xf32> to vector<4x10x8xf32>
    %85 = arith.addf %83, %84 : vector<4x10x8xf32>
    %86 = vector.extract_strided_slice %41 {offsets = [0, 0, 0], sizes = [1, 32, 8], strides = [1, 1, 1]} : vector<4x32x8xf32> to vector<1x32x8xf32>
    %87 = vector.shape_cast %86 : vector<1x32x8xf32> to vector<32x8xf32>
    %cst_54 = arith.constant dense<0.000000e+00> : vector<10x8xf32>
    %88 = tpu.matmul %35, %87, %cst_54 {dimension_numbers = #tpu.dot_dimension_numbers<[1], [0], [0], [1], [0, 0, 1, 1], [], []>} : vector<10x32xf32>, vector<32x8xf32>, vector<10x8xf32> -> vector<10x8xf32>
    %89 = vector.extract_strided_slice %41 {offsets = [1, 0, 0], sizes = [1, 32, 8], strides = [1, 1, 1]} : vector<4x32x8xf32> to vector<1x32x8xf32>
    %90 = vector.shape_cast %89 : vector<1x32x8xf32> to vector<32x8xf32>
    %cst_55 = arith.constant dense<0.000000e+00> : vector<10x8xf32>
    %91 = tpu.matmul %35, %90, %cst_55 {dimension_numbers = #tpu.dot_dimension_numbers<[1], [0], [0], [1], [0, 0, 1, 1], [], []>} : vector<10x32xf32>, vector<32x8xf32>, vector<10x8xf32> -> vector<10x8xf32>
    %92 = vector.extract_strided_slice %41 {offsets = [2, 0, 0], sizes = [1, 32, 8], strides = [1, 1, 1]} : vector<4x32x8xf32> to vector<1x32x8xf32>
    %93 = vector.shape_cast %92 : vector<1x32x8xf32> to vector<32x8xf32>
    %cst_56 = arith.constant dense<0.000000e+00> : vector<10x8xf32>
    %94 = tpu.matmul %35, %93, %cst_56 {dimension_numbers = #tpu.dot_dimension_numbers<[1], [0], [0], [1], [0, 0, 1, 1], [], []>} : vector<10x32xf32>, vector<32x8xf32>, vector<10x8xf32> -> vector<10x8xf32>
    %95 = vector.extract_strided_slice %41 {offsets = [3, 0, 0], sizes = [1, 32, 8], strides = [1, 1, 1]} : vector<4x32x8xf32> to vector<1x32x8xf32>
    %96 = vector.shape_cast %95 : vector<1x32x8xf32> to vector<32x8xf32>
    %cst_57 = arith.constant dense<0.000000e+00> : vector<10x8xf32>
    %97 = tpu.matmul %35, %96, %cst_57 {dimension_numbers = #tpu.dot_dimension_numbers<[1], [0], [0], [1], [0, 0, 1, 1], [], []>} : vector<10x32xf32>, vector<32x8xf32>, vector<10x8xf32> -> vector<10x8xf32>
    %98 = vector.shape_cast %88 : vector<10x8xf32> to vector<1x10x8xf32>
    %99 = vector.shape_cast %91 : vector<10x8xf32> to vector<1x10x8xf32>
    %100 = vector.shape_cast %94 : vector<10x8xf32> to vector<1x10x8xf32>
    %101 = vector.shape_cast %97 : vector<10x8xf32> to vector<1x10x8xf32>
    %102 = tpu.concatenate %98, %99, %100, %101 in 0 : vector<1x10x8xf32>, vector<1x10x8xf32>, vector<1x10x8xf32>, vector<1x10x8xf32> -> vector<4x10x8xf32>
    %103 = vector.broadcast %47 : vector<4x1x8xf32> to vector<4x10x8xf32>
    %104 = arith.addf %102, %103 : vector<4x10x8xf32>
    %cst_58 = arith.constant 0.353553385 : f32
    %105 = vector.broadcast %cst_58 : f32 to vector<4x10x8xf32>
    %106 = arith.mulf %66, %105 : vector<4x10x8xf32>
    "tpu.trace_start"() <{level = 10 : i32, message = "hqd,hkd->hqk"}> : () -> ()
    %cst_59 = arith.constant dense<0.000000e+00> : vector<4x10x10xf32>
    %107 = tpu.matmul %106, %85, %cst_59 {dimension_numbers = #tpu.dot_dimension_numbers<[2], [2], [1], [1], [0, 0, 0, 1, 1, 1], [0], [0]>} : vector<4x10x8xf32>, vector<4x10x8xf32>, vector<4x10x10xf32> -> vector<4x10x10xf32>
    "tpu.trace_stop"() : () -> ()
    %108 = vector.shape_cast %11 : vector<10x10xf32> to vector<1x10x10xf32>
    %109 = vector.broadcast %108 : vector<1x10x10xf32> to vector<4x10x10xf32>
    %110 = arith.addf %107, %109 : vector<4x10x10xf32>
    %cst_60 = arith.constant dense<0xFF800000> : vector<4x10xf32>
    %111 = vector.multi_reduction <maximumf>, %110, %cst_60 [2] : vector<4x10x10xf32> to vector<4x10xf32>
    %112 = vector.shape_cast %111 : vector<4x10xf32> to vector<4x10x1xf32>
    %113 = vector.broadcast %112 : vector<4x10x1xf32> to vector<4x10x10xf32>
    %114 = arith.subf %110, %113 : vector<4x10x10xf32>
    %115 = math.exp %114 : vector<4x10x10xf32>
    %cst_61 = arith.constant dense<0.000000e+00> : vector<4x10xf32>
    %116 = vector.multi_reduction <add>, %115, %cst_61 [2] : vector<4x10x10xf32> to vector<4x10xf32>
    %117 = vector.shape_cast %116 : vector<4x10xf32> to vector<4x10x1xf32>
    %118 = tpu.reciprocal %117 {approx = true} : vector<4x10x1xf32> -> vector<4x10x1xf32>
    %119 = vector.broadcast %118 : vector<4x10x1xf32> to vector<4x10x10xf32>
    %120 = arith.mulf %115, %119 : vector<4x10x10xf32>
    "tpu.trace_start"() <{level = 10 : i32, message = "hqk,hkd->hqd"}> : () -> ()
    %cst_62 = arith.constant dense<0.000000e+00> : vector<4x10x8xf32>
    %121 = tpu.matmul %120, %104, %cst_62 {dimension_numbers = #tpu.dot_dimension_numbers<[2], [1], [1], [2], [0, 0, 0, 1, 1, 2], [0], [0]>} : vector<4x10x10xf32>, vector<4x10x8xf32>, vector<4x10x8xf32> -> vector<4x10x8xf32>
    "tpu.trace_stop"() : () -> ()
    %c0_63 = arith.constant 0 : index
    %c0_64 = arith.constant 0 : index
    %c0_65 = arith.constant 0 : index
    %c0_66 = arith.constant 0 : index
    %122 = vector.load %arg14[%c0_63, %c0_64, %c0_65, %c0_66] : memref<2x4x8x32xf32, #tpu.memory_space<vmem>>, vector<1x4x8x32xf32>
    %123 = vector.shape_cast %122 : vector<1x4x8x32xf32> to vector<4x8x32xf32>
    %124 = vector.extract_strided_slice %121 {offsets = [0, 0, 0], sizes = [1, 10, 8], strides = [1, 1, 1]} : vector<4x10x8xf32> to vector<1x10x8xf32>
    %125 = vector.shape_cast %124 : vector<1x10x8xf32> to vector<10x8xf32>
    %126 = vector.extract_strided_slice %123 {offsets = [0, 0, 0], sizes = [1, 8, 32], strides = [1, 1, 1]} : vector<4x8x32xf32> to vector<1x8x32xf32>
    %127 = vector.shape_cast %126 : vector<1x8x32xf32> to vector<8x32xf32>
    %cst_67 = arith.constant dense<0.000000e+00> : vector<10x32xf32>
    %128 = tpu.matmul %125, %127, %cst_67 {dimension_numbers = #tpu.dot_dimension_numbers<[1], [0], [0], [1], [0, 0, 1, 1], [], []>} : vector<10x8xf32>, vector<8x32xf32>, vector<10x32xf32> -> vector<10x32xf32>
    %129 = vector.extract_strided_slice %121 {offsets = [1, 0, 0], sizes = [1, 10, 8], strides = [1, 1, 1]} : vector<4x10x8xf32> to vector<1x10x8xf32>
    %130 = vector.shape_cast %129 : vector<1x10x8xf32> to vector<10x8xf32>
    %131 = vector.extract_strided_slice %123 {offsets = [1, 0, 0], sizes = [1, 8, 32], strides = [1, 1, 1]} : vector<4x8x32xf32> to vector<1x8x32xf32>
    %132 = vector.shape_cast %131 : vector<1x8x32xf32> to vector<8x32xf32>
    %cst_68 = arith.constant dense<0.000000e+00> : vector<10x32xf32>
    %133 = tpu.matmul %130, %132, %cst_68 {dimension_numbers = #tpu.dot_dimension_numbers<[1], [0], [0], [1], [0, 0, 1, 1], [], []>} : vector<10x8xf32>, vector<8x32xf32>, vector<10x32xf32> -> vector<10x32xf32>
    %134 = arith.addf %128, %133 : vector<10x32xf32>
    %135 = vector.extract_strided_slice %121 {offsets = [2, 0, 0], sizes = [1, 10, 8], strides = [1, 1, 1]} : vector<4x10x8xf32> to vector<1x10x8xf32>
    %136 = vector.shape_cast %135 : vector<1x10x8xf32> to vector<10x8xf32>
    %137 = vector.extract_strided_slice %123 {offsets = [2, 0, 0], sizes = [1, 8, 32], strides = [1, 1, 1]} : vector<4x8x32xf32> to vector<1x8x32xf32>
    %138 = vector.shape_cast %137 : vector<1x8x32xf32> to vector<8x32xf32>
    %cst_69 = arith.constant dense<0.000000e+00> : vector<10x32xf32>
    %139 = tpu.matmul %136, %138, %cst_69 {dimension_numbers = #tpu.dot_dimension_numbers<[1], [0], [0], [1], [0, 0, 1, 1], [], []>} : vector<10x8xf32>, vector<8x32xf32>, vector<10x32xf32> -> vector<10x32xf32>
    %140 = arith.addf %134, %139 : vector<10x32xf32>
    %141 = vector.extract_strided_slice %121 {offsets = [3, 0, 0], sizes = [1, 10, 8], strides = [1, 1, 1]} : vector<4x10x8xf32> to vector<1x10x8xf32>
    %142 = vector.shape_cast %141 : vector<1x10x8xf32> to vector<10x8xf32>
    %143 = vector.extract_strided_slice %123 {offsets = [3, 0, 0], sizes = [1, 8, 32], strides = [1, 1, 1]} : vector<4x8x32xf32> to vector<1x8x32xf32>
    %144 = vector.shape_cast %143 : vector<1x8x32xf32> to vector<8x32xf32>
    %cst_70 = arith.constant dense<0.000000e+00> : vector<10x32xf32>
    %145 = tpu.matmul %142, %144, %cst_70 {dimension_numbers = #tpu.dot_dimension_numbers<[1], [0], [0], [1], [0, 0, 1, 1], [], []>} : vector<10x8xf32>, vector<8x32xf32>, vector<10x32xf32> -> vector<10x32xf32>
    %146 = arith.addf %140, %145 : vector<10x32xf32>
    %147 = arith.addf %10, %146 : vector<10x32xf32>
    %c0_71 = arith.constant 0 : index
    %c0_72 = arith.constant 0 : index
    %c0_73 = arith.constant 0 : index
    %148 = vector.load %arg15[%c0_71, %c0_72, %c0_73] : memref<2x1x32xf32, #tpu.memory_space<vmem>>, vector<1x1x32xf32>
    %149 = vector.shape_cast %148 : vector<1x1x32xf32> to vector<1x32xf32>
    %150 = vector.broadcast %149 : vector<1x32xf32> to vector<10x32xf32>
    %151 = arith.addf %147, %150 : vector<10x32xf32>
    %c0_74 = arith.constant 0 : index
    %c0_75 = arith.constant 0 : index
    %c0_76 = arith.constant 0 : index
    %152 = vector.load %arg16[%c0_74, %c0_75, %c0_76] : memref<2x1x32xf32, #tpu.memory_space<vmem>>, vector<1x1x32xf32>
    %153 = vector.shape_cast %152 : vector<1x1x32xf32> to vector<1x32xf32>
    %c0_77 = arith.constant 0 : index
    %c0_78 = arith.constant 0 : index
    %c0_79 = arith.constant 0 : index
    %154 = vector.load %arg17[%c0_77, %c0_78, %c0_79] : memref<2x1x32xf32, #tpu.memory_space<vmem>>, vector<1x1x32xf32>
    %155 = vector.shape_cast %154 : vector<1x1x32xf32> to vector<1x32xf32>
    %cst_80 = arith.constant dense<0.000000e+00> : vector<10xf32>
    %156 = vector.multi_reduction <add>, %151, %cst_80 [1] : vector<10x32xf32> to vector<10xf32>
    %157 = vector.shape_cast %156 : vector<10xf32> to vector<10x1xf32>
    %cst_81 = arith.constant 3.200000e+01 : f32
    %158 = vector.broadcast %cst_81 : f32 to vector<10x1xf32>
    %159 = arith.divf %157, %158 : vector<10x1xf32>
    %160 = vector.broadcast %159 : vector<10x1xf32> to vector<10x32xf32>
    %161 = arith.subf %151, %160 : vector<10x32xf32>
    %162 = arith.mulf %161, %161 : vector<10x32xf32>
    %cst_82 = arith.constant dense<0.000000e+00> : vector<10xf32>
    %163 = vector.multi_reduction <add>, %162, %cst_82 [1] : vector<10x32xf32> to vector<10xf32>
    %164 = vector.shape_cast %163 : vector<10xf32> to vector<10x1xf32>
    %cst_83 = arith.constant 3.200000e+01 : f32
    %165 = vector.broadcast %cst_83 : f32 to vector<10x1xf32>
    %166 = arith.divf %164, %165 : vector<10x1xf32>
    %cst_84 = arith.constant 9.99999997E-7 : f32
    %167 = vector.broadcast %cst_84 : f32 to vector<10x1xf32>
    %168 = arith.addf %166, %167 : vector<10x1xf32>
    %169 = math.rsqrt %168 : vector<10x1xf32>
    %170 = vector.broadcast %169 : vector<10x1xf32> to vector<10x32xf32>
    %171 = arith.mulf %161, %170 : vector<10x32xf32>
    %172 = vector.broadcast %153 : vector<1x32xf32> to vector<10x32xf32>
    %173 = arith.mulf %171, %172 : vector<10x32xf32>
    %174 = vector.broadcast %155 : vector<1x32xf32> to vector<10x32xf32>
    %175 = arith.addf %173, %174 : vector<10x32xf32>
    %c0_85 = arith.constant 0 : index
    %c0_86 = arith.constant 0 : index
    %c0_87 = arith.constant 0 : index
    %176 = vector.load %arg18[%c0_85, %c0_86, %c0_87] : memref<2x32x128xf32, #tpu.memory_space<vmem>>, vector<1x32x128xf32>
    %177 = vector.shape_cast %176 : vector<1x32x128xf32> to vector<32x128xf32>
    %cst_88 = arith.constant dense<0.000000e+00> : vector<10x128xf32>
    %178 = tpu.matmul %175, %177, %cst_88 {dimension_numbers = #tpu.dot_dimension_numbers<[1], [0], [0], [1], [0, 0, 1, 1], [], []>} : vector<10x32xf32>, vector<32x128xf32>, vector<10x128xf32> -> vector<10x128xf32>
    %c0_89 = arith.constant 0 : index
    %c0_90 = arith.constant 0 : index
    %c0_91 = arith.constant 0 : index
    %179 = vector.load %arg19[%c0_89, %c0_90, %c0_91] : memref<2x1x128xf32, #tpu.memory_space<vmem>>, vector<1x1x128xf32>
    %180 = vector.shape_cast %179 : vector<1x1x128xf32> to vector<1x128xf32>
    %181 = vector.broadcast %180 : vector<1x128xf32> to vector<10x128xf32>
    %182 = arith.addf %178, %181 : vector<10x128xf32>
    %cst_92 = arith.constant 5.000000e-01 : f32
    %183 = vector.broadcast %cst_92 : f32 to vector<10x128xf32>
    %184 = arith.mulf %183, %182 : vector<10x128xf32>
    %cst_93 = arith.constant 4.471500e-02 : f32
    %185 = vector.broadcast %cst_93 : f32 to vector<10x128xf32>
    %186 = arith.mulf %185, %182 : vector<10x128xf32>
    %187 = arith.mulf %186, %182 : vector<10x128xf32>
    %188 = arith.mulf %187, %182 : vector<10x128xf32>
    %189 = arith.addf %182, %188 : vector<10x128xf32>
    %cst_94 = arith.constant 0.797884583 : f32
    %190 = vector.broadcast %cst_94 : f32 to vector<10x128xf32>
    %191 = arith.mulf %190, %189 : vector<10x128xf32>
    %192 = math.tanh %191 : vector<10x128xf32>
    %cst_95 = arith.constant 1.000000e+00 : f32
    %193 = vector.broadcast %cst_95 : f32 to vector<10x128xf32>
    %194 = arith.addf %193, %192 : vector<10x128xf32>
    %195 = arith.mulf %184, %194 : vector<10x128xf32>
    %c0_96 = arith.constant 0 : index
    %c0_97 = arith.constant 0 : index
    %c0_98 = arith.constant 0 : index
    %196 = vector.load %arg20[%c0_96, %c0_97, %c0_98] : memref<2x128x32xf32, #tpu.memory_space<vmem>>, vector<1x128x32xf32>
    %197 = vector.shape_cast %196 : vector<1x128x32xf32> to vector<128x32xf32>
    %cst_99 = arith.constant dense<0.000000e+00> : vector<10x32xf32>
    %198 = tpu.matmul %195, %197, %cst_99 {dimension_numbers = #tpu.dot_dimension_numbers<[1], [0], [0], [1], [0, 0, 1, 1], [], []>} : vector<10x128xf32>, vector<128x32xf32>, vector<10x32xf32> -> vector<10x32xf32>
    %199 = arith.addf %151, %198 : vector<10x32xf32>
    %c0_100 = arith.constant 0 : index
    %c0_101 = arith.constant 0 : index
    %c0_102 = arith.constant 0 : index
    %200 = vector.load %arg21[%c0_100, %c0_101, %c0_102] : memref<2x1x32xf32, #tpu.memory_space<vmem>>, vector<1x1x32xf32>
    %201 = vector.shape_cast %200 : vector<1x1x32xf32> to vector<1x32xf32>
    %202 = vector.broadcast %201 : vector<1x32xf32> to vector<10x32xf32>
    %203 = arith.addf %199, %202 : vector<10x32xf32>
    %c1 = arith.constant 1 : index
    %c0_103 = arith.constant 0 : index
    %c0_104 = arith.constant 0 : index
    %204 = vector.load %arg6[%c1, %c0_103, %c0_104] : memref<2x1x32xf32, #tpu.memory_space<vmem>>, vector<1x1x32xf32>
    %205 = vector.shape_cast %204 : vector<1x1x32xf32> to vector<1x32xf32>
    %c1_105 = arith.constant 1 : index
    %c0_106 = arith.constant 0 : index
    %c0_107 = arith.constant 0 : index
    %206 = vector.load %arg7[%c1_105, %c0_106, %c0_107] : memref<2x1x32xf32, #tpu.memory_space<vmem>>, vector<1x1x32xf32>
    %207 = vector.shape_cast %206 : vector<1x1x32xf32> to vector<1x32xf32>
    %cst_108 = arith.constant dense<0.000000e+00> : vector<10xf32>
    %208 = vector.multi_reduction <add>, %203, %cst_108 [1] : vector<10x32xf32> to vector<10xf32>
    %209 = vector.shape_cast %208 : vector<10xf32> to vector<10x1xf32>
    %cst_109 = arith.constant 3.200000e+01 : f32
    %210 = vector.broadcast %cst_109 : f32 to vector<10x1xf32>
    %211 = arith.divf %209, %210 : vector<10x1xf32>
    %212 = vector.broadcast %211 : vector<10x1xf32> to vector<10x32xf32>
    %213 = arith.subf %203, %212 : vector<10x32xf32>
    %214 = arith.mulf %213, %213 : vector<10x32xf32>
    %cst_110 = arith.constant dense<0.000000e+00> : vector<10xf32>
    %215 = vector.multi_reduction <add>, %214, %cst_110 [1] : vector<10x32xf32> to vector<10xf32>
    %216 = vector.shape_cast %215 : vector<10xf32> to vector<10x1xf32>
    %cst_111 = arith.constant 3.200000e+01 : f32
    %217 = vector.broadcast %cst_111 : f32 to vector<10x1xf32>
    %218 = arith.divf %216, %217 : vector<10x1xf32>
    %cst_112 = arith.constant 9.99999997E-7 : f32
    %219 = vector.broadcast %cst_112 : f32 to vector<10x1xf32>
    %220 = arith.addf %218, %219 : vector<10x1xf32>
    %221 = math.rsqrt %220 : vector<10x1xf32>
    %222 = vector.broadcast %221 : vector<10x1xf32> to vector<10x32xf32>
    %223 = arith.mulf %213, %222 : vector<10x32xf32>
    %224 = vector.broadcast %205 : vector<1x32xf32> to vector<10x32xf32>
    %225 = arith.mulf %223, %224 : vector<10x32xf32>
    %226 = vector.broadcast %207 : vector<1x32xf32> to vector<10x32xf32>
    %227 = arith.addf %225, %226 : vector<10x32xf32>
    %c1_113 = arith.constant 1 : index
    %c0_114 = arith.constant 0 : index
    %c0_115 = arith.constant 0 : index
    %c0_116 = arith.constant 0 : index
    %228 = vector.load %arg8[%c1_113, %c0_114, %c0_115, %c0_116] : memref<2x4x32x8xf32, #tpu.memory_space<vmem>>, vector<1x4x32x8xf32>
    %229 = vector.shape_cast %228 : vector<1x4x32x8xf32> to vector<4x32x8xf32>
    %c1_117 = arith.constant 1 : index
    %c0_118 = arith.constant 0 : index
    %c0_119 = arith.constant 0 : index
    %c0_120 = arith.constant 0 : index
    %230 = vector.load %arg9[%c1_117, %c0_118, %c0_119, %c0_120] : memref<2x4x32x8xf32, #tpu.memory_space<vmem>>, vector<1x4x32x8xf32>
    %231 = vector.shape_cast %230 : vector<1x4x32x8xf32> to vector<4x32x8xf32>
    %c1_121 = arith.constant 1 : index
    %c0_122 = arith.constant 0 : index
    %c0_123 = arith.constant 0 : index
    %c0_124 = arith.constant 0 : index
    %232 = vector.load %arg10[%c1_121, %c0_122, %c0_123, %c0_124] : memref<2x4x32x8xf32, #tpu.memory_space<vmem>>, vector<1x4x32x8xf32>
    %233 = vector.shape_cast %232 : vector<1x4x32x8xf32> to vector<4x32x8xf32>
    %c1_125 = arith.constant 1 : index
    %c0_126 = arith.constant 0 : index
    %c0_127 = arith.constant 0 : index
    %c0_128 = arith.constant 0 : index
    %234 = vector.load %arg11[%c1_125, %c0_126, %c0_127, %c0_128] : memref<2x4x1x8xf32, #tpu.memory_space<vmem>>, vector<1x4x1x8xf32>
    %235 = vector.shape_cast %234 : vector<1x4x1x8xf32> to vector<4x1x8xf32>
    %c1_129 = arith.constant 1 : index
    %c0_130 = arith.constant 0 : index
    %c0_131 = arith.constant 0 : index
    %c0_132 = arith.constant 0 : index
    %236 = vector.load %arg12[%c1_129, %c0_130, %c0_131, %c0_132] : memref<2x4x1x8xf32, #tpu.memory_space<vmem>>, vector<1x4x1x8xf32>
    %237 = vector.shape_cast %236 : vector<1x4x1x8xf32> to vector<4x1x8xf32>
    %c1_133 = arith.constant 1 : index
    %c0_134 = arith.constant 0 : index
    %c0_135 = arith.constant 0 : index
    %c0_136 = arith.constant 0 : index
    %238 = vector.load %arg13[%c1_133, %c0_134, %c0_135, %c0_136] : memref<2x4x1x8xf32, #tpu.memory_space<vmem>>, vector<1x4x1x8xf32>
    %239 = vector.shape_cast %238 : vector<1x4x1x8xf32> to vector<4x1x8xf32>
    %240 = vector.extract_strided_slice %229 {offsets = [0, 0, 0], sizes = [1, 32, 8], strides = [1, 1, 1]} : vector<4x32x8xf32> to vector<1x32x8xf32>
    %241 = vector.shape_cast %240 : vector<1x32x8xf32> to vector<32x8xf32>
    %cst_137 = arith.constant dense<0.000000e+00> : vector<10x8xf32>
    %242 = tpu.matmul %227, %241, %cst_137 {dimension_numbers = #tpu.dot_dimension_numbers<[1], [0], [0], [1], [0, 0, 1, 1], [], []>} : vector<10x32xf32>, vector<32x8xf32>, vector<10x8xf32> -> vector<10x8xf32>
    %243 = vector.extract_strided_slice %229 {offsets = [1, 0, 0], sizes = [1, 32, 8], strides = [1, 1, 1]} : vector<4x32x8xf32> to vector<1x32x8xf32>
    %244 = vector.shape_cast %243 : vector<1x32x8xf32> to vector<32x8xf32>
    %cst_138 = arith.constant dense<0.000000e+00> : vector<10x8xf32>
    %245 = tpu.matmul %227, %244, %cst_138 {dimension_numbers = #tpu.dot_dimension_numbers<[1], [0], [0], [1], [0, 0, 1, 1], [], []>} : vector<10x32xf32>, vector<32x8xf32>, vector<10x8xf32> -> vector<10x8xf32>
    %246 = vector.extract_strided_slice %229 {offsets = [2, 0, 0], sizes = [1, 32, 8], strides = [1, 1, 1]} : vector<4x32x8xf32> to vector<1x32x8xf32>
    %247 = vector.shape_cast %246 : vector<1x32x8xf32> to vector<32x8xf32>
    %cst_139 = arith.constant dense<0.000000e+00> : vector<10x8xf32>
    %248 = tpu.matmul %227, %247, %cst_139 {dimension_numbers = #tpu.dot_dimension_numbers<[1], [0], [0], [1], [0, 0, 1, 1], [], []>} : vector<10x32xf32>, vector<32x8xf32>, vector<10x8xf32> -> vector<10x8xf32>
    %249 = vector.extract_strided_slice %229 {offsets = [3, 0, 0], sizes = [1, 32, 8], strides = [1, 1, 1]} : vector<4x32x8xf32> to vector<1x32x8xf32>
    %250 = vector.shape_cast %249 : vector<1x32x8xf32> to vector<32x8xf32>
    %cst_140 = arith.constant dense<0.000000e+00> : vector<10x8xf32>
    %251 = tpu.matmul %227, %250, %cst_140 {dimension_numbers = #tpu.dot_dimension_numbers<[1], [0], [0], [1], [0, 0, 1, 1], [], []>} : vector<10x32xf32>, vector<32x8xf32>, vector<10x8xf32> -> vector<10x8xf32>
    %252 = vector.shape_cast %242 : vector<10x8xf32> to vector<1x10x8xf32>
    %253 = vector.shape_cast %245 : vector<10x8xf32> to vector<1x10x8xf32>
    %254 = vector.shape_cast %248 : vector<10x8xf32> to vector<1x10x8xf32>
    %255 = vector.shape_cast %251 : vector<10x8xf32> to vector<1x10x8xf32>
    %256 = tpu.concatenate %252, %253, %254, %255 in 0 : vector<1x10x8xf32>, vector<1x10x8xf32>, vector<1x10x8xf32>, vector<1x10x8xf32> -> vector<4x10x8xf32>
    %257 = vector.broadcast %235 : vector<4x1x8xf32> to vector<4x10x8xf32>
    %258 = arith.addf %256, %257 : vector<4x10x8xf32>
    %259 = vector.extract_strided_slice %231 {offsets = [0, 0, 0], sizes = [1, 32, 8], strides = [1, 1, 1]} : vector<4x32x8xf32> to vector<1x32x8xf32>
    %260 = vector.shape_cast %259 : vector<1x32x8xf32> to vector<32x8xf32>
    %cst_141 = arith.constant dense<0.000000e+00> : vector<10x8xf32>
    %261 = tpu.matmul %227, %260, %cst_141 {dimension_numbers = #tpu.dot_dimension_numbers<[1], [0], [0], [1], [0, 0, 1, 1], [], []>} : vector<10x32xf32>, vector<32x8xf32>, vector<10x8xf32> -> vector<10x8xf32>
    %262 = vector.extract_strided_slice %231 {offsets = [1, 0, 0], sizes = [1, 32, 8], strides = [1, 1, 1]} : vector<4x32x8xf32> to vector<1x32x8xf32>
    %263 = vector.shape_cast %262 : vector<1x32x8xf32> to vector<32x8xf32>
    %cst_142 = arith.constant dense<0.000000e+00> : vector<10x8xf32>
    %264 = tpu.matmul %227, %263, %cst_142 {dimension_numbers = #tpu.dot_dimension_numbers<[1], [0], [0], [1], [0, 0, 1, 1], [], []>} : vector<10x32xf32>, vector<32x8xf32>, vector<10x8xf32> -> vector<10x8xf32>
    %265 = vector.extract_strided_slice %231 {offsets = [2, 0, 0], sizes = [1, 32, 8], strides = [1, 1, 1]} : vector<4x32x8xf32> to vector<1x32x8xf32>
    %266 = vector.shape_cast %265 : vector<1x32x8xf32> to vector<32x8xf32>
    %cst_143 = arith.constant dense<0.000000e+00> : vector<10x8xf32>
    %267 = tpu.matmul %227, %266, %cst_143 {dimension_numbers = #tpu.dot_dimension_numbers<[1], [0], [0], [1], [0, 0, 1, 1], [], []>} : vector<10x32xf32>, vector<32x8xf32>, vector<10x8xf32> -> vector<10x8xf32>
    %268 = vector.extract_strided_slice %231 {offsets = [3, 0, 0], sizes = [1, 32, 8], strides = [1, 1, 1]} : vector<4x32x8xf32> to vector<1x32x8xf32>
    %269 = vector.shape_cast %268 : vector<1x32x8xf32> to vector<32x8xf32>
    %cst_144 = arith.constant dense<0.000000e+00> : vector<10x8xf32>
    %270 = tpu.matmul %227, %269, %cst_144 {dimension_numbers = #tpu.dot_dimension_numbers<[1], [0], [0], [1], [0, 0, 1, 1], [], []>} : vector<10x32xf32>, vector<32x8xf32>, vector<10x8xf32> -> vector<10x8xf32>
    %271 = vector.shape_cast %261 : vector<10x8xf32> to vector<1x10x8xf32>
    %272 = vector.shape_cast %264 : vector<10x8xf32> to vector<1x10x8xf32>
    %273 = vector.shape_cast %267 : vector<10x8xf32> to vector<1x10x8xf32>
    %274 = vector.shape_cast %270 : vector<10x8xf32> to vector<1x10x8xf32>
    %275 = tpu.concatenate %271, %272, %273, %274 in 0 : vector<1x10x8xf32>, vector<1x10x8xf32>, vector<1x10x8xf32>, vector<1x10x8xf32> -> vector<4x10x8xf32>
    %276 = vector.broadcast %237 : vector<4x1x8xf32> to vector<4x10x8xf32>
    %277 = arith.addf %275, %276 : vector<4x10x8xf32>
    %278 = vector.extract_strided_slice %233 {offsets = [0, 0, 0], sizes = [1, 32, 8], strides = [1, 1, 1]} : vector<4x32x8xf32> to vector<1x32x8xf32>
    %279 = vector.shape_cast %278 : vector<1x32x8xf32> to vector<32x8xf32>
    %cst_145 = arith.constant dense<0.000000e+00> : vector<10x8xf32>
    %280 = tpu.matmul %227, %279, %cst_145 {dimension_numbers = #tpu.dot_dimension_numbers<[1], [0], [0], [1], [0, 0, 1, 1], [], []>} : vector<10x32xf32>, vector<32x8xf32>, vector<10x8xf32> -> vector<10x8xf32>
    %281 = vector.extract_strided_slice %233 {offsets = [1, 0, 0], sizes = [1, 32, 8], strides = [1, 1, 1]} : vector<4x32x8xf32> to vector<1x32x8xf32>
    %282 = vector.shape_cast %281 : vector<1x32x8xf32> to vector<32x8xf32>
    %cst_146 = arith.constant dense<0.000000e+00> : vector<10x8xf32>
    %283 = tpu.matmul %227, %282, %cst_146 {dimension_numbers = #tpu.dot_dimension_numbers<[1], [0], [0], [1], [0, 0, 1, 1], [], []>} : vector<10x32xf32>, vector<32x8xf32>, vector<10x8xf32> -> vector<10x8xf32>
    %284 = vector.extract_strided_slice %233 {offsets = [2, 0, 0], sizes = [1, 32, 8], strides = [1, 1, 1]} : vector<4x32x8xf32> to vector<1x32x8xf32>
    %285 = vector.shape_cast %284 : vector<1x32x8xf32> to vector<32x8xf32>
    %cst_147 = arith.constant dense<0.000000e+00> : vector<10x8xf32>
    %286 = tpu.matmul %227, %285, %cst_147 {dimension_numbers = #tpu.dot_dimension_numbers<[1], [0], [0], [1], [0, 0, 1, 1], [], []>} : vector<10x32xf32>, vector<32x8xf32>, vector<10x8xf32> -> vector<10x8xf32>
    %287 = vector.extract_strided_slice %233 {offsets = [3, 0, 0], sizes = [1, 32, 8], strides = [1, 1, 1]} : vector<4x32x8xf32> to vector<1x32x8xf32>
    %288 = vector.shape_cast %287 : vector<1x32x8xf32> to vector<32x8xf32>
    %cst_148 = arith.constant dense<0.000000e+00> : vector<10x8xf32>
    %289 = tpu.matmul %227, %288, %cst_148 {dimension_numbers = #tpu.dot_dimension_numbers<[1], [0], [0], [1], [0, 0, 1, 1], [], []>} : vector<10x32xf32>, vector<32x8xf32>, vector<10x8xf32> -> vector<10x8xf32>
    %290 = vector.shape_cast %280 : vector<10x8xf32> to vector<1x10x8xf32>
    %291 = vector.shape_cast %283 : vector<10x8xf32> to vector<1x10x8xf32>
    %292 = vector.shape_cast %286 : vector<10x8xf32> to vector<1x10x8xf32>
    %293 = vector.shape_cast %289 : vector<10x8xf32> to vector<1x10x8xf32>
    %294 = tpu.concatenate %290, %291, %292, %293 in 0 : vector<1x10x8xf32>, vector<1x10x8xf32>, vector<1x10x8xf32>, vector<1x10x8xf32> -> vector<4x10x8xf32>
    %295 = vector.broadcast %239 : vector<4x1x8xf32> to vector<4x10x8xf32>
    %296 = arith.addf %294, %295 : vector<4x10x8xf32>
    %cst_149 = arith.constant 0.353553385 : f32
    %297 = vector.broadcast %cst_149 : f32 to vector<4x10x8xf32>
    %298 = arith.mulf %258, %297 : vector<4x10x8xf32>
    "tpu.trace_start"() <{level = 10 : i32, message = "hqd,hkd->hqk"}> : () -> ()
    %cst_150 = arith.constant dense<0.000000e+00> : vector<4x10x10xf32>
    %299 = tpu.matmul %298, %277, %cst_150 {dimension_numbers = #tpu.dot_dimension_numbers<[2], [2], [1], [1], [0, 0, 0, 1, 1, 1], [0], [0]>} : vector<4x10x8xf32>, vector<4x10x8xf32>, vector<4x10x10xf32> -> vector<4x10x10xf32>
    "tpu.trace_stop"() : () -> ()
    %300 = vector.shape_cast %11 : vector<10x10xf32> to vector<1x10x10xf32>
    %301 = vector.broadcast %300 : vector<1x10x10xf32> to vector<4x10x10xf32>
    %302 = arith.addf %299, %301 : vector<4x10x10xf32>
    %cst_151 = arith.constant dense<0xFF800000> : vector<4x10xf32>
    %303 = vector.multi_reduction <maximumf>, %302, %cst_151 [2] : vector<4x10x10xf32> to vector<4x10xf32>
    %304 = vector.shape_cast %303 : vector<4x10xf32> to vector<4x10x1xf32>
    %305 = vector.broadcast %304 : vector<4x10x1xf32> to vector<4x10x10xf32>
    %306 = arith.subf %302, %305 : vector<4x10x10xf32>
    %307 = math.exp %306 : vector<4x10x10xf32>
    %cst_152 = arith.constant dense<0.000000e+00> : vector<4x10xf32>
    %308 = vector.multi_reduction <add>, %307, %cst_152 [2] : vector<4x10x10xf32> to vector<4x10xf32>
    %309 = vector.shape_cast %308 : vector<4x10xf32> to vector<4x10x1xf32>
    %310 = tpu.reciprocal %309 {approx = true} : vector<4x10x1xf32> -> vector<4x10x1xf32>
    %311 = vector.broadcast %310 : vector<4x10x1xf32> to vector<4x10x10xf32>
    %312 = arith.mulf %307, %311 : vector<4x10x10xf32>
    "tpu.trace_start"() <{level = 10 : i32, message = "hqk,hkd->hqd"}> : () -> ()
    %cst_153 = arith.constant dense<0.000000e+00> : vector<4x10x8xf32>
    %313 = tpu.matmul %312, %296, %cst_153 {dimension_numbers = #tpu.dot_dimension_numbers<[2], [1], [1], [2], [0, 0, 0, 1, 1, 2], [0], [0]>} : vector<4x10x10xf32>, vector<4x10x8xf32>, vector<4x10x8xf32> -> vector<4x10x8xf32>
    "tpu.trace_stop"() : () -> ()
    %c1_154 = arith.constant 1 : index
    %c0_155 = arith.constant 0 : index
    %c0_156 = arith.constant 0 : index
    %c0_157 = arith.constant 0 : index
    %314 = vector.load %arg14[%c1_154, %c0_155, %c0_156, %c0_157] : memref<2x4x8x32xf32, #tpu.memory_space<vmem>>, vector<1x4x8x32xf32>
    %315 = vector.shape_cast %314 : vector<1x4x8x32xf32> to vector<4x8x32xf32>
    %316 = vector.extract_strided_slice %313 {offsets = [0, 0, 0], sizes = [1, 10, 8], strides = [1, 1, 1]} : vector<4x10x8xf32> to vector<1x10x8xf32>
    %317 = vector.shape_cast %316 : vector<1x10x8xf32> to vector<10x8xf32>
    %318 = vector.extract_strided_slice %315 {offsets = [0, 0, 0], sizes = [1, 8, 32], strides = [1, 1, 1]} : vector<4x8x32xf32> to vector<1x8x32xf32>
    %319 = vector.shape_cast %318 : vector<1x8x32xf32> to vector<8x32xf32>
    %cst_158 = arith.constant dense<0.000000e+00> : vector<10x32xf32>
    %320 = tpu.matmul %317, %319, %cst_158 {dimension_numbers = #tpu.dot_dimension_numbers<[1], [0], [0], [1], [0, 0, 1, 1], [], []>} : vector<10x8xf32>, vector<8x32xf32>, vector<10x32xf32> -> vector<10x32xf32>
    %321 = vector.extract_strided_slice %313 {offsets = [1, 0, 0], sizes = [1, 10, 8], strides = [1, 1, 1]} : vector<4x10x8xf32> to vector<1x10x8xf32>
    %322 = vector.shape_cast %321 : vector<1x10x8xf32> to vector<10x8xf32>
    %323 = vector.extract_strided_slice %315 {offsets = [1, 0, 0], sizes = [1, 8, 32], strides = [1, 1, 1]} : vector<4x8x32xf32> to vector<1x8x32xf32>
    %324 = vector.shape_cast %323 : vector<1x8x32xf32> to vector<8x32xf32>
    %cst_159 = arith.constant dense<0.000000e+00> : vector<10x32xf32>
    %325 = tpu.matmul %322, %324, %cst_159 {dimension_numbers = #tpu.dot_dimension_numbers<[1], [0], [0], [1], [0, 0, 1, 1], [], []>} : vector<10x8xf32>, vector<8x32xf32>, vector<10x32xf32> -> vector<10x32xf32>
    %326 = arith.addf %320, %325 : vector<10x32xf32>
    %327 = vector.extract_strided_slice %313 {offsets = [2, 0, 0], sizes = [1, 10, 8], strides = [1, 1, 1]} : vector<4x10x8xf32> to vector<1x10x8xf32>
    %328 = vector.shape_cast %327 : vector<1x10x8xf32> to vector<10x8xf32>
    %329 = vector.extract_strided_slice %315 {offsets = [2, 0, 0], sizes = [1, 8, 32], strides = [1, 1, 1]} : vector<4x8x32xf32> to vector<1x8x32xf32>
    %330 = vector.shape_cast %329 : vector<1x8x32xf32> to vector<8x32xf32>
    %cst_160 = arith.constant dense<0.000000e+00> : vector<10x32xf32>
    %331 = tpu.matmul %328, %330, %cst_160 {dimension_numbers = #tpu.dot_dimension_numbers<[1], [0], [0], [1], [0, 0, 1, 1], [], []>} : vector<10x8xf32>, vector<8x32xf32>, vector<10x32xf32> -> vector<10x32xf32>
    %332 = arith.addf %326, %331 : vector<10x32xf32>
    %333 = vector.extract_strided_slice %313 {offsets = [3, 0, 0], sizes = [1, 10, 8], strides = [1, 1, 1]} : vector<4x10x8xf32> to vector<1x10x8xf32>
    %334 = vector.shape_cast %333 : vector<1x10x8xf32> to vector<10x8xf32>
    %335 = vector.extract_strided_slice %315 {offsets = [3, 0, 0], sizes = [1, 8, 32], strides = [1, 1, 1]} : vector<4x8x32xf32> to vector<1x8x32xf32>
    %336 = vector.shape_cast %335 : vector<1x8x32xf32> to vector<8x32xf32>
    %cst_161 = arith.constant dense<0.000000e+00> : vector<10x32xf32>
    %337 = tpu.matmul %334, %336, %cst_161 {dimension_numbers = #tpu.dot_dimension_numbers<[1], [0], [0], [1], [0, 0, 1, 1], [], []>} : vector<10x8xf32>, vector<8x32xf32>, vector<10x32xf32> -> vector<10x32xf32>
    %338 = arith.addf %332, %337 : vector<10x32xf32>
    %339 = arith.addf %203, %338 : vector<10x32xf32>
    %c1_162 = arith.constant 1 : index
    %c0_163 = arith.constant 0 : index
    %c0_164 = arith.constant 0 : index
    %340 = vector.load %arg15[%c1_162, %c0_163, %c0_164] : memref<2x1x32xf32, #tpu.memory_space<vmem>>, vector<1x1x32xf32>
    %341 = vector.shape_cast %340 : vector<1x1x32xf32> to vector<1x32xf32>
    %342 = vector.broadcast %341 : vector<1x32xf32> to vector<10x32xf32>
    %343 = arith.addf %339, %342 : vector<10x32xf32>
    %c1_165 = arith.constant 1 : index
    %c0_166 = arith.constant 0 : index
    %c0_167 = arith.constant 0 : index
    %344 = vector.load %arg16[%c1_165, %c0_166, %c0_167] : memref<2x1x32xf32, #tpu.memory_space<vmem>>, vector<1x1x32xf32>
    %345 = vector.shape_cast %344 : vector<1x1x32xf32> to vector<1x32xf32>
    %c1_168 = arith.constant 1 : index
    %c0_169 = arith.constant 0 : index
    %c0_170 = arith.constant 0 : index
    %346 = vector.load %arg17[%c1_168, %c0_169, %c0_170] : memref<2x1x32xf32, #tpu.memory_space<vmem>>, vector<1x1x32xf32>
    %347 = vector.shape_cast %346 : vector<1x1x32xf32> to vector<1x32xf32>
    %cst_171 = arith.constant dense<0.000000e+00> : vector<10xf32>
    %348 = vector.multi_reduction <add>, %343, %cst_171 [1] : vector<10x32xf32> to vector<10xf32>
    %349 = vector.shape_cast %348 : vector<10xf32> to vector<10x1xf32>
    %cst_172 = arith.constant 3.200000e+01 : f32
    %350 = vector.broadcast %cst_172 : f32 to vector<10x1xf32>
    %351 = arith.divf %349, %350 : vector<10x1xf32>
    %352 = vector.broadcast %351 : vector<10x1xf32> to vector<10x32xf32>
    %353 = arith.subf %343, %352 : vector<10x32xf32>
    %354 = arith.mulf %353, %353 : vector<10x32xf32>
    %cst_173 = arith.constant dense<0.000000e+00> : vector<10xf32>
    %355 = vector.multi_reduction <add>, %354, %cst_173 [1] : vector<10x32xf32> to vector<10xf32>
    %356 = vector.shape_cast %355 : vector<10xf32> to vector<10x1xf32>
    %cst_174 = arith.constant 3.200000e+01 : f32
    %357 = vector.broadcast %cst_174 : f32 to vector<10x1xf32>
    %358 = arith.divf %356, %357 : vector<10x1xf32>
    %cst_175 = arith.constant 9.99999997E-7 : f32
    %359 = vector.broadcast %cst_175 : f32 to vector<10x1xf32>
    %360 = arith.addf %358, %359 : vector<10x1xf32>
    %361 = math.rsqrt %360 : vector<10x1xf32>
    %362 = vector.broadcast %361 : vector<10x1xf32> to vector<10x32xf32>
    %363 = arith.mulf %353, %362 : vector<10x32xf32>
    %364 = vector.broadcast %345 : vector<1x32xf32> to vector<10x32xf32>
    %365 = arith.mulf %363, %364 : vector<10x32xf32>
    %366 = vector.broadcast %347 : vector<1x32xf32> to vector<10x32xf32>
    %367 = arith.addf %365, %366 : vector<10x32xf32>
    %c1_176 = arith.constant 1 : index
    %c0_177 = arith.constant 0 : index
    %c0_178 = arith.constant 0 : index
    %368 = vector.load %arg18[%c1_176, %c0_177, %c0_178] : memref<2x32x128xf32, #tpu.memory_space<vmem>>, vector<1x32x128xf32>
    %369 = vector.shape_cast %368 : vector<1x32x128xf32> to vector<32x128xf32>
    %cst_179 = arith.constant dense<0.000000e+00> : vector<10x128xf32>
    %370 = tpu.matmul %367, %369, %cst_179 {dimension_numbers = #tpu.dot_dimension_numbers<[1], [0], [0], [1], [0, 0, 1, 1], [], []>} : vector<10x32xf32>, vector<32x128xf32>, vector<10x128xf32> -> vector<10x128xf32>
    %c1_180 = arith.constant 1 : index
    %c0_181 = arith.constant 0 : index
    %c0_182 = arith.constant 0 : index
    %371 = vector.load %arg19[%c1_180, %c0_181, %c0_182] : memref<2x1x128xf32, #tpu.memory_space<vmem>>, vector<1x1x128xf32>
    %372 = vector.shape_cast %371 : vector<1x1x128xf32> to vector<1x128xf32>
    %373 = vector.broadcast %372 : vector<1x128xf32> to vector<10x128xf32>
    %374 = arith.addf %370, %373 : vector<10x128xf32>
    %cst_183 = arith.constant 5.000000e-01 : f32
    %375 = vector.broadcast %cst_183 : f32 to vector<10x128xf32>
    %376 = arith.mulf %375, %374 : vector<10x128xf32>
    %cst_184 = arith.constant 4.471500e-02 : f32
    %377 = vector.broadcast %cst_184 : f32 to vector<10x128xf32>
    %378 = arith.mulf %377, %374 : vector<10x128xf32>
    %379 = arith.mulf %378, %374 : vector<10x128xf32>
    %380 = arith.mulf %379, %374 : vector<10x128xf32>
    %381 = arith.addf %374, %380 : vector<10x128xf32>
    %cst_185 = arith.constant 0.797884583 : f32
    %382 = vector.broadcast %cst_185 : f32 to vector<10x128xf32>
    %383 = arith.mulf %382, %381 : vector<10x128xf32>
    %384 = math.tanh %383 : vector<10x128xf32>
    %cst_186 = arith.constant 1.000000e+00 : f32
    %385 = vector.broadcast %cst_186 : f32 to vector<10x128xf32>
    %386 = arith.addf %385, %384 : vector<10x128xf32>
    %387 = arith.mulf %376, %386 : vector<10x128xf32>
    %c1_187 = arith.constant 1 : index
    %c0_188 = arith.constant 0 : index
    %c0_189 = arith.constant 0 : index
    %388 = vector.load %arg20[%c1_187, %c0_188, %c0_189] : memref<2x128x32xf32, #tpu.memory_space<vmem>>, vector<1x128x32xf32>
    %389 = vector.shape_cast %388 : vector<1x128x32xf32> to vector<128x32xf32>
    %cst_190 = arith.constant dense<0.000000e+00> : vector<10x32xf32>
    %390 = tpu.matmul %387, %389, %cst_190 {dimension_numbers = #tpu.dot_dimension_numbers<[1], [0], [0], [1], [0, 0, 1, 1], [], []>} : vector<10x128xf32>, vector<128x32xf32>, vector<10x32xf32> -> vector<10x32xf32>
    %391 = arith.addf %343, %390 : vector<10x32xf32>
    %c1_191 = arith.constant 1 : index
    %c0_192 = arith.constant 0 : index
    %c0_193 = arith.constant 0 : index
    %392 = vector.load %arg21[%c1_191, %c0_192, %c0_193] : memref<2x1x32xf32, #tpu.memory_space<vmem>>, vector<1x1x32xf32>
    %393 = vector.shape_cast %392 : vector<1x1x32xf32> to vector<1x32xf32>
    %394 = vector.broadcast %393 : vector<1x32xf32> to vector<10x32xf32>
    %395 = arith.addf %391, %394 : vector<10x32xf32>
    %396 = vector.extract_strided_slice %395 {offsets = [0, 0], sizes = [1, 32], strides = [1, 1]} : vector<10x32xf32> to vector<1x32xf32>
    %397 = vector.extract_strided_slice %395 {offsets = [5, 0], sizes = [1, 32], strides = [1, 1]} : vector<10x32xf32> to vector<1x32xf32>
    %398 = tpu.concatenate %396, %397 in 0 : vector<1x32xf32>, vector<1x32xf32> -> vector<2x32xf32>
    %c0_194 = arith.constant 0 : index
    %c0_195 = arith.constant 0 : index
    %399 = vector.load %arg22[%c0_194, %c0_195] : memref<1x32xf32, #tpu.memory_space<vmem>>, vector<1x32xf32>
    %c0_196 = arith.constant 0 : index
    %c0_197 = arith.constant 0 : index
    %400 = vector.load %arg23[%c0_196, %c0_197] : memref<1x32xf32, #tpu.memory_space<vmem>>, vector<1x32xf32>
    %cst_198 = arith.constant dense<0.000000e+00> : vector<2xf32>
    %401 = vector.multi_reduction <add>, %398, %cst_198 [1] : vector<2x32xf32> to vector<2xf32>
    %402 = vector.shape_cast %401 : vector<2xf32> to vector<2x1xf32>
    %cst_199 = arith.constant 3.200000e+01 : f32
    %403 = vector.broadcast %cst_199 : f32 to vector<2x1xf32>
    %404 = arith.divf %402, %403 : vector<2x1xf32>
    %405 = vector.broadcast %404 : vector<2x1xf32> to vector<2x32xf32>
    %406 = arith.subf %398, %405 : vector<2x32xf32>
    %407 = arith.mulf %406, %406 : vector<2x32xf32>
    %cst_200 = arith.constant dense<0.000000e+00> : vector<2xf32>
    %408 = vector.multi_reduction <add>, %407, %cst_200 [1] : vector<2x32xf32> to vector<2xf32>
    %409 = vector.shape_cast %408 : vector<2xf32> to vector<2x1xf32>
    %cst_201 = arith.constant 3.200000e+01 : f32
    %410 = vector.broadcast %cst_201 : f32 to vector<2x1xf32>
    %411 = arith.divf %409, %410 : vector<2x1xf32>
    %cst_202 = arith.constant 9.99999997E-7 : f32
    %412 = vector.broadcast %cst_202 : f32 to vector<2x1xf32>
    %413 = arith.addf %411, %412 : vector<2x1xf32>
    %414 = math.rsqrt %413 : vector<2x1xf32>
    %415 = vector.broadcast %414 : vector<2x1xf32> to vector<2x32xf32>
    %416 = arith.mulf %406, %415 : vector<2x32xf32>
    %417 = vector.broadcast %399 : vector<1x32xf32> to vector<2x32xf32>
    %418 = arith.mulf %416, %417 : vector<2x32xf32>
    %419 = vector.broadcast %400 : vector<1x32xf32> to vector<2x32xf32>
    %420 = arith.addf %418, %419 : vector<2x32xf32>
    %c0_203 = arith.constant 0 : index
    %c0_204 = arith.constant 0 : index
    %421 = vector.load %arg24[%c0_203, %c0_204] : memref<2x32xf32, #tpu.memory_space<vmem>>, vector<2x32xf32>
    tpu.vector_store %arg24[%c0_203, %c0_204], %420 {strides = array<i32>} : memref<2x32xf32, #tpu.memory_space<vmem>>, vector<2x32xf32>,
    return
  }
}

</mosaic_0001>

<llo_original>
// kernel: tpu_custom_call.1
$region0: #{tpu_custom_call.1}
  #allocation0 [shape = 'u32[]', space=smem, size = 0x4, offset = 0x4, fixed_abs, tag = 'smem constant byte address 0x4 - core index']
  #allocation1 [shape = 'u32[72,128]{1,0:T(1,128)}', space=vmem, size = 0x9000, scoped, tag = 'internal scratch']
  %s0 = inlined_call_operand.vmem [shape: f32[8,256], index: 0, kind: input, shape index: {}]
  %s1 = inlined_call_operand.vmem [shape: f32[1,32], index: 1, kind: input, shape index: {}]
  %s2 = inlined_call_operand.vmem [shape: f32[8,32], index: 2, kind: input, shape index: {}]
  %s3 = inlined_call_operand.vmem [shape: f32[10,32], index: 3, kind: input, shape index: {}]
  %s4 = inlined_call_operand.vmem [shape: f32[10,10], index: 4, kind: input, shape index: {}]
  %s5 = inlined_call_operand.vmem [shape: f32[256,32], index: 5, kind: input, shape index: {}]
  %s6 = inlined_call_operand.vmem [shape: f32[2,1,32], index: 6, kind: input, shape index: {}]
  %s7 = inlined_call_operand.vmem [shape: f32[2,1,32], index: 7, kind: input, shape index: {}]
  %s8 = inlined_call_operand.vmem [shape: f32[2,4,32,8], index: 8, kind: input, shape index: {}]
  %s9 = inlined_call_operand.vmem [shape: f32[2,4,32,8], index: 9, kind: input, shape index: {}]
  %s10 = inlined_call_operand.vmem [shape: f32[2,4,32,8], index: 10, kind: input, shape index: {}]
  %s11 = inlined_call_operand.vmem [shape: f32[2,4,1,8], index: 11, kind: input, shape index: {}]
  %s12 = inlined_call_operand.vmem [shape: f32[2,4,1,8], index: 12, kind: input, shape index: {}]
  %s13 = inlined_call_operand.vmem [shape: f32[2,4,1,8], index: 13, kind: input, shape index: {}]
  %s14 = inlined_call_operand.vmem [shape: f32[2,4,8,32], index: 14, kind: input, shape index: {}]
  %s15 = inlined_call_operand.vmem [shape: f32[2,1,32], index: 15, kind: input, shape index: {}]
  %s16 = inlined_call_operand.vmem [shape: f32[2,1,32], index: 16, kind: input, shape index: {}]
  %s17 = inlined_call_operand.vmem [shape: f32[2,1,32], index: 17, kind: input, shape index: {}]
  %s18 = inlined_call_operand.vmem [shape: f32[2,32,128], index: 18, kind: input, shape index: {}]
  %s19 = inlined_call_operand.vmem [shape: f32[2,1,128], index: 19, kind: input, shape index: {}]
  %s20 = inlined_call_operand.vmem [shape: f32[2,128,32], index: 20, kind: input, shape index: {}]
  %s21 = inlined_call_operand.vmem [shape: f32[2,1,32], index: 21, kind: input, shape index: {}]
  %s22 = inlined_call_operand.vmem [shape: f32[1,32], index: 22, kind: input, shape index: {}]
  %s23 = inlined_call_operand.vmem [shape: f32[1,32], index: 23, kind: input, shape index: {}]
  %s24 = inlined_call_operand.hbm [shape: f32[2,32], index: 24, kind: output, shape index: {}]
  %s25 = sld [smem:[#allocation0]]
  $region106: #{tpu_custom_call.1} parent=0
    _
  %s27 = ssub.s32 1, %s25
  %s28 = scalar_select 0, %s27, %s25
  $region1: #{tpu_custom_call.1} parent=0
    #allocation2 [shape = 'u8[1024]{0}', space=vmem, size = 0x400, scoped, tag = 'output window, operand 0, single buffered']
    #allocation3 [shape = 's32[1]{0}', space=sflag, size = 0x4, scoped, tag = 'scoped memory for tpu_custom_call.1']
    %29 = vsyncpa [#allocation3], 0
    // Predicated region
    $region2: #{tpu_custom_call.1} parent=1 // pred_check
      _
    $region3: #{tpu_custom_call.1} parent=1 // pred_check_branch
      %31 = sbr.rel (0) target = $region5
    $region4: #{tpu_custom_call.1} parent=1 // pred_region
      _
    $region5: #{tpu_custom_call.1} parent=1 // pred_fallthru
      _
    // Predicated region
    $region6: #{tpu_custom_call.1} parent=1 // pred_check
      _
    $region7: #{tpu_custom_call.1} parent=1 // pred_check_branch
      %33 = sbr.rel (0) target = $region9
    $region8: #{tpu_custom_call.1} parent=1 // pred_region
      _
    $region9: #{tpu_custom_call.1} parent=1 // pred_fallthru
      _
    // Predicated region
    $region10: #{tpu_custom_call.1} parent=1 // pred_check
      _
    $region11: #{tpu_custom_call.1} parent=1 // pred_check_branch
      %35 = sbr.rel (0) target = $region13
    $region12: #{tpu_custom_call.1} parent=1 // pred_region
      _
    $region13: #{tpu_custom_call.1} parent=1 // pred_fallthru
      _
    // Predicated region
    $region14: #{tpu_custom_call.1} parent=1 // pred_check
      _
    $region15: #{tpu_custom_call.1} parent=1 // pred_check_branch
      %37 = sbr.rel (0) target = $region17
    $region16: #{tpu_custom_call.1} parent=1 // pred_region
      _
    $region17: #{tpu_custom_call.1} parent=1 // pred_fallthru
      _
    // Predicated region
    $region18: #{tpu_custom_call.1} parent=1 // pred_check
      _
    $region19: #{tpu_custom_call.1} parent=1 // pred_check_branch
      %39 = sbr.rel (0) target = $region21
    $region20: #{tpu_custom_call.1} parent=1 // pred_region
      _
    $region21: #{tpu_custom_call.1} parent=1 // pred_fallthru
      _
    // Predicated region
    $region22: #{tpu_custom_call.1} parent=1 // pred_check
      _
    $region23: #{tpu_custom_call.1} parent=1 // pred_check_branch
      %41 = sbr.rel (0) target = $region25
    $region24: #{tpu_custom_call.1} parent=1 // pred_region
      _
    $region25: #{tpu_custom_call.1} parent=1 // pred_fallthru
      _
    // Predicated region
    $region26: #{tpu_custom_call.1} parent=1 // pred_check
      _
    $region27: #{tpu_custom_call.1} parent=1 // pred_check_branch
      %43 = sbr.rel (0) target = $region29
    $region28: #{tpu_custom_call.1} parent=1 // pred_region
      _
    $region29: #{tpu_custom_call.1} parent=1 // pred_fallthru
      _
    // Predicated region
    $region30: #{tpu_custom_call.1} parent=1 // pred_check
      _
    $region31: #{tpu_custom_call.1} parent=1 // pred_check_branch
      %45 = sbr.rel (0) target = $region33
    $region32: #{tpu_custom_call.1} parent=1 // pred_region
      _
    $region33: #{tpu_custom_call.1} parent=1 // pred_fallthru
      _
    // Predicated region
    $region34: #{tpu_custom_call.1} parent=1 // pred_check
      _
    $region35: #{tpu_custom_call.1} parent=1 // pred_check_branch
      %47 = sbr.rel (0) target = $region37
    $region36: #{tpu_custom_call.1} parent=1 // pred_region
      _
    $region37: #{tpu_custom_call.1} parent=1 // pred_fallthru
      _
    // Predicated region
    $region38: #{tpu_custom_call.1} parent=1 // pred_check
      _
    $region39: #{tpu_custom_call.1} parent=1 // pred_check_branch
      %49 = sbr.rel (0) target = $region41
    $region40: #{tpu_custom_call.1} parent=1 // pred_region
      _
    $region41: #{tpu_custom_call.1} parent=1 // pred_fallthru
      _
    // Predicated region
    $region42: #{tpu_custom_call.1} parent=1 // pred_check
      _
    $region43: #{tpu_custom_call.1} parent=1 // pred_check_branch
      %51 = sbr.rel (0) target = $region45
    $region44: #{tpu_custom_call.1} parent=1 // pred_region
      _
    $region45: #{tpu_custom_call.1} parent=1 // pred_fallthru
      _
    // Predicated region
    $region46: #{tpu_custom_call.1} parent=1 // pred_check
      _
    $region47: #{tpu_custom_call.1} parent=1 // pred_check_branch
      %53 = sbr.rel (0) target = $region49
    $region48: #{tpu_custom_call.1} parent=1 // pred_region
      _
    $region49: #{tpu_custom_call.1} parent=1 // pred_fallthru
      _
    // Predicated region
    $region50: #{tpu_custom_call.1} parent=1 // pred_check
      _
    $region51: #{tpu_custom_call.1} parent=1 // pred_check_branch
      %55 = sbr.rel (0) target = $region53
    $region52: #{tpu_custom_call.1} parent=1 // pred_region
      _
    $region53: #{tpu_custom_call.1} parent=1 // pred_fallthru
      _
    // Predicated region
    $region54: #{tpu_custom_call.1} parent=1 // pred_check
      _
    $region55: #{tpu_custom_call.1} parent=1 // pred_check_branch
      %57 = sbr.rel (0) target = $region57
    $region56: #{tpu_custom_call.1} parent=1 // pred_region
      _
    $region57: #{tpu_custom_call.1} parent=1 // pred_fallthru
      _
    // Predicated region
    $region58: #{tpu_custom_call.1} parent=1 // pred_check
      _
    $region59: #{tpu_custom_call.1} parent=1 // pred_check_branch
      %59 = sbr.rel (0) target = $region61
    $region60: #{tpu_custom_call.1} parent=1 // pred_region
      _
    $region61: #{tpu_custom_call.1} parent=1 // pred_fallthru
      _
    // Predicated region
    $region62: #{tpu_custom_call.1} parent=1 // pred_check
      _
    $region63: #{tpu_custom_call.1} parent=1 // pred_check_branch
      %61 = sbr.rel (0) target = $region65
    $region64: #{tpu_custom_call.1} parent=1 // pred_region
      _
    $region65: #{tpu_custom_call.1} parent=1 // pred_fallthru
      _
    // Predicated region
    $region66: #{tpu_custom_call.1} parent=1 // pred_check
      _
    $region67: #{tpu_custom_call.1} parent=1 // pred_check_branch
      %63 = sbr.rel (0) target = $region69
    $region68: #{tpu_custom_call.1} parent=1 // pred_region
      _
    $region69: #{tpu_custom_call.1} parent=1 // pred_fallthru
      _
    // Predicated region
    $region70: #{tpu_custom_call.1} parent=1 // pred_check
      _
    $region71: #{tpu_custom_call.1} parent=1 // pred_check_branch
      %65 = sbr.rel (0) target = $region73
    $region72: #{tpu_custom_call.1} parent=1 // pred_region
      _
    $region73: #{tpu_custom_call.1} parent=1 // pred_fallthru
      _
    // Predicated region
    $region74: #{tpu_custom_call.1} parent=1 // pred_check
      _
    $region75: #{tpu_custom_call.1} parent=1 // pred_check_branch
      %67 = sbr.rel (0) target = $region77
    $region76: #{tpu_custom_call.1} parent=1 // pred_region
      _
    $region77: #{tpu_custom_call.1} parent=1 // pred_fallthru
      _
    // Predicated region
    $region78: #{tpu_custom_call.1} parent=1 // pred_check
      _
    $region79: #{tpu_custom_call.1} parent=1 // pred_check_branch
      %69 = sbr.rel (0) target = $region81
    $region80: #{tpu_custom_call.1} parent=1 // pred_region
      _
    $region81: #{tpu_custom_call.1} parent=1 // pred_fallthru
      _
    // Predicated region
    $region82: #{tpu_custom_call.1} parent=1 // pred_check
      _
    $region83: #{tpu_custom_call.1} parent=1 // pred_check_branch
      %71 = sbr.rel (0) target = $region85
    $region84: #{tpu_custom_call.1} parent=1 // pred_region
      _
    $region85: #{tpu_custom_call.1} parent=1 // pred_fallthru
      _
    // Predicated region
    $region86: #{tpu_custom_call.1} parent=1 // pred_check
      _
    $region87: #{tpu_custom_call.1} parent=1 // pred_check_branch
      %73 = sbr.rel (0) target = $region89
    $region88: #{tpu_custom_call.1} parent=1 // pred_region
      _
    $region89: #{tpu_custom_call.1} parent=1 // pred_fallthru
      _
    // Predicated region
    $region90: #{tpu_custom_call.1} parent=1 // pred_check
      _
    $region91: #{tpu_custom_call.1} parent=1 // pred_check_branch
      %75 = sbr.rel (0) target = $region93
    $region92: #{tpu_custom_call.1} parent=1 // pred_region
      _
    $region93: #{tpu_custom_call.1} parent=1 // pred_fallthru
      _
    // Predicated region
    $region94: #{tpu_custom_call.1} parent=1 // pred_check
      _
    $region95: #{tpu_custom_call.1} parent=1 // pred_check_branch
      %77 = sbr.rel (0) target = $region97
    $region96: #{tpu_custom_call.1} parent=1 // pred_region
      _
    $region97: #{tpu_custom_call.1} parent=1 // pred_fallthru
      _
    %v78 = vld [vmem:[%s0] sm:$0xff]
    %v79 = vld [vmem:[%s0 + $0x8] sm:$0xff]
    %v80 = vld [vmem:[%s5] sm:$0xff]
    %v81 = vld [vmem:[%s5 + $0x8] sm:$0xff]
    %v82 = vld [vmem:[%s5 + $0x10] sm:$0xff]
    %v83 = vld [vmem:[%s5 + $0x18] sm:$0xff]
    %v84 = vld [vmem:[%s5 + $0x20] sm:$0xff]
    %v85 = vld [vmem:[%s5 + $0x28] sm:$0xff]
    %v86 = vld [vmem:[%s5 + $0x30] sm:$0xff]
    %v87 = vld [vmem:[%s5 + $0x38] sm:$0xff]
    %v88 = vld [vmem:[%s5 + $0x40] sm:$0xff]
    %v89 = vld [vmem:[%s5 + $0x48] sm:$0xff]
    %v90 = vld [vmem:[%s5 + $0x50] sm:$0xff]
    %v91 = vld [vmem:[%s5 + $0x58] sm:$0xff]
    %v92 = vld [vmem:[%s5 + $0x60] sm:$0xff]
    %v93 = vld [vmem:[%s5 + $0x68] sm:$0xff]
    %v94 = vld [vmem:[%s5 + $0x70] sm:$0xff]
    %v95 = vld [vmem:[%s5 + $0x78] sm:$0xff]
    %v96 = vld [vmem:[%s5 + $0x80] sm:$0xff]
    %v97 = vld [vmem:[%s5 + $0x88] sm:$0xff]
    %v98 = vld [vmem:[%s5 + $0x90] sm:$0xff]
    %v99 = vld [vmem:[%s5 + $0x98] sm:$0xff]
    %v100 = vld [vmem:[%s5 + $0xa0] sm:$0xff]
    %v101 = vld [vmem:[%s5 + $0xa8] sm:$0xff]
    %v102 = vld [vmem:[%s5 + $0xb0] sm:$0xff]
    %v103 = vld [vmem:[%s5 + $0xb8] sm:$0xff]
    %v104 = vld [vmem:[%s5 + $0xc0] sm:$0xff]
    %v105 = vld [vmem:[%s5 + $0xc8] sm:$0xff]
    %v106 = vld [vmem:[%s5 + $0xd0] sm:$0xff]
    %v107 = vld [vmem:[%s5 + $0xd8] sm:$0xff]
    %v108 = vld [vmem:[%s5 + $0xe0] sm:$0xff]
    %v109 = vld [vmem:[%s5 + $0xe8] sm:$0xff]
    %v110 = vld [vmem:[%s5 + $0xf0] sm:$0xff]
    %v111 = vld [vmem:[%s5 + $0xf8] sm:$0xff]
    %v112 = vld [vmem:[%s2] sm:$0xff]
    %113 = vmatpush.msra.mxu0 %v95
    %114 = vmatpush.msra.mxu0 %v94
    %115 = vmatpush.msra.mxu0 %v93
    %116 = vmatpush.msra.mxu0 %v92
    %117 = vmatpush.msra.mxu0 %v91
    %118 = vmatpush.msra.mxu0 %v90
    %119 = vmatpush.msra.mxu0 %v89
    %120 = vmatpush.msra.mxu0 %v88
    %121 = vmatpush.msra.mxu0 %v87
    %122 = vmatpush.msra.mxu0 %v86
    %123 = vmatpush.msra.mxu0 %v85
    %124 = vmatpush.msra.mxu0 %v84
    %125 = vmatpush.msra.mxu0 %v83
    %126 = vmatpush.msra.mxu0 %v82
    %127 = vmatpush.msra.mxu0 %v81
    %128 = vmatpush.msra.mxu0 %v80
    %129 = vmatmul.f32.gmra.mxu0 %v78
    %v130 = vpop.f32.mrf.mxu0
    %v131 = vadd.f32 %v112, %v130
    %132 = vdwg.mxu0
    %133 = vmatpush.msra.mxu0 %v111
    %134 = vmatpush.msra.mxu0 %v110
    %135 = vmatpush.msra.mxu0 %v109
    %136 = vmatpush.msra.mxu0 %v108
    %137 = vmatpush.msra.mxu0 %v107
    %138 = vmatpush.msra.mxu0 %v106
    %139 = vmatpush.msra.mxu0 %v105
    %140 = vmatpush.msra.mxu0 %v104
    %141 = vmatpush.msra.mxu0 %v103
    %142 = vmatpush.msra.mxu0 %v102
    %143 = vmatpush.msra.mxu0 %v101
    %144 = vmatpush.msra.mxu0 %v100
    %145 = vmatpush.msra.mxu0 %v99
    %146 = vmatpush.msra.mxu0 %v98
    %147 = vmatpush.msra.mxu0 %v97
    %148 = vmatpush.msra.mxu0 %v96
    %149 = vmatmul.f32.gmra.mxu0 %v79
    %v150 = vpop.f32.mrf.mxu0
    %v151 = vadd.f32 %v131, %v150
    %152 = vdwg.mxu0
    %v153 = vld [vmem:[%s1] sm:$0x1]
    %v155 = vrot.slane %v151, 7
    %v158 = vperm.slane %v153, 0
    %v160 = vrot.slane %v151, 6
    %vm162 = vcmask 1040384
    %v163 = vsel %vm162, %v153, %v155
    %vm164 = vcmask 1044480
    %v165 = vsel %vm164, %v163, %v158
    %vm166 = vcmask 1045504
    %v167 = vsel %vm166, %v165, %v160
    %v168 = vld [vmem:[%s3] sm:$0xff]
    %v169 = vld [vmem:[%s3 + $0x8] sm:$0x3]
    %v170 = vadd.f32 %v167, %v168
    %v171 = vadd.f32 %v160, %v169
    %v172 = vld [vmem:[%s4] sm:$0xff]
    %v173 = vld [vmem:[%s4 + $0x8] sm:$0x3]
    %v174 = vld [vmem:[%s6] sm:$0x1]
    %v175 = vld [vmem:[%s7] sm:$0x1]
    %vm176 = vcmask 261120
    %v177 = vsel %vm176, %v170, 0.0
    %178 = vadd.xlane.f32.xlu0 %v177
    %v179 = vpop.xlane.xlu0 %178
    %vm180 = vcmask 254976
    %v181 = vsel %vm180, %v171, 0.0
    %182 = vadd.xlane.f32.xlu0 %v181
    %v183 = vpop.xlane.xlu0 %182
    %v184 = vrcp.pop 32.0
    %v185 = vmul.f32 32.0, %v184
    %v186 = vsub.f32 1.0, %v185
    %v187 = vmul.f32 %v184, %v186
    %v188 = vadd.f32 %v184, %v187
    %vm189 = vweird.f32 %v184
    %v190 = vsel %vm189, %v184, %v188
    %v191 = vmul.f32 %v179, %v190
    %v192 = vmul.f32 %v183, %v190
    %v193 = vsub.f32 %v170, %v191
    %v194 = vsub.f32 %v171, %v192
    %v195 = vmul.f32 %v193, %v193
    %v196 = vmul.f32 %v194, %v194
    %v197 = vsel %vm176, %v195, 0.0
    %198 = vadd.xlane.f32.xlu0 %v197
    %v199 = vpop.xlane.xlu0 %198
    %v200 = vsel %vm180, %v196, 0.0
    %201 = vadd.xlane.f32.xlu0 %v200
    %v202 = vpop.xlane.xlu0 %201
    %v203 = vmul.f32 %v199, %v190
    %v204 = vmul.f32 %v202, %v190
    %v205 = vadd.f32 %v203, 1e-06
    %v206 = vadd.f32 %v204, 1e-06
    %v207 = vrsqrt.pop %v205
    %v208 = vmul.f32 %v207, %v205
    %v209 = vmul.f32 %v208, %v207
    %v210 = vmul.f32 0.5, %v209
    %v211 = vsub.f32 1.5, %v210
    %v212 = vmul.f32 %v207, %v211
    %vm213 = vweird.f32 %v205
    %vm214 = vweird.f32 %v207
    %vm215 = vmor %vm213, %vm214
    %v216 = vsel %vm215, %v207, %v212
    %v217 = vrsqrt.pop %v206
    %v218 = vmul.f32 %v217, %v206
    %v219 = vmul.f32 %v218, %v217
    %v220 = vmul.f32 0.5, %v219
    %v221 = vsub.f32 1.5, %v220
    %v222 = vmul.f32 %v217, %v221
    %vm223 = vweird.f32 %v206
    %vm224 = vweird.f32 %v217
    %vm225 = vmor %vm223, %vm224
    %v226 = vsel %vm225, %v217, %v222
    %v227 = vmul.f32 %v193, %v216
    %v228 = vmul.f32 %v194, %v226
    %v230 = vperm.slane %v174, 0
    %v232 = vmul.f32 %v227, %v230
    %v233 = vmul.f32 %v228, %v230
    %v235 = vperm.slane %v175, 0
    %v237 = vadd.f32 %v232, %v235
    %v238 = vadd.f32 %v233, %v235
    %v239 = vld [vmem:[%s8] sm:$0xff]
    %v240 = vld [vmem:[%s8 + $0x8] sm:$0xff]
    %v241 = vld [vmem:[%s8 + $0x10] sm:$0xff]
    %v242 = vld [vmem:[%s8 + $0x18] sm:$0xff]
    %v243 = vld [vmem:[%s8 + $0x20] sm:$0xff]
    %v244 = vld [vmem:[%s8 + $0x28] sm:$0xff]
    %v245 = vld [vmem:[%s8 + $0x30] sm:$0xff]
    %v246 = vld [vmem:[%s8 + $0x38] sm:$0xff]
    %v247 = vld [vmem:[%s8 + $0x40] sm:$0xff]
    %v248 = vld [vmem:[%s8 + $0x48] sm:$0xff]
    %v249 = vld [vmem:[%s8 + $0x50] sm:$0xff]
    %v250 = vld [vmem:[%s8 + $0x58] sm:$0xff]
    %v251 = vld [vmem:[%s8 + $0x60] sm:$0xff]
    %v252 = vld [vmem:[%s8 + $0x68] sm:$0xff]
    %v253 = vld [vmem:[%s8 + $0x70] sm:$0xff]
    %v254 = vld [vmem:[%s8 + $0x78] sm:$0xff]
    %v255 = vld [vmem:[%s9] sm:$0xff]
    %v256 = vld [vmem:[%s9 + $0x8] sm:$0xff]
    %v257 = vld [vmem:[%s9 + $0x10] sm:$0xff]
    %v258 = vld [vmem:[%s9 + $0x18] sm:$0xff]
    %v259 = vld [vmem:[%s9 + $0x20] sm:$0xff]
    %v260 = vld [vmem:[%s9 + $0x28] sm:$0xff]
    %v261 = vld [vmem:[%s9 + $0x30] sm:$0xff]
    %v262 = vld [vmem:[%s9 + $0x38] sm:$0xff]
    %v263 = vld [vmem:[%s9 + $0x40] sm:$0xff]
    %v264 = vld [vmem:[%s9 + $0x48] sm:$0xff]
    %v265 = vld [vmem:[%s9 + $0x50] sm:$0xff]
    %v266 = vld [vmem:[%s9 + $0x58] sm:$0xff]
    %v267 = vld [vmem:[%s9 + $0x60] sm:$0xff]
    %v268 = vld [vmem:[%s9 + $0x68] sm:$0xff]
    %v269 = vld [vmem:[%s9 + $0x70] sm:$0xff]
    %v270 = vld [vmem:[%s9 + $0x78] sm:$0xff]
    %v271 = vld [vmem:[%s10] sm:$0xff]
    %v272 = vld [vmem:[%s10 + $0x8] sm:$0xff]
    %v273 = vld [vmem:[%s10 + $0x10] sm:$0xff]
    %v274 = vld [vmem:[%s10 + $0x18] sm:$0xff]
    %v275 = vld [vmem:[%s10 + $0x20] sm:$0xff]
    %v276 = vld [vmem:[%s10 + $0x28] sm:$0xff]
    %v277 = vld [vmem:[%s10 + $0x30] sm:$0xff]
    %v278 = vld [vmem:[%s10 + $0x38] sm:$0xff]
    %v279 = vld [vmem:[%s10 + $0x40] sm:$0xff]
    %v280 = vld [vmem:[%s10 + $0x48] sm:$0xff]
    %v281 = vld [vmem:[%s10 + $0x50] sm:$0xff]
    %v282 = vld [vmem:[%s10 + $0x58] sm:$0xff]
    %v283 = vld [vmem:[%s10 + $0x60] sm:$0xff]
    %v284 = vld [vmem:[%s10 + $0x68] sm:$0xff]
    %v285 = vld [vmem:[%s10 + $0x70] sm:$0xff]
    %v286 = vld [vmem:[%s10 + $0x78] sm:$0xff]
    %v287 = vld [vmem:[%s11] sm:$0x1]
    %v288 = vld [vmem:[%s11 + $0x1] sm:$0x1]
    %v289 = vld [vmem:[%s11 + $0x2] sm:$0x1]
    %v290 = vld [vmem:[%s11 + $0x3] sm:$0x1]
    %v291 = vld [vmem:[%s12] sm:$0x1]
    %v292 = vld [vmem:[%s12 + $0x1] sm:$0x1]
    %v293 = vld [vmem:[%s12 + $0x2] sm:$0x1]
    %v294 = vld [vmem:[%s12 + $0x3] sm:$0x1]
    %v295 = vld [vmem:[%s13] sm:$0x1]
    %v296 = vld [vmem:[%s13 + $0x1] sm:$0x1]
    %v297 = vld [vmem:[%s13 + $0x2] sm:$0x1]
    %v298 = vld [vmem:[%s13 + $0x3] sm:$0x1]
    %v300 = vsel %vm176, %v237, 0
    %v303 = vsel %vm176, %v238, 0
    %305 = vmatpush.msra.mxu0 0.0
    %306 = vmatpush.msra.mxu0 0.0
    %307 = vmatpush.msra.mxu0 0.0
    %308 = vmatpush.msra.mxu0 0.0
    %309 = vmatpush.msra.mxu0 0.0
    %310 = vmatpush.msra.mxu0 0.0
    %311 = vmatpush.msra.mxu0 0.0
    %312 = vmatpush.msra.mxu0 0.0
    %313 = vmatpush.msra.mxu0 0.0
    %314 = vmatpush.msra.mxu0 0.0
    %315 = vmatpush.msra.mxu0 0.0
    %316 = vmatpush.msra.mxu0 0.0
    %317 = vmatpush.msra.mxu0 %v242
    %318 = vmatpush.msra.mxu0 %v241
    %319 = vmatpush.msra.mxu0 %v240
    %320 = vmatpush.msra.mxu0 %v239
    %321 = vmatmul.f32.gmra.mxu0 %v300
    %v322 = vpop.f32.mrf.mxu0
    %v323 = vadd.f32 0.0, %v322
    %324 = vmatmul.f32.gmra.mxu0 %v303
    %v325 = vpop.f32.mrf.mxu0
    %v326 = vadd.f32 0.0, %v325
    %327 = vdwg.mxu0
    %328 = vmatpush.msra.mxu0 0.0
    %329 = vmatpush.msra.mxu0 0.0
    %330 = vmatpush.msra.mxu0 0.0
    %331 = vmatpush.msra.mxu0 0.0
    %332 = vmatpush.msra.mxu0 0.0
    %333 = vmatpush.msra.mxu0 0.0
    %334 = vmatpush.msra.mxu0 0.0
    %335 = vmatpush.msra.mxu0 0.0
    %336 = vmatpush.msra.mxu0 0.0
    %337 = vmatpush.msra.mxu0 0.0
    %338 = vmatpush.msra.mxu0 0.0
    %339 = vmatpush.msra.mxu0 0.0
    %340 = vmatpush.msra.mxu0 %v246
    %341 = vmatpush.msra.mxu0 %v245
    %342 = vmatpush.msra.mxu0 %v244
    %343 = vmatpush.msra.mxu0 %v243
    %344 = vmatmul.f32.gmra.mxu0 %v300
    %v345 = vpop.f32.mrf.mxu0
    %v346 = vadd.f32 0.0, %v345
    %347 = vmatmul.f32.gmra.mxu0 %v303
    %v348 = vpop.f32.mrf.mxu0
    %v349 = vadd.f32 0.0, %v348
    %350 = vdwg.mxu0
    %351 = vmatpush.msra.mxu0 0.0
    %352 = vmatpush.msra.mxu0 0.0
    %353 = vmatpush.msra.mxu0 0.0
    %354 = vmatpush.msra.mxu0 0.0
    %355 = vmatpush.msra.mxu0 0.0
    %356 = vmatpush.msra.mxu0 0.0
    %357 = vmatpush.msra.mxu0 0.0
    %358 = vmatpush.msra.mxu0 0.0
    %359 = vmatpush.msra.mxu0 0.0
    %360 = vmatpush.msra.mxu0 0.0
    %361 = vmatpush.msra.mxu0 0.0
    %362 = vmatpush.msra.mxu0 0.0
    %363 = vmatpush.msra.mxu0 %v250
    %364 = vmatpush.msra.mxu0 %v249
    %365 = vmatpush.msra.mxu0 %v248
    %366 = vmatpush.msra.mxu0 %v247
    %367 = vmatmul.f32.gmra.mxu0 %v300
    %v368 = vpop.f32.mrf.mxu0
    %v369 = vadd.f32 0.0, %v368
    %370 = vmatmul.f32.gmra.mxu0 %v303
    %v371 = vpop.f32.mrf.mxu0
    %v372 = vadd.f32 0.0, %v371
    %373 = vdwg.mxu0
    %374 = vmatpush.msra.mxu0 0.0
    %375 = vmatpush.msra.mxu0 0.0
    %376 = vmatpush.msra.mxu0 0.0
    %377 = vmatpush.msra.mxu0 0.0
    %378 = vmatpush.msra.mxu0 0.0
    %379 = vmatpush.msra.mxu0 0.0
    %380 = vmatpush.msra.mxu0 0.0
    %381 = vmatpush.msra.mxu0 0.0
    %382 = vmatpush.msra.mxu0 0.0
    %383 = vmatpush.msra.mxu0 0.0
    %384 = vmatpush.msra.mxu0 0.0
    %385 = vmatpush.msra.mxu0 0.0
    %386 = vmatpush.msra.mxu0 %v254
    %387 = vmatpush.msra.mxu0 %v253
    %388 = vmatpush.msra.mxu0 %v252
    %389 = vmatpush.msra.mxu0 %v251
    %390 = vmatmul.f32.gmra.mxu0 %v300
    %v391 = vpop.f32.mrf.mxu0
    %v392 = vadd.f32 0.0, %v391
    %393 = vmatmul.f32.gmra.mxu0 %v303
    %v394 = vpop.f32.mrf.mxu0
    %v395 = vadd.f32 0.0, %v394
    %396 = vdwg.mxu0
    %v401 = vperm.slane %v287, 0
    %v402 = vperm.slane %v288, 0
    %v403 = vperm.slane %v289, 0
    %v404 = vperm.slane %v290, 0
    %v409 = vadd.f32 %v323, %v401
    %v410 = vadd.f32 %v326, %v401
    %v411 = vadd.f32 %v346, %v402
    %v412 = vadd.f32 %v349, %v402
    %v413 = vadd.f32 %v369, %v403
    %v414 = vadd.f32 %v372, %v403
    %v415 = vadd.f32 %v392, %v404
    %v416 = vadd.f32 %v395, %v404
    %417 = vmatpush.msra.mxu0 0.0
    %418 = vmatpush.msra.mxu0 0.0
    %419 = vmatpush.msra.mxu0 0.0
    %420 = vmatpush.msra.mxu0 0.0
    %421 = vmatpush.msra.mxu0 0.0
    %422 = vmatpush.msra.mxu0 0.0
    %423 = vmatpush.msra.mxu0 0.0
    %424 = vmatpush.msra.mxu0 0.0
    %425 = vmatpush.msra.mxu0 0.0
    %426 = vmatpush.msra.mxu0 0.0
    %427 = vmatpush.msra.mxu0 0.0
    %428 = vmatpush.msra.mxu0 0.0
    %429 = vmatpush.msra.mxu0 %v258
    %430 = vmatpush.msra.mxu0 %v257
    %431 = vmatpush.msra.mxu0 %v256
    %432 = vmatpush.msra.mxu0 %v255
    %433 = vmatmul.f32.gmra.mxu0 %v300
    %v434 = vpop.f32.mrf.mxu0
    %v435 = vadd.f32 0.0, %v434
    %436 = vmatmul.f32.gmra.mxu0 %v303
    %v437 = vpop.f32.mrf.mxu0
    %v438 = vadd.f32 0.0, %v437
    %439 = vdwg.mxu0
    %440 = vmatpush.msra.mxu0 0.0
    %441 = vmatpush.msra.mxu0 0.0
    %442 = vmatpush.msra.mxu0 0.0
    %443 = vmatpush.msra.mxu0 0.0
    %444 = vmatpush.msra.mxu0 0.0
    %445 = vmatpush.msra.mxu0 0.0
    %446 = vmatpush.msra.mxu0 0.0
    %447 = vmatpush.msra.mxu0 0.0
    %448 = vmatpush.msra.mxu0 0.0
    %449 = vmatpush.msra.mxu0 0.0
    %450 = vmatpush.msra.mxu0 0.0
    %451 = vmatpush.msra.mxu0 0.0
    %452 = vmatpush.msra.mxu0 %v262
    %453 = vmatpush.msra.mxu0 %v261
    %454 = vmatpush.msra.mxu0 %v260
    %455 = vmatpush.msra.mxu0 %v259
    %456 = vmatmul.f32.gmra.mxu0 %v300
    %v457 = vpop.f32.mrf.mxu0
    %v458 = vadd.f32 0.0, %v457
    %459 = vmatmul.f32.gmra.mxu0 %v303
    %v460 = vpop.f32.mrf.mxu0
    %v461 = vadd.f32 0.0, %v460
    %462 = vdwg.mxu0
    %463 = vmatpush.msra.mxu0 0.0
    %464 = vmatpush.msra.mxu0 0.0
    %465 = vmatpush.msra.mxu0 0.0
    %466 = vmatpush.msra.mxu0 0.0
    %467 = vmatpush.msra.mxu0 0.0
    %468 = vmatpush.msra.mxu0 0.0
    %469 = vmatpush.msra.mxu0 0.0
    %470 = vmatpush.msra.mxu0 0.0
    %471 = vmatpush.msra.mxu0 0.0
    %472 = vmatpush.msra.mxu0 0.0
    %473 = vmatpush.msra.mxu0 0.0
    %474 = vmatpush.msra.mxu0 0.0
    %475 = vmatpush.msra.mxu0 %v266
    %476 = vmatpush.msra.mxu0 %v265
    %477 = vmatpush.msra.mxu0 %v264
    %478 = vmatpush.msra.mxu0 %v263
    %479 = vmatmul.f32.gmra.mxu0 %v300
    %v480 = vpop.f32.mrf.mxu0
    %v481 = vadd.f32 0.0, %v480
    %482 = vmatmul.f32.gmra.mxu0 %v303
    %v483 = vpop.f32.mrf.mxu0
    %v484 = vadd.f32 0.0, %v483
    %485 = vdwg.mxu0
    %486 = vmatpush.msra.mxu0 0.0
    %487 = vmatpush.msra.mxu0 0.0
    %488 = vmatpush.msra.mxu0 0.0
    %489 = vmatpush.msra.mxu0 0.0
    %490 = vmatpush.msra.mxu0 0.0
    %491 = vmatpush.msra.mxu0 0.0
    %492 = vmatpush.msra.mxu0 0.0
    %493 = vmatpush.msra.mxu0 0.0
    %494 = vmatpush.msra.mxu0 0.0
    %495 = vmatpush.msra.mxu0 0.0
    %496 = vmatpush.msra.mxu0 0.0
    %497 = vmatpush.msra.mxu0 0.0
    %498 = vmatpush.msra.mxu0 %v270
    %499 = vmatpush.msra.mxu0 %v269
    %500 = vmatpush.msra.mxu0 %v268
    %501 = vmatpush.msra.mxu0 %v267
    %502 = vmatmul.f32.gmra.mxu0 %v300
    %v503 = vpop.f32.mrf.mxu0
    %v504 = vadd.f32 0.0, %v503
    %505 = vmatmul.f32.gmra.mxu0 %v303
    %v506 = vpop.f32.mrf.mxu0
    %v507 = vadd.f32 0.0, %v506
    %508 = vdwg.mxu0
    %v513 = vperm.slane %v291, 0
    %v514 = vperm.slane %v292, 0
    %v515 = vperm.slane %v293, 0
    %v516 = vperm.slane %v294, 0
    %v521 = vadd.f32 %v435, %v513
    %v522 = vadd.f32 %v438, %v513
    %v523 = vadd.f32 %v458, %v514
    %v524 = vadd.f32 %v461, %v514
    %v525 = vadd.f32 %v481, %v515
    %v526 = vadd.f32 %v484, %v515
    %v527 = vadd.f32 %v504, %v516
    %v528 = vadd.f32 %v507, %v516
    %529 = vmatpush.msra.mxu0 0.0
    %530 = vmatpush.msra.mxu0 0.0
    %531 = vmatpush.msra.mxu0 0.0
    %532 = vmatpush.msra.mxu0 0.0
    %533 = vmatpush.msra.mxu0 0.0
    %534 = vmatpush.msra.mxu0 0.0
    %535 = vmatpush.msra.mxu0 0.0
    %536 = vmatpush.msra.mxu0 0.0
    %537 = vmatpush.msra.mxu0 0.0
    %538 = vmatpush.msra.mxu0 0.0
    %539 = vmatpush.msra.mxu0 0.0
    %540 = vmatpush.msra.mxu0 0.0
    %541 = vmatpush.msra.mxu0 %v274
    %542 = vmatpush.msra.mxu0 %v273
    %543 = vmatpush.msra.mxu0 %v272
    %544 = vmatpush.msra.mxu0 %v271
    %545 = vmatmul.f32.gmra.mxu0 %v300
    %v546 = vpop.f32.mrf.mxu0
    %v547 = vadd.f32 0.0, %v546
    %548 = vmatmul.f32.gmra.mxu0 %v303
    %v549 = vpop.f32.mrf.mxu0
    %v550 = vadd.f32 0.0, %v549
    %551 = vdwg.mxu0
    %552 = vmatpush.msra.mxu0 0.0
    %553 = vmatpush.msra.mxu0 0.0
    %554 = vmatpush.msra.mxu0 0.0
    %555 = vmatpush.msra.mxu0 0.0
    %556 = vmatpush.msra.mxu0 0.0
    %557 = vmatpush.msra.mxu0 0.0
    %558 = vmatpush.msra.mxu0 0.0
    %559 = vmatpush.msra.mxu0 0.0
    %560 = vmatpush.msra.mxu0 0.0
    %561 = vmatpush.msra.mxu0 0.0
    %562 = vmatpush.msra.mxu0 0.0
    %563 = vmatpush.msra.mxu0 0.0
    %564 = vmatpush.msra.mxu0 %v278
    %565 = vmatpush.msra.mxu0 %v277
    %566 = vmatpush.msra.mxu0 %v276
    %567 = vmatpush.msra.mxu0 %v275
    %568 = vmatmul.f32.gmra.mxu0 %v300
    %v569 = vpop.f32.mrf.mxu0
    %v570 = vadd.f32 0.0, %v569
    %571 = vmatmul.f32.gmra.mxu0 %v303
    %v572 = vpop.f32.mrf.mxu0
    %v573 = vadd.f32 0.0, %v572
    %574 = vdwg.mxu0
    %575 = vmatpush.msra.mxu0 0.0
    %576 = vmatpush.msra.mxu0 0.0
    %577 = vmatpush.msra.mxu0 0.0
    %578 = vmatpush.msra.mxu0 0.0
    %579 = vmatpush.msra.mxu0 0.0
    %580 = vmatpush.msra.mxu0 0.0
    %581 = vmatpush.msra.mxu0 0.0
    %582 = vmatpush.msra.mxu0 0.0
    %583 = vmatpush.msra.mxu0 0.0
    %584 = vmatpush.msra.mxu0 0.0
    %585 = vmatpush.msra.mxu0 0.0
    %586 = vmatpush.msra.mxu0 0.0
    %587 = vmatpush.msra.mxu0 %v282
    %588 = vmatpush.msra.mxu0 %v281
    %589 = vmatpush.msra.mxu0 %v280
    %590 = vmatpush.msra.mxu0 %v279
    %591 = vmatmul.f32.gmra.mxu0 %v300
    %v592 = vpop.f32.mrf.mxu0
    %v593 = vadd.f32 0.0, %v592
    %594 = vmatmul.f32.gmra.mxu0 %v303
    %v595 = vpop.f32.mrf.mxu0
    %v596 = vadd.f32 0.0, %v595
    %597 = vdwg.mxu0
    %598 = vmatpush.msra.mxu0 0.0
    %599 = vmatpush.msra.mxu0 0.0
    %600 = vmatpush.msra.mxu0 0.0
    %601 = vmatpush.msra.mxu0 0.0
    %602 = vmatpush.msra.mxu0 0.0
    %603 = vmatpush.msra.mxu0 0.0
    %604 = vmatpush.msra.mxu0 0.0
    %605 = vmatpush.msra.mxu0 0.0
    %606 = vmatpush.msra.mxu0 0.0
    %607 = vmatpush.msra.mxu0 0.0
    %608 = vmatpush.msra.mxu0 0.0
    %609 = vmatpush.msra.mxu0 0.0
    %610 = vmatpush.msra.mxu0 %v286
    %611 = vmatpush.msra.mxu0 %v285
    %612 = vmatpush.msra.mxu0 %v284
    %613 = vmatpush.msra.mxu0 %v283
    %614 = vmatmul.f32.gmra.mxu0 %v300
    %v615 = vpop.f32.mrf.mxu0
    %v616 = vadd.f32 0.0, %v615
    %617 = vmatmul.f32.gmra.mxu0 %v303
    %v618 = vpop.f32.mrf.mxu0
    %v619 = vadd.f32 0.0, %v618
    %620 = vdwg.mxu0
    %v625 = vperm.slane %v295, 0
    %v626 = vperm.slane %v296, 0
    %v627 = vperm.slane %v297, 0
    %v628 = vperm.slane %v298, 0
    %v633 = vadd.f32 %v547, %v625
    %v634 = vadd.f32 %v550, %v625
    %v635 = vadd.f32 %v570, %v626
    %v636 = vadd.f32 %v573, %v626
    %v637 = vadd.f32 %v593, %v627
    %v638 = vadd.f32 %v596, %v627
    %v639 = vadd.f32 %v616, %v628
    %v640 = vadd.f32 %v619, %v628
    %v641 = vmul.f32 %v409, 0.35355338
    %v642 = vmul.f32 %v410, 0.35355338
    %v643 = vmul.f32 %v411, 0.35355338
    %v644 = vmul.f32 %v412, 0.35355338
    %v645 = vmul.f32 %v413, 0.35355338
    %v646 = vmul.f32 %v414, 0.35355338
    %v647 = vmul.f32 %v415, 0.35355338
    %v648 = vmul.f32 %v416, 0.35355338
    %vm649 = vcmask 64512
    %v651 = vsel %vm649, %v641, 0
    %v654 = vsel %vm649, %v642, 0
    %v657 = vsel %vm649, %v521, 0
    %v660 = vsel %vm649, %v522, 0
    %662 = vmatpush.xpose.msra.mxu0 0.0
    %663 = vmatpush.xpose.msra.mxu0 0.0
    %664 = vmatpush.xpose.msra.mxu0 0.0
    %665 = vmatpush.xpose.msra.mxu0 0.0
    %666 = vmatpush.xpose.msra.mxu0 0.0
    %667 = vmatpush.xpose.msra.mxu0 0.0
    %668 = vmatpush.xpose.msra.mxu0 0.0
    %669 = vmatpush.xpose.msra.mxu0 0.0
    %670 = vmatpush.xpose.msra.mxu0 0.0
    %671 = vmatpush.xpose.msra.mxu0 0.0
    %672 = vmatpush.xpose.msra.mxu0 0.0
    %673 = vmatpush.xpose.msra.mxu0 0.0
    %674 = vmatpush.xpose.msra.mxu0 0.0
    %675 = vmatpush.xpose.msra.mxu0 0.0
    %676 = vmatpush.xpose.msra.mxu0 %v660
    %677 = vmatpush.xpose.msra.mxu0 %v657
    %678 = vmatmul.f32.gmra.mxu0 %v651
    %v679 = vpop.f32.mrf.mxu0
    %v680 = vadd.f32 %v172, %v679
    %681 = vmatmul.f32.gmra.mxu0 %v654
    %v682 = vpop.f32.mrf.mxu0
    %v683 = vadd.f32 %v173, %v682
    %684 = vdwg.mxu0
    %v686 = vsel %vm649, %v643, 0
    %v689 = vsel %vm649, %v644, 0
    %v692 = vsel %vm649, %v523, 0
    %v695 = vsel %vm649, %v524, 0
    %697 = vmatpush.xpose.msra.mxu0 0.0
    %698 = vmatpush.xpose.msra.mxu0 0.0
    %699 = vmatpush.xpose.msra.mxu0 0.0
    %700 = vmatpush.xpose.msra.mxu0 0.0
    %701 = vmatpush.xpose.msra.mxu0 0.0
    %702 = vmatpush.xpose.msra.mxu0 0.0
    %703 = vmatpush.xpose.msra.mxu0 0.0
    %704 = vmatpush.xpose.msra.mxu0 0.0
    %705 = vmatpush.xpose.msra.mxu0 0.0
    %706 = vmatpush.xpose.msra.mxu0 0.0
    %707 = vmatpush.xpose.msra.mxu0 0.0
    %708 = vmatpush.xpose.msra.mxu0 0.0
    %709 = vmatpush.xpose.msra.mxu0 0.0
    %710 = vmatpush.xpose.msra.mxu0 0.0
    %711 = vmatpush.xpose.msra.mxu0 %v695
    %712 = vmatpush.xpose.msra.mxu0 %v692
    %713 = vmatmul.f32.gmra.mxu0 %v686
    %v714 = vpop.f32.mrf.mxu0
    %v715 = vadd.f32 %v172, %v714
    %716 = vmatmul.f32.gmra.mxu0 %v689
    %v717 = vpop.f32.mrf.mxu0
    %v718 = vadd.f32 %v173, %v717
    %719 = vdwg.mxu0
    %v721 = vsel %vm649, %v645, 0
    %v724 = vsel %vm649, %v646, 0
    %v727 = vsel %vm649, %v525, 0
    %v730 = vsel %vm649, %v526, 0
    %732 = vmatpush.xpose.msra.mxu0 0.0
    %733 = vmatpush.xpose.msra.mxu0 0.0
    %734 = vmatpush.xpose.msra.mxu0 0.0
    %735 = vmatpush.xpose.msra.mxu0 0.0
    %736 = vmatpush.xpose.msra.mxu0 0.0
    %737 = vmatpush.xpose.msra.mxu0 0.0
    %738 = vmatpush.xpose.msra.mxu0 0.0
    %739 = vmatpush.xpose.msra.mxu0 0.0
    %740 = vmatpush.xpose.msra.mxu0 0.0
    %741 = vmatpush.xpose.msra.mxu0 0.0
    %742 = vmatpush.xpose.msra.mxu0 0.0
    %743 = vmatpush.xpose.msra.mxu0 0.0
    %744 = vmatpush.xpose.msra.mxu0 0.0
    %745 = vmatpush.xpose.msra.mxu0 0.0
    %746 = vmatpush.xpose.msra.mxu0 %v730
    %747 = vmatpush.xpose.msra.mxu0 %v727
    %748 = vmatmul.f32.gmra.mxu0 %v721
    %v749 = vpop.f32.mrf.mxu0
    %v750 = vadd.f32 %v172, %v749
    %751 = vmatmul.f32.gmra.mxu0 %v724
    %v752 = vpop.f32.mrf.mxu0
    %v753 = vadd.f32 %v173, %v752
    %754 = vdwg.mxu0
    %v756 = vsel %vm649, %v647, 0
    %v759 = vsel %vm649, %v648, 0
    %v762 = vsel %vm649, %v527, 0
    %v765 = vsel %vm649, %v528, 0
    %767 = vmatpush.xpose.msra.mxu0 0.0
    %768 = vmatpush.xpose.msra.mxu0 0.0
    %769 = vmatpush.xpose.msra.mxu0 0.0
    %770 = vmatpush.xpose.msra.mxu0 0.0
    %771 = vmatpush.xpose.msra.mxu0 0.0
    %772 = vmatpush.xpose.msra.mxu0 0.0
    %773 = vmatpush.xpose.msra.mxu0 0.0
    %774 = vmatpush.xpose.msra.mxu0 0.0
    %775 = vmatpush.xpose.msra.mxu0 0.0
    %776 = vmatpush.xpose.msra.mxu0 0.0
    %777 = vmatpush.xpose.msra.mxu0 0.0
    %778 = vmatpush.xpose.msra.mxu0 0.0
    %779 = vmatpush.xpose.msra.mxu0 0.0
    %780 = vmatpush.xpose.msra.mxu0 0.0
    %781 = vmatpush.xpose.msra.mxu0 %v765
    %782 = vmatpush.xpose.msra.mxu0 %v762
    %783 = vmatmul.f32.gmra.mxu0 %v756
    %v784 = vpop.f32.mrf.mxu0
    %v785 = vadd.f32 %v172, %v784
    %786 = vmatmul.f32.gmra.mxu0 %v759
    %v787 = vpop.f32.mrf.mxu0
    %v788 = vadd.f32 %v173, %v787
    %789 = vdwg.mxu0
    %vm790 = vcmask 80896
    %v791 = vsel %vm790, %v680, -inf
    %792 = vmax.xlane.f32.xlu0 %v791
    %v793 = vpop.xlane.xlu0 %792
    %vm794 = vcmask 74752
    %v795 = vsel %vm794, %v683, -inf
    %796 = vmax.xlane.f32.xlu0 %v795
    %v797 = vpop.xlane.xlu0 %796
    %v798 = vsel %vm790, %v715, -inf
    %799 = vmax.xlane.f32.xlu0 %v798
    %v800 = vpop.xlane.xlu0 %799
    %v801 = vsel %vm794, %v718, -inf
    %802 = vmax.xlane.f32.xlu0 %v801
    %v803 = vpop.xlane.xlu0 %802
    %v804 = vsel %vm790, %v750, -inf
    %805 = vmax.xlane.f32.xlu0 %v804
    %v806 = vpop.xlane.xlu0 %805
    %v807 = vsel %vm794, %v753, -inf
    %808 = vmax.xlane.f32.xlu0 %v807
    %v809 = vpop.xlane.xlu0 %808
    %v810 = vsel %vm790, %v785, -inf
    %811 = vmax.xlane.f32.xlu0 %v810
    %v812 = vpop.xlane.xlu0 %811
    %v813 = vsel %vm794, %v788, -inf
    %814 = vmax.xlane.f32.xlu0 %v813
    %v815 = vpop.xlane.xlu0 %814
    %v816 = vsub.f32 %v680, %v793
    %v817 = vsub.f32 %v683, %v797
    %v818 = vsub.f32 %v715, %v800
    %v819 = vsub.f32 %v718, %v803
    %v820 = vsub.f32 %v750, %v806
    %v821 = vsub.f32 %v753, %v809
    %v822 = vsub.f32 %v785, %v812
    %v823 = vsub.f32 %v788, %v815
    %v824 = vmul.f32 %v816, 1.442695
    %v825 = vpow.pop %v824
    %v826 = vmul.f32 %v817, 1.442695
    %v827 = vpow.pop %v826
    %v828 = vmul.f32 %v818, 1.442695
    %v829 = vpow.pop %v828
    %v830 = vmul.f32 %v819, 1.442695
    %v831 = vpow.pop %v830
    %v832 = vmul.f32 %v820, 1.442695
    %v833 = vpow.pop %v832
    %v834 = vmul.f32 %v821, 1.442695
    %v835 = vpow.pop %v834
    %v836 = vmul.f32 %v822, 1.442695
    %v837 = vpow.pop %v836
    %v838 = vmul.f32 %v823, 1.442695
    %v839 = vpow.pop %v838
    %v840 = vsel %vm790, %v825, 0.0
    %841 = vadd.xlane.f32.xlu0 %v840
    %v842 = vpop.xlane.xlu0 %841
    %v843 = vsel %vm794, %v827, 0.0
    %844 = vadd.xlane.f32.xlu0 %v843
    %v845 = vpop.xlane.xlu0 %844
    %v846 = vsel %vm790, %v829, 0.0
    %847 = vadd.xlane.f32.xlu0 %v846
    %v848 = vpop.xlane.xlu0 %847
    %v849 = vsel %vm794, %v831, 0.0
    %850 = vadd.xlane.f32.xlu0 %v849
    %v851 = vpop.xlane.xlu0 %850
    %v852 = vsel %vm790, %v833, 0.0
    %853 = vadd.xlane.f32.xlu0 %v852
    %v854 = vpop.xlane.xlu0 %853
    %v855 = vsel %vm794, %v835, 0.0
    %856 = vadd.xlane.f32.xlu0 %v855
    %v857 = vpop.xlane.xlu0 %856
    %v858 = vsel %vm790, %v837, 0.0
    %859 = vadd.xlane.f32.xlu0 %v858
    %v860 = vpop.xlane.xlu0 %859
    %v861 = vsel %vm794, %v839, 0.0
    %862 = vadd.xlane.f32.xlu0 %v861
    %v863 = vpop.xlane.xlu0 %862
    %v864 = vrcp.pop %v842
    %v865 = vrcp.pop %v845
    %v866 = vrcp.pop %v848
    %v867 = vrcp.pop %v851
    %v868 = vrcp.pop %v854
    %v869 = vrcp.pop %v857
    %v870 = vrcp.pop %v860
    %v871 = vrcp.pop %v863
    %v872 = vmul.f32 %v825, %v864
    %v873 = vmul.f32 %v827, %v865
    %v874 = vmul.f32 %v829, %v866
    %v875 = vmul.f32 %v831, %v867
    %v876 = vmul.f32 %v833, %v868
    %v877 = vmul.f32 %v835, %v869
    %v878 = vmul.f32 %v837, %v870
    %v879 = vmul.f32 %v839, %v871
    %v881 = vsel %vm790, %v872, 0
    %v884 = vsel %vm790, %v873, 0
    %vm886 = vcmask 1041408
    %v888 = vsel %vm886, %v634, 0
    %890 = vmatpush.msra.mxu0 0.0
    %891 = vmatpush.msra.mxu0 0.0
    %892 = vmatpush.msra.mxu0 0.0
    %893 = vmatpush.msra.mxu0 0.0
    %894 = vmatpush.msra.mxu0 0.0
    %895 = vmatpush.msra.mxu0 0.0
    %896 = vmatpush.msra.mxu0 0.0
    %897 = vmatpush.msra.mxu0 0.0
    %898 = vmatpush.msra.mxu0 0.0
    %899 = vmatpush.msra.mxu0 0.0
    %900 = vmatpush.msra.mxu0 0.0
    %901 = vmatpush.msra.mxu0 0.0
    %902 = vmatpush.msra.mxu0 0.0
    %903 = vmatpush.msra.mxu0 0.0
    %904 = vmatpush.msra.mxu0 %v888
    %905 = vmatpush.msra.mxu0 %v633
    %906 = vmatmul.f32.gmra.mxu0 %v881
    %v907 = vpop.f32.mrf.mxu0
    %v908 = vadd.f32 0.0, %v907
    %909 = vmatmul.f32.gmra.mxu0 %v884
    %v910 = vpop.f32.mrf.mxu0
    %v911 = vadd.f32 0.0, %v910
    %912 = vdwg.mxu0
    %v914 = vsel %vm790, %v874, 0
    %v917 = vsel %vm790, %v875, 0
    %v920 = vsel %vm886, %v636, 0
    %922 = vmatpush.msra.mxu0 0.0
    %923 = vmatpush.msra.mxu0 0.0
    %924 = vmatpush.msra.mxu0 0.0
    %925 = vmatpush.msra.mxu0 0.0
    %926 = vmatpush.msra.mxu0 0.0
    %927 = vmatpush.msra.mxu0 0.0
    %928 = vmatpush.msra.mxu0 0.0
    %929 = vmatpush.msra.mxu0 0.0
    %930 = vmatpush.msra.mxu0 0.0
    %931 = vmatpush.msra.mxu0 0.0
    %932 = vmatpush.msra.mxu0 0.0
    %933 = vmatpush.msra.mxu0 0.0
    %934 = vmatpush.msra.mxu0 0.0
    %935 = vmatpush.msra.mxu0 0.0
    %936 = vmatpush.msra.mxu0 %v920
    %937 = vmatpush.msra.mxu0 %v635
    %938 = vmatmul.f32.gmra.mxu0 %v914
    %v939 = vpop.f32.mrf.mxu0
    %v940 = vadd.f32 0.0, %v939
    %941 = vmatmul.f32.gmra.mxu0 %v917
    %v942 = vpop.f32.mrf.mxu0
    %v943 = vadd.f32 0.0, %v942
    %944 = vdwg.mxu0
    %v946 = vsel %vm790, %v876, 0
    %v949 = vsel %vm790, %v877, 0
    %v952 = vsel %vm886, %v638, 0
    %954 = vmatpush.msra.mxu0 0.0
    %955 = vmatpush.msra.mxu0 0.0
    %956 = vmatpush.msra.mxu0 0.0
    %957 = vmatpush.msra.mxu0 0.0
    %958 = vmatpush.msra.mxu0 0.0
    %959 = vmatpush.msra.mxu0 0.0
    %960 = vmatpush.msra.mxu0 0.0
    %961 = vmatpush.msra.mxu0 0.0
    %962 = vmatpush.msra.mxu0 0.0
    %963 = vmatpush.msra.mxu0 0.0
    %964 = vmatpush.msra.mxu0 0.0
    %965 = vmatpush.msra.mxu0 0.0
    %966 = vmatpush.msra.mxu0 0.0
    %967 = vmatpush.msra.mxu0 0.0
    %968 = vmatpush.msra.mxu0 %v952
    %969 = vmatpush.msra.mxu0 %v637
    %970 = vmatmul.f32.gmra.mxu0 %v946
    %v971 = vpop.f32.mrf.mxu0
    %v972 = vadd.f32 0.0, %v971
    %973 = vmatmul.f32.gmra.mxu0 %v949
    %v974 = vpop.f32.mrf.mxu0
    %v975 = vadd.f32 0.0, %v974
    %976 = vdwg.mxu0
    %v978 = vsel %vm790, %v878, 0
    %v981 = vsel %vm790, %v879, 0
    %v984 = vsel %vm886, %v640, 0
    %986 = vmatpush.msra.mxu0 0.0
    %987 = vmatpush.msra.mxu0 0.0
    %988 = vmatpush.msra.mxu0 0.0
    %989 = vmatpush.msra.mxu0 0.0
    %990 = vmatpush.msra.mxu0 0.0
    %991 = vmatpush.msra.mxu0 0.0
    %992 = vmatpush.msra.mxu0 0.0
    %993 = vmatpush.msra.mxu0 0.0
    %994 = vmatpush.msra.mxu0 0.0
    %995 = vmatpush.msra.mxu0 0.0
    %996 = vmatpush.msra.mxu0 0.0
    %997 = vmatpush.msra.mxu0 0.0
    %998 = vmatpush.msra.mxu0 0.0
    %999 = vmatpush.msra.mxu0 0.0
    %1000 = vmatpush.msra.mxu0 %v984
    %1001 = vmatpush.msra.mxu0 %v639
    %1002 = vmatmul.f32.gmra.mxu0 %v978
    %v1003 = vpop.f32.mrf.mxu0
    %v1004 = vadd.f32 0.0, %v1003
    %1005 = vmatmul.f32.gmra.mxu0 %v981
    %v1006 = vpop.f32.mrf.mxu0
    %v1007 = vadd.f32 0.0, %v1006
    %1008 = vdwg.mxu0
    %v1009 = vld [vmem:[%s14] sm:$0xff]
    %v1010 = vld [vmem:[%s14 + $0x8] sm:$0xff]
    %v1011 = vld [vmem:[%s14 + $0x10] sm:$0xff]
    %v1012 = vld [vmem:[%s14 + $0x18] sm:$0xff]
    %v1014 = vsel %vm649, %v940, 0
    %v1017 = vsel %vm649, %v943, 0
    %1019 = vmatpush.msra.mxu0 0.0
    %1020 = vmatpush.msra.mxu0 0.0
    %1021 = vmatpush.msra.mxu0 0.0
    %1022 = vmatpush.msra.mxu0 0.0
    %1023 = vmatpush.msra.mxu0 0.0
    %1024 = vmatpush.msra.mxu0 0.0
    %1025 = vmatpush.msra.mxu0 0.0
    %1026 = vmatpush.msra.mxu0 0.0
    %1027 = vmatpush.msra.mxu0 0.0
    %1028 = vmatpush.msra.mxu0 0.0
    %1029 = vmatpush.msra.mxu0 0.0
    %1030 = vmatpush.msra.mxu0 0.0
    %1031 = vmatpush.msra.mxu0 0.0
    %1032 = vmatpush.msra.mxu0 0.0
    %1033 = vmatpush.msra.mxu0 0.0
    %1034 = vmatpush.msra.mxu0 %v1010
    %1035 = vmatmul.f32.gmra.mxu0 %v1014
    %v1036 = vpop.f32.mrf.mxu0
    %v1037 = vadd.f32 0.0, %v1036
    %1038 = vmatmul.f32.gmra.mxu0 %v1017
    %v1039 = vpop.f32.mrf.mxu0
    %v1040 = vadd.f32 0.0, %v1039
    %1041 = vdwg.mxu0
    %v1043 = vsel %vm649, %v908, 0
    %v1046 = vsel %vm649, %v911, 0
    %1048 = vmatpush.msra.mxu0 0.0
    %1049 = vmatpush.msra.mxu0 0.0
    %1050 = vmatpush.msra.mxu0 0.0
    %1051 = vmatpush.msra.mxu0 0.0
    %1052 = vmatpush.msra.mxu0 0.0
    %1053 = vmatpush.msra.mxu0 0.0
    %1054 = vmatpush.msra.mxu0 0.0
    %1055 = vmatpush.msra.mxu0 0.0
    %1056 = vmatpush.msra.mxu0 0.0
    %1057 = vmatpush.msra.mxu0 0.0
    %1058 = vmatpush.msra.mxu0 0.0
    %1059 = vmatpush.msra.mxu0 0.0
    %1060 = vmatpush.msra.mxu0 0.0
    %1061 = vmatpush.msra.mxu0 0.0
    %1062 = vmatpush.msra.mxu0 0.0
    %1063 = vmatpush.msra.mxu0 %v1009
    %1064 = vmatmul.f32.gmra.mxu0 %v1043
    %v1065 = vpop.f32.mrf.mxu0
    %v1066 = vadd.f32 %v1037, %v1065
    %1067 = vmatmul.f32.gmra.mxu0 %v1046
    %v1068 = vpop.f32.mrf.mxu0
    %v1069 = vadd.f32 %v1040, %v1068
    %1070 = vdwg.mxu0
    %v1072 = vsel %vm649, %v972, 0
    %v1075 = vsel %vm649, %v975, 0
    %1077 = vmatpush.msra.mxu0 0.0
    %1078 = vmatpush.msra.mxu0 0.0
    %1079 = vmatpush.msra.mxu0 0.0
    %1080 = vmatpush.msra.mxu0 0.0
    %1081 = vmatpush.msra.mxu0 0.0
    %1082 = vmatpush.msra.mxu0 0.0
    %1083 = vmatpush.msra.mxu0 0.0
    %1084 = vmatpush.msra.mxu0 0.0
    %1085 = vmatpush.msra.mxu0 0.0
    %1086 = vmatpush.msra.mxu0 0.0
    %1087 = vmatpush.msra.mxu0 0.0
    %1088 = vmatpush.msra.mxu0 0.0
    %1089 = vmatpush.msra.mxu0 0.0
    %1090 = vmatpush.msra.mxu0 0.0
    %1091 = vmatpush.msra.mxu0 0.0
    %1092 = vmatpush.msra.mxu0 %v1011
    %1093 = vmatmul.f32.gmra.mxu0 %v1072
    %v1094 = vpop.f32.mrf.mxu0
    %v1095 = vadd.f32 0.0, %v1094
    %1096 = vmatmul.f32.gmra.mxu0 %v1075
    %v1097 = vpop.f32.mrf.mxu0
    %v1098 = vadd.f32 0.0, %v1097
    %1099 = vdwg.mxu0
    %v1100 = vadd.f32 %v1066, %v1095
    %v1101 = vadd.f32 %v1069, %v1098
    %v1103 = vsel %vm649, %v1004, 0
    %v1106 = vsel %vm649, %v1007, 0
    %1108 = vmatpush.msra.mxu0 0.0
    %1109 = vmatpush.msra.mxu0 0.0
    %1110 = vmatpush.msra.mxu0 0.0
    %1111 = vmatpush.msra.mxu0 0.0
    %1112 = vmatpush.msra.mxu0 0.0
    %1113 = vmatpush.msra.mxu0 0.0
    %1114 = vmatpush.msra.mxu0 0.0
    %1115 = vmatpush.msra.mxu0 0.0
    %1116 = vmatpush.msra.mxu0 0.0
    %1117 = vmatpush.msra.mxu0 0.0
    %1118 = vmatpush.msra.mxu0 0.0
    %1119 = vmatpush.msra.mxu0 0.0
    %1120 = vmatpush.msra.mxu0 0.0
    %1121 = vmatpush.msra.mxu0 0.0
    %1122 = vmatpush.msra.mxu0 0.0
    %1123 = vmatpush.msra.mxu0 %v1012
    %1124 = vmatmul.f32.gmra.mxu0 %v1103
    %v1125 = vpop.f32.mrf.mxu0
    %v1126 = vadd.f32 0.0, %v1125
    %1127 = vmatmul.f32.gmra.mxu0 %v1106
    %v1128 = vpop.f32.mrf.mxu0
    %v1129 = vadd.f32 0.0, %v1128
    %1130 = vdwg.mxu0
    %v1131 = vadd.f32 %v1100, %v1126
    %v1132 = vadd.f32 %v1101, %v1129
    %v1133 = vadd.f32 %v170, %v1131
    %v1134 = vadd.f32 %v171, %v1132
    %v1135 = vld [vmem:[%s15] sm:$0x1]
    %v1137 = vperm.slane %v1135, 0
    %v1139 = vadd.f32 %v1133, %v1137
    %v1140 = vadd.f32 %v1134, %v1137
    %v1141 = vld [vmem:[%s16] sm:$0x1]
    %v1142 = vld [vmem:[%s17] sm:$0x1]
    %v1143 = vsel %vm176, %v1139, 0.0
    %1144 = vadd.xlane.f32.xlu0 %v1143
    %v1145 = vpop.xlane.xlu0 %1144
    %v1146 = vsel %vm180, %v1140, 0.0
    %1147 = vadd.xlane.f32.xlu0 %v1146
    %v1148 = vpop.xlane.xlu0 %1147
    %v1149 = vmul.f32 %v1145, %v190
    %v1150 = vmul.f32 %v1148, %v190
    %v1151 = vsub.f32 %v1139, %v1149
    %v1152 = vsub.f32 %v1140, %v1150
    %v1153 = vmul.f32 %v1151, %v1151
    %v1154 = vmul.f32 %v1152, %v1152
    %v1155 = vsel %vm176, %v1153, 0.0
    %1156 = vadd.xlane.f32.xlu0 %v1155
    %v1157 = vpop.xlane.xlu0 %1156
    %v1158 = vsel %vm180, %v1154, 0.0
    %1159 = vadd.xlane.f32.xlu0 %v1158
    %v1160 = vpop.xlane.xlu0 %1159
    %v1161 = vmul.f32 %v1157, %v190
    %v1162 = vmul.f32 %v1160, %v190
    %v1163 = vadd.f32 %v1161, 1e-06
    %v1164 = vadd.f32 %v1162, 1e-06
    %v1165 = vrsqrt.pop %v1163
    %v1166 = vmul.f32 %v1165, %v1163
    %v1167 = vmul.f32 %v1166, %v1165
    %v1168 = vmul.f32 0.5, %v1167
    %v1169 = vsub.f32 1.5, %v1168
    %v1170 = vmul.f32 %v1165, %v1169
    %vm1171 = vweird.f32 %v1163
    %vm1172 = vweird.f32 %v1165
    %vm1173 = vmor %vm1171, %vm1172
    %v1174 = vsel %vm1173, %v1165, %v1170
    %v1175 = vrsqrt.pop %v1164
    %v1176 = vmul.f32 %v1175, %v1164
    %v1177 = vmul.f32 %v1176, %v1175
    %v1178 = vmul.f32 0.5, %v1177
    %v1179 = vsub.f32 1.5, %v1178
    %v1180 = vmul.f32 %v1175, %v1179
    %vm1181 = vweird.f32 %v1164
    %vm1182 = vweird.f32 %v1175
    %vm1183 = vmor %vm1181, %vm1182
    %v1184 = vsel %vm1183, %v1175, %v1180
    %v1185 = vmul.f32 %v1151, %v1174
    %v1186 = vmul.f32 %v1152, %v1184
    %v1188 = vperm.slane %v1141, 0
    %v1190 = vmul.f32 %v1185, %v1188
    %v1191 = vmul.f32 %v1186, %v1188
    %v1193 = vperm.slane %v1142, 0
    %v1195 = vadd.f32 %v1190, %v1193
    %v1196 = vadd.f32 %v1191, %v1193
    %v1197 = vld [vmem:[%s18] sm:$0xff]
    %v1198 = vld [vmem:[%s18 + $0x8] sm:$0xff]
    %v1199 = vld [vmem:[%s18 + $0x10] sm:$0xff]
    %v1200 = vld [vmem:[%s18 + $0x18] sm:$0xff]
    %v1201 = vld [vmem:[%s19] sm:$0x1]
    %v1203 = vperm.slane %v1201, 0
    %v1206 = vsel %vm176, %v1195, 0
    %v1209 = vsel %vm176, %v1196, 0
    %1211 = vmatpush.msra.mxu0 0.0
    %1212 = vmatpush.msra.mxu0 0.0
    %1213 = vmatpush.msra.mxu0 0.0
    %1214 = vmatpush.msra.mxu0 0.0
    %1215 = vmatpush.msra.mxu0 0.0
    %1216 = vmatpush.msra.mxu0 0.0
    %1217 = vmatpush.msra.mxu0 0.0
    %1218 = vmatpush.msra.mxu0 0.0
    %1219 = vmatpush.msra.mxu0 0.0
    %1220 = vmatpush.msra.mxu0 0.0
    %1221 = vmatpush.msra.mxu0 0.0
    %1222 = vmatpush.msra.mxu0 0.0
    %1223 = vmatpush.msra.mxu0 %v1200
    %1224 = vmatpush.msra.mxu0 %v1199
    %1225 = vmatpush.msra.mxu0 %v1198
    %1226 = vmatpush.msra.mxu0 %v1197
    %1227 = vmatmul.f32.gmra.mxu0 %v1206
    %v1228 = vpop.f32.mrf.mxu0
    %v1229 = vadd.f32 %v1203, %v1228
    %1230 = vmatmul.f32.gmra.mxu0 %v1209
    %v1231 = vpop.f32.mrf.mxu0
    %v1232 = vadd.f32 %v1203, %v1231
    %1233 = vdwg.mxu0
    %v1234 = vmul.f32 %v1229, 0.5
    %v1235 = vmul.f32 %v1232, 0.5
    %v1236 = vmul.f32 %v1229, 0.044715
    %v1237 = vmul.f32 %v1232, 0.044715
    %v1238 = vmul.f32 %v1236, %v1229
    %v1239 = vmul.f32 %v1237, %v1232
    %v1240 = vmul.f32 %v1238, %v1229
    %v1241 = vmul.f32 %v1239, %v1232
    %v1242 = vadd.f32 %v1229, %v1240
    %v1243 = vadd.f32 %v1232, %v1241
    %v1244 = vmul.f32 %v1242, 0.7978846
    %v1245 = vmul.f32 %v1243, 0.7978846
    %v1246 = vtanh.pop %v1244
    %v1247 = vtanh.pop %v1245
    %v1248 = vadd.f32 %v1246, 1.0
    %v1249 = vadd.f32 %v1247, 1.0
    %v1250 = vmul.f32 %v1234, %v1248
    %v1251 = vmul.f32 %v1235, %v1249
    %v1252 = vld [vmem:[%s20] sm:$0xff]
    %v1253 = vld [vmem:[%s20 + $0x8] sm:$0xff]
    %v1254 = vld [vmem:[%s20 + $0x10] sm:$0xff]
    %v1255 = vld [vmem:[%s20 + $0x18] sm:$0xff]
    %v1256 = vld [vmem:[%s20 + $0x20] sm:$0xff]
    %v1257 = vld [vmem:[%s20 + $0x28] sm:$0xff]
    %v1258 = vld [vmem:[%s20 + $0x30] sm:$0xff]
    %v1259 = vld [vmem:[%s20 + $0x38] sm:$0xff]
    %v1260 = vld [vmem:[%s20 + $0x40] sm:$0xff]
    %v1261 = vld [vmem:[%s20 + $0x48] sm:$0xff]
    %v1262 = vld [vmem:[%s20 + $0x50] sm:$0xff]
    %v1263 = vld [vmem:[%s20 + $0x58] sm:$0xff]
    %v1264 = vld [vmem:[%s20 + $0x60] sm:$0xff]
    %v1265 = vld [vmem:[%s20 + $0x68] sm:$0xff]
    %v1266 = vld [vmem:[%s20 + $0x70] sm:$0xff]
    %v1267 = vld [vmem:[%s20 + $0x78] sm:$0xff]
    %1268 = vmatpush.msra.mxu0 %v1267
    %1269 = vmatpush.msra.mxu0 %v1266
    %1270 = vmatpush.msra.mxu0 %v1265
    %1271 = vmatpush.msra.mxu0 %v1264
    %1272 = vmatpush.msra.mxu0 %v1263
    %1273 = vmatpush.msra.mxu0 %v1262
    %1274 = vmatpush.msra.mxu0 %v1261
    %1275 = vmatpush.msra.mxu0 %v1260
    %1276 = vmatpush.msra.mxu0 %v1259
    %1277 = vmatpush.msra.mxu0 %v1258
    %1278 = vmatpush.msra.mxu0 %v1257
    %1279 = vmatpush.msra.mxu0 %v1256
    %1280 = vmatpush.msra.mxu0 %v1255
    %1281 = vmatpush.msra.mxu0 %v1254
    %1282 = vmatpush.msra.mxu0 %v1253
    %1283 = vmatpush.msra.mxu0 %v1252
    %1284 = vmatmul.f32.gmra.mxu0 %v1250
    %v1285 = vpop.f32.mrf.mxu0
    %v1286 = vadd.f32 0.0, %v1285
    %1287 = vmatmul.f32.gmra.mxu0 %v1251
    %v1288 = vpop.f32.mrf.mxu0
    %v1289 = vadd.f32 0.0, %v1288
    %1290 = vdwg.mxu0
    %v1291 = vadd.f32 %v1139, %v1286
    %v1292 = vadd.f32 %v1140, %v1289
    %v1293 = vld [vmem:[%s21] sm:$0x1]
    %v1295 = vperm.slane %v1293, 0
    %v1297 = vadd.f32 %v1291, %v1295
    %v1298 = vadd.f32 %v1292, %v1295
    %s1299 = scalar_lea.vmem %s6, 1
    %v1300 = vld [vmem:[%s1299] sm:$0x1]
    %s1301 = scalar_lea.vmem %s7, 1
    %v1302 = vld [vmem:[%s1301] sm:$0x1]
    %v1303 = vsel %vm176, %v1297, 0.0
    %1304 = vadd.xlane.f32.xlu0 %v1303
    %v1305 = vpop.xlane.xlu0 %1304
    %v1306 = vsel %vm180, %v1298, 0.0
    %1307 = vadd.xlane.f32.xlu0 %v1306
    %v1308 = vpop.xlane.xlu0 %1307
    %v1309 = vmul.f32 %v1305, %v190
    %v1310 = vmul.f32 %v1308, %v190
    %v1311 = vsub.f32 %v1297, %v1309
    %v1312 = vsub.f32 %v1298, %v1310
    %v1313 = vmul.f32 %v1311, %v1311
    %v1314 = vmul.f32 %v1312, %v1312
    %v1315 = vsel %vm176, %v1313, 0.0
    %1316 = vadd.xlane.f32.xlu0 %v1315
    %v1317 = vpop.xlane.xlu0 %1316
    %v1318 = vsel %vm180, %v1314, 0.0
    %1319 = vadd.xlane.f32.xlu0 %v1318
    %v1320 = vpop.xlane.xlu0 %1319
    %v1321 = vmul.f32 %v1317, %v190
    %v1322 = vmul.f32 %v1320, %v190
    %v1323 = vadd.f32 %v1321, 1e-06
    %v1324 = vadd.f32 %v1322, 1e-06
    %v1325 = vrsqrt.pop %v1323
    %v1326 = vmul.f32 %v1325, %v1323
    %v1327 = vmul.f32 %v1326, %v1325
    %v1328 = vmul.f32 0.5, %v1327
    %v1329 = vsub.f32 1.5, %v1328
    %v1330 = vmul.f32 %v1325, %v1329
    %vm1331 = vweird.f32 %v1323
    %vm1332 = vweird.f32 %v1325
    %vm1333 = vmor %vm1331, %vm1332
    %v1334 = vsel %vm1333, %v1325, %v1330
    %v1335 = vrsqrt.pop %v1324
    %v1336 = vmul.f32 %v1335, %v1324
    %v1337 = vmul.f32 %v1336, %v1335
    %v1338 = vmul.f32 0.5, %v1337
    %v1339 = vsub.f32 1.5, %v1338
    %v1340 = vmul.f32 %v1335, %v1339
    %vm1341 = vweird.f32 %v1324
    %vm1342 = vweird.f32 %v1335
    %vm1343 = vmor %vm1341, %vm1342
    %v1344 = vsel %vm1343, %v1335, %v1340
    %v1345 = vmul.f32 %v1311, %v1334
    %v1346 = vmul.f32 %v1312, %v1344
    %v1348 = vperm.slane %v1300, 0
    %v1350 = vmul.f32 %v1345, %v1348
    %v1351 = vmul.f32 %v1346, %v1348
    %v1353 = vperm.slane %v1302, 0
    %v1355 = vadd.f32 %v1350, %v1353
    %v1356 = vadd.f32 %v1351, %v1353
    %s1357 = scalar_lea.vmem %s8, 128
    %v1358 = vld [vmem:[%s1357] sm:$0xff]
    %v1359 = vld [vmem:[%s1357 + $0x8] sm:$0xff]
    %v1360 = vld [vmem:[%s1357 + $0x10] sm:$0xff]
    %v1361 = vld [vmem:[%s1357 + $0x18] sm:$0xff]
    %v1362 = vld [vmem:[%s1357 + $0x20] sm:$0xff]
    %v1363 = vld [vmem:[%s1357 + $0x28] sm:$0xff]
    %v1364 = vld [vmem:[%s1357 + $0x30] sm:$0xff]
    %v1365 = vld [vmem:[%s1357 + $0x38] sm:$0xff]
    %v1366 = vld [vmem:[%s1357 + $0x40] sm:$0xff]
    %v1367 = vld [vmem:[%s1357 + $0x48] sm:$0xff]
    %v1368 = vld [vmem:[%s1357 + $0x50] sm:$0xff]
    %v1369 = vld [vmem:[%s1357 + $0x58] sm:$0xff]
    %v1370 = vld [vmem:[%s1357 + $0x60] sm:$0xff]
    %v1371 = vld [vmem:[%s1357 + $0x68] sm:$0xff]
    %v1372 = vld [vmem:[%s1357 + $0x70] sm:$0xff]
    %v1373 = vld [vmem:[%s1357 + $0x78] sm:$0xff]
    %s1374 = scalar_lea.vmem %s9, 128
    %v1375 = vld [vmem:[%s1374] sm:$0xff]
    %v1376 = vld [vmem:[%s1374 + $0x8] sm:$0xff]
    %v1377 = vld [vmem:[%s1374 + $0x10] sm:$0xff]
    %v1378 = vld [vmem:[%s1374 + $0x18] sm:$0xff]
    %v1379 = vld [vmem:[%s1374 + $0x20] sm:$0xff]
    %v1380 = vld [vmem:[%s1374 + $0x28] sm:$0xff]
    %v1381 = vld [vmem:[%s1374 + $0x30] sm:$0xff]
    %v1382 = vld [vmem:[%s1374 + $0x38] sm:$0xff]
    %v1383 = vld [vmem:[%s1374 + $0x40] sm:$0xff]
    %v1384 = vld [vmem:[%s1374 + $0x48] sm:$0xff]
    %v1385 = vld [vmem:[%s1374 + $0x50] sm:$0xff]
    %v1386 = vld [vmem:[%s1374 + $0x58] sm:$0xff]
    %v1387 = vld [vmem:[%s1374 + $0x60] sm:$0xff]
    %v1388 = vld [vmem:[%s1374 + $0x68] sm:$0xff]
    %v1389 = vld [vmem:[%s1374 + $0x70] sm:$0xff]
    %v1390 = vld [vmem:[%s1374 + $0x78] sm:$0xff]
    %s1391 = scalar_lea.vmem %s10, 128
    %v1392 = vld [vmem:[%s1391] sm:$0xff]
    %v1393 = vld [vmem:[%s1391 + $0x8] sm:$0xff]
    %v1394 = vld [vmem:[%s1391 + $0x10] sm:$0xff]
    %v1395 = vld [vmem:[%s1391 + $0x18] sm:$0xff]
    %v1396 = vld [vmem:[%s1391 + $0x20] sm:$0xff]
    %v1397 = vld [vmem:[%s1391 + $0x28] sm:$0xff]
    %v1398 = vld [vmem:[%s1391 + $0x30] sm:$0xff]
    %v1399 = vld [vmem:[%s1391 + $0x38] sm:$0xff]
    %v1400 = vld [vmem:[%s1391 + $0x40] sm:$0xff]
    %v1401 = vld [vmem:[%s1391 + $0x48] sm:$0xff]
    %v1402 = vld [vmem:[%s1391 + $0x50] sm:$0xff]
    %v1403 = vld [vmem:[%s1391 + $0x58] sm:$0xff]
    %v1404 = vld [vmem:[%s1391 + $0x60] sm:$0xff]
    %v1405 = vld [vmem:[%s1391 + $0x68] sm:$0xff]
    %v1406 = vld [vmem:[%s1391 + $0x70] sm:$0xff]
    %v1407 = vld [vmem:[%s1391 + $0x78] sm:$0xff]
    %s1408 = scalar_lea.vmem %s11, 4
    %v1409 = vld [vmem:[%s1408] sm:$0x1]
    %v1410 = vld [vmem:[%s1408 + $0x1] sm:$0x1]
    %v1411 = vld [vmem:[%s1408 + $0x2] sm:$0x1]
    %v1412 = vld [vmem:[%s1408 + $0x3] sm:$0x1]
    %s1413 = scalar_lea.vmem %s12, 4
    %v1414 = vld [vmem:[%s1413] sm:$0x1]
    %v1415 = vld [vmem:[%s1413 + $0x1] sm:$0x1]
    %v1416 = vld [vmem:[%s1413 + $0x2] sm:$0x1]
    %v1417 = vld [vmem:[%s1413 + $0x3] sm:$0x1]
    %s1418 = scalar_lea.vmem %s13, 4
    %v1419 = vld [vmem:[%s1418] sm:$0x1]
    %v1420 = vld [vmem:[%s1418 + $0x1] sm:$0x1]
    %v1421 = vld [vmem:[%s1418 + $0x2] sm:$0x1]
    %v1422 = vld [vmem:[%s1418 + $0x3] sm:$0x1]
    %v1424 = vsel %vm176, %v1355, 0
    %v1427 = vsel %vm176, %v1356, 0
    %1429 = vmatpush.msra.mxu0 0.0
    %1430 = vmatpush.msra.mxu0 0.0
    %1431 = vmatpush.msra.mxu0 0.0
    %1432 = vmatpush.msra.mxu0 0.0
    %1433 = vmatpush.msra.mxu0 0.0
    %1434 = vmatpush.msra.mxu0 0.0
    %1435 = vmatpush.msra.mxu0 0.0
    %1436 = vmatpush.msra.mxu0 0.0
    %1437 = vmatpush.msra.mxu0 0.0
    %1438 = vmatpush.msra.mxu0 0.0
    %1439 = vmatpush.msra.mxu0 0.0
    %1440 = vmatpush.msra.mxu0 0.0
    %1441 = vmatpush.msra.mxu0 %v1361
    %1442 = vmatpush.msra.mxu0 %v1360
    %1443 = vmatpush.msra.mxu0 %v1359
    %1444 = vmatpush.msra.mxu0 %v1358
    %1445 = vmatmul.f32.gmra.mxu0 %v1424
    %v1446 = vpop.f32.mrf.mxu0
    %v1447 = vadd.f32 0.0, %v1446
    %1448 = vmatmul.f32.gmra.mxu0 %v1427
    %v1449 = vpop.f32.mrf.mxu0
    %v1450 = vadd.f32 0.0, %v1449
    %1451 = vdwg.mxu0
    %1452 = vmatpush.msra.mxu0 0.0
    %1453 = vmatpush.msra.mxu0 0.0
    %1454 = vmatpush.msra.mxu0 0.0
    %1455 = vmatpush.msra.mxu0 0.0
    %1456 = vmatpush.msra.mxu0 0.0
    %1457 = vmatpush.msra.mxu0 0.0
    %1458 = vmatpush.msra.mxu0 0.0
    %1459 = vmatpush.msra.mxu0 0.0
    %1460 = vmatpush.msra.mxu0 0.0
    %1461 = vmatpush.msra.mxu0 0.0
    %1462 = vmatpush.msra.mxu0 0.0
    %1463 = vmatpush.msra.mxu0 0.0
    %1464 = vmatpush.msra.mxu0 %v1365
    %1465 = vmatpush.msra.mxu0 %v1364
    %1466 = vmatpush.msra.mxu0 %v1363
    %1467 = vmatpush.msra.mxu0 %v1362
    %1468 = vmatmul.f32.gmra.mxu0 %v1424
    %v1469 = vpop.f32.mrf.mxu0
    %v1470 = vadd.f32 0.0, %v1469
    %1471 = vmatmul.f32.gmra.mxu0 %v1427
    %v1472 = vpop.f32.mrf.mxu0
    %v1473 = vadd.f32 0.0, %v1472
    %1474 = vdwg.mxu0
    %1475 = vmatpush.msra.mxu0 0.0
    %1476 = vmatpush.msra.mxu0 0.0
    %1477 = vmatpush.msra.mxu0 0.0
    %1478 = vmatpush.msra.mxu0 0.0
    %1479 = vmatpush.msra.mxu0 0.0
    %1480 = vmatpush.msra.mxu0 0.0
    %1481 = vmatpush.msra.mxu0 0.0
    %1482 = vmatpush.msra.mxu0 0.0
    %1483 = vmatpush.msra.mxu0 0.0
    %1484 = vmatpush.msra.mxu0 0.0
    %1485 = vmatpush.msra.mxu0 0.0
    %1486 = vmatpush.msra.mxu0 0.0
    %1487 = vmatpush.msra.mxu0 %v1369
    %1488 = vmatpush.msra.mxu0 %v1368
    %1489 = vmatpush.msra.mxu0 %v1367
    %1490 = vmatpush.msra.mxu0 %v1366
    %1491 = vmatmul.f32.gmra.mxu0 %v1424
    %v1492 = vpop.f32.mrf.mxu0
    %v1493 = vadd.f32 0.0, %v1492
    %1494 = vmatmul.f32.gmra.mxu0 %v1427
    %v1495 = vpop.f32.mrf.mxu0
    %v1496 = vadd.f32 0.0, %v1495
    %1497 = vdwg.mxu0
    %1498 = vmatpush.msra.mxu0 0.0
    %1499 = vmatpush.msra.mxu0 0.0
    %1500 = vmatpush.msra.mxu0 0.0
    %1501 = vmatpush.msra.mxu0 0.0
    %1502 = vmatpush.msra.mxu0 0.0
    %1503 = vmatpush.msra.mxu0 0.0
    %1504 = vmatpush.msra.mxu0 0.0
    %1505 = vmatpush.msra.mxu0 0.0
    %1506 = vmatpush.msra.mxu0 0.0
    %1507 = vmatpush.msra.mxu0 0.0
    %1508 = vmatpush.msra.mxu0 0.0
    %1509 = vmatpush.msra.mxu0 0.0
    %1510 = vmatpush.msra.mxu0 %v1373
    %1511 = vmatpush.msra.mxu0 %v1372
    %1512 = vmatpush.msra.mxu0 %v1371
    %1513 = vmatpush.msra.mxu0 %v1370
    %1514 = vmatmul.f32.gmra.mxu0 %v1424
    %v1515 = vpop.f32.mrf.mxu0
    %v1516 = vadd.f32 0.0, %v1515
    %1517 = vmatmul.f32.gmra.mxu0 %v1427
    %v1518 = vpop.f32.mrf.mxu0
    %v1519 = vadd.f32 0.0, %v1518
    %1520 = vdwg.mxu0
    %v1525 = vperm.slane %v1409, 0
    %v1526 = vperm.slane %v1410, 0
    %v1527 = vperm.slane %v1411, 0
    %v1528 = vperm.slane %v1412, 0
    %v1533 = vadd.f32 %v1447, %v1525
    %v1534 = vadd.f32 %v1450, %v1525
    %v1535 = vadd.f32 %v1470, %v1526
    %v1536 = vadd.f32 %v1473, %v1526
    %v1537 = vadd.f32 %v1493, %v1527
    %v1538 = vadd.f32 %v1496, %v1527
    %v1539 = vadd.f32 %v1516, %v1528
    %v1540 = vadd.f32 %v1519, %v1528
    %1541 = vmatpush.msra.mxu0 0.0
    %1542 = vmatpush.msra.mxu0 0.0
    %1543 = vmatpush.msra.mxu0 0.0
    %1544 = vmatpush.msra.mxu0 0.0
    %1545 = vmatpush.msra.mxu0 0.0
    %1546 = vmatpush.msra.mxu0 0.0
    %1547 = vmatpush.msra.mxu0 0.0
    %1548 = vmatpush.msra.mxu0 0.0
    %1549 = vmatpush.msra.mxu0 0.0
    %1550 = vmatpush.msra.mxu0 0.0
    %1551 = vmatpush.msra.mxu0 0.0
    %1552 = vmatpush.msra.mxu0 0.0
    %1553 = vmatpush.msra.mxu0 %v1378
    %1554 = vmatpush.msra.mxu0 %v1377
    %1555 = vmatpush.msra.mxu0 %v1376
    %1556 = vmatpush.msra.mxu0 %v1375
    %1557 = vmatmul.f32.gmra.mxu0 %v1424
    %v1558 = vpop.f32.mrf.mxu0
    %v1559 = vadd.f32 0.0, %v1558
    %1560 = vmatmul.f32.gmra.mxu0 %v1427
    %v1561 = vpop.f32.mrf.mxu0
    %v1562 = vadd.f32 0.0, %v1561
    %1563 = vdwg.mxu0
    %1564 = vmatpush.msra.mxu0 0.0
    %1565 = vmatpush.msra.mxu0 0.0
    %1566 = vmatpush.msra.mxu0 0.0
    %1567 = vmatpush.msra.mxu0 0.0
    %1568 = vmatpush.msra.mxu0 0.0
    %1569 = vmatpush.msra.mxu0 0.0
    %1570 = vmatpush.msra.mxu0 0.0
    %1571 = vmatpush.msra.mxu0 0.0
    %1572 = vmatpush.msra.mxu0 0.0
    %1573 = vmatpush.msra.mxu0 0.0
    %1574 = vmatpush.msra.mxu0 0.0
    %1575 = vmatpush.msra.mxu0 0.0
    %1576 = vmatpush.msra.mxu0 %v1382
    %1577 = vmatpush.msra.mxu0 %v1381
    %1578 = vmatpush.msra.mxu0 %v1380
    %1579 = vmatpush.msra.mxu0 %v1379
    %1580 = vmatmul.f32.gmra.mxu0 %v1424
    %v1581 = vpop.f32.mrf.mxu0
    %v1582 = vadd.f32 0.0, %v1581
    %1583 = vmatmul.f32.gmra.mxu0 %v1427
    %v1584 = vpop.f32.mrf.mxu0
    %v1585 = vadd.f32 0.0, %v1584
    %1586 = vdwg.mxu0
    %1587 = vmatpush.msra.mxu0 0.0
    %1588 = vmatpush.msra.mxu0 0.0
    %1589 = vmatpush.msra.mxu0 0.0
    %1590 = vmatpush.msra.mxu0 0.0
    %1591 = vmatpush.msra.mxu0 0.0
    %1592 = vmatpush.msra.mxu0 0.0
    %1593 = vmatpush.msra.mxu0 0.0
    %1594 = vmatpush.msra.mxu0 0.0
    %1595 = vmatpush.msra.mxu0 0.0
    %1596 = vmatpush.msra.mxu0 0.0
    %1597 = vmatpush.msra.mxu0 0.0
    %1598 = vmatpush.msra.mxu0 0.0
    %1599 = vmatpush.msra.mxu0 %v1386
    %1600 = vmatpush.msra.mxu0 %v1385
    %1601 = vmatpush.msra.mxu0 %v1384
    %1602 = vmatpush.msra.mxu0 %v1383
    %1603 = vmatmul.f32.gmra.mxu0 %v1424
    %v1604 = vpop.f32.mrf.mxu0
    %v1605 = vadd.f32 0.0, %v1604
    %1606 = vmatmul.f32.gmra.mxu0 %v1427
    %v1607 = vpop.f32.mrf.mxu0
    %v1608 = vadd.f32 0.0, %v1607
    %1609 = vdwg.mxu0
    %1610 = vmatpush.msra.mxu0 0.0
    %1611 = vmatpush.msra.mxu0 0.0
    %1612 = vmatpush.msra.mxu0 0.0
    %1613 = vmatpush.msra.mxu0 0.0
    %1614 = vmatpush.msra.mxu0 0.0
    %1615 = vmatpush.msra.mxu0 0.0
    %1616 = vmatpush.msra.mxu0 0.0
    %1617 = vmatpush.msra.mxu0 0.0
    %1618 = vmatpush.msra.mxu0 0.0
    %1619 = vmatpush.msra.mxu0 0.0
    %1620 = vmatpush.msra.mxu0 0.0
    %1621 = vmatpush.msra.mxu0 0.0
    %1622 = vmatpush.msra.mxu0 %v1390
    %1623 = vmatpush.msra.mxu0 %v1389
    %1624 = vmatpush.msra.mxu0 %v1388
    %1625 = vmatpush.msra.mxu0 %v1387
    %1626 = vmatmul.f32.gmra.mxu0 %v1424
    %v1627 = vpop.f32.mrf.mxu0
    %v1628 = vadd.f32 0.0, %v1627
    %1629 = vmatmul.f32.gmra.mxu0 %v1427
    %v1630 = vpop.f32.mrf.mxu0
    %v1631 = vadd.f32 0.0, %v1630
    %1632 = vdwg.mxu0
    %v1637 = vperm.slane %v1414, 0
    %v1638 = vperm.slane %v1415, 0
    %v1639 = vperm.slane %v1416, 0
    %v1640 = vperm.slane %v1417, 0
    %v1645 = vadd.f32 %v1559, %v1637
    %v1646 = vadd.f32 %v1562, %v1637
    %v1647 = vadd.f32 %v1582, %v1638
    %v1648 = vadd.f32 %v1585, %v1638
    %v1649 = vadd.f32 %v1605, %v1639
    %v1650 = vadd.f32 %v1608, %v1639
    %v1651 = vadd.f32 %v1628, %v1640
    %v1652 = vadd.f32 %v1631, %v1640
    %1653 = vmatpush.msra.mxu0 0.0
    %1654 = vmatpush.msra.mxu0 0.0
    %1655 = vmatpush.msra.mxu0 0.0
    %1656 = vmatpush.msra.mxu0 0.0
    %1657 = vmatpush.msra.mxu0 0.0
    %1658 = vmatpush.msra.mxu0 0.0
    %1659 = vmatpush.msra.mxu0 0.0
    %1660 = vmatpush.msra.mxu0 0.0
    %1661 = vmatpush.msra.mxu0 0.0
    %1662 = vmatpush.msra.mxu0 0.0
    %1663 = vmatpush.msra.mxu0 0.0
    %1664 = vmatpush.msra.mxu0 0.0
    %1665 = vmatpush.msra.mxu0 %v1395
    %1666 = vmatpush.msra.mxu0 %v1394
    %1667 = vmatpush.msra.mxu0 %v1393
    %1668 = vmatpush.msra.mxu0 %v1392
    %1669 = vmatmul.f32.gmra.mxu0 %v1424
    %v1670 = vpop.f32.mrf.mxu0
    %v1671 = vadd.f32 0.0, %v1670
    %1672 = vmatmul.f32.gmra.mxu0 %v1427
    %v1673 = vpop.f32.mrf.mxu0
    %v1674 = vadd.f32 0.0, %v1673
    %1675 = vdwg.mxu0
    %1676 = vmatpush.msra.mxu0 0.0
    %1677 = vmatpush.msra.mxu0 0.0
    %1678 = vmatpush.msra.mxu0 0.0
    %1679 = vmatpush.msra.mxu0 0.0
    %1680 = vmatpush.msra.mxu0 0.0
    %1681 = vmatpush.msra.mxu0 0.0
    %1682 = vmatpush.msra.mxu0 0.0
    %1683 = vmatpush.msra.mxu0 0.0
    %1684 = vmatpush.msra.mxu0 0.0
    %1685 = vmatpush.msra.mxu0 0.0
    %1686 = vmatpush.msra.mxu0 0.0
    %1687 = vmatpush.msra.mxu0 0.0
    %1688 = vmatpush.msra.mxu0 %v1399
    %1689 = vmatpush.msra.mxu0 %v1398
    %1690 = vmatpush.msra.mxu0 %v1397
    %1691 = vmatpush.msra.mxu0 %v1396
    %1692 = vmatmul.f32.gmra.mxu0 %v1424
    %v1693 = vpop.f32.mrf.mxu0
    %v1694 = vadd.f32 0.0, %v1693
    %1695 = vmatmul.f32.gmra.mxu0 %v1427
    %v1696 = vpop.f32.mrf.mxu0
    %v1697 = vadd.f32 0.0, %v1696
    %1698 = vdwg.mxu0
    %1699 = vmatpush.msra.mxu0 0.0
    %1700 = vmatpush.msra.mxu0 0.0
    %1701 = vmatpush.msra.mxu0 0.0
    %1702 = vmatpush.msra.mxu0 0.0
    %1703 = vmatpush.msra.mxu0 0.0
    %1704 = vmatpush.msra.mxu0 0.0
    %1705 = vmatpush.msra.mxu0 0.0
    %1706 = vmatpush.msra.mxu0 0.0
    %1707 = vmatpush.msra.mxu0 0.0
    %1708 = vmatpush.msra.mxu0 0.0
    %1709 = vmatpush.msra.mxu0 0.0
    %1710 = vmatpush.msra.mxu0 0.0
    %1711 = vmatpush.msra.mxu0 %v1403
    %1712 = vmatpush.msra.mxu0 %v1402
    %1713 = vmatpush.msra.mxu0 %v1401
    %1714 = vmatpush.msra.mxu0 %v1400
    %1715 = vmatmul.f32.gmra.mxu0 %v1424
    %v1716 = vpop.f32.mrf.mxu0
    %v1717 = vadd.f32 0.0, %v1716
    %1718 = vmatmul.f32.gmra.mxu0 %v1427
    %v1719 = vpop.f32.mrf.mxu0
    %v1720 = vadd.f32 0.0, %v1719
    %1721 = vdwg.mxu0
    %1722 = vmatpush.msra.mxu0 0.0
    %1723 = vmatpush.msra.mxu0 0.0
    %1724 = vmatpush.msra.mxu0 0.0
    %1725 = vmatpush.msra.mxu0 0.0
    %1726 = vmatpush.msra.mxu0 0.0
    %1727 = vmatpush.msra.mxu0 0.0
    %1728 = vmatpush.msra.mxu0 0.0
    %1729 = vmatpush.msra.mxu0 0.0
    %1730 = vmatpush.msra.mxu0 0.0
    %1731 = vmatpush.msra.mxu0 0.0
    %1732 = vmatpush.msra.mxu0 0.0
    %1733 = vmatpush.msra.mxu0 0.0
    %1734 = vmatpush.msra.mxu0 %v1407
    %1735 = vmatpush.msra.mxu0 %v1406
    %1736 = vmatpush.msra.mxu0 %v1405
    %1737 = vmatpush.msra.mxu0 %v1404
    %1738 = vmatmul.f32.gmra.mxu0 %v1424
    %v1739 = vpop.f32.mrf.mxu0
    %v1740 = vadd.f32 0.0, %v1739
    %1741 = vmatmul.f32.gmra.mxu0 %v1427
    %v1742 = vpop.f32.mrf.mxu0
    %v1743 = vadd.f32 0.0, %v1742
    %1744 = vdwg.mxu0
    %v1749 = vperm.slane %v1419, 0
    %v1750 = vperm.slane %v1420, 0
    %v1751 = vperm.slane %v1421, 0
    %v1752 = vperm.slane %v1422, 0
    %v1757 = vadd.f32 %v1671, %v1749
    %v1758 = vadd.f32 %v1674, %v1749
    %v1759 = vadd.f32 %v1694, %v1750
    %v1760 = vadd.f32 %v1697, %v1750
    %v1761 = vadd.f32 %v1717, %v1751
    %v1762 = vadd.f32 %v1720, %v1751
    %v1763 = vadd.f32 %v1740, %v1752
    %v1764 = vadd.f32 %v1743, %v1752
    %v1765 = vmul.f32 %v1533, 0.35355338
    %v1766 = vmul.f32 %v1534, 0.35355338
    %v1767 = vmul.f32 %v1535, 0.35355338
    %v1768 = vmul.f32 %v1536, 0.35355338
    %v1769 = vmul.f32 %v1537, 0.35355338
    %v1770 = vmul.f32 %v1538, 0.35355338
    %v1771 = vmul.f32 %v1539, 0.35355338
    %v1772 = vmul.f32 %v1540, 0.35355338
    %v1774 = vsel %vm649, %v1765, 0
    %v1777 = vsel %vm649, %v1766, 0
    %v1780 = vsel %vm649, %v1645, 0
    %v1783 = vsel %vm649, %v1646, 0
    %1785 = vmatpush.xpose.msra.mxu0 0.0
    %1786 = vmatpush.xpose.msra.mxu0 0.0
    %1787 = vmatpush.xpose.msra.mxu0 0.0
    %1788 = vmatpush.xpose.msra.mxu0 0.0
    %1789 = vmatpush.xpose.msra.mxu0 0.0
    %1790 = vmatpush.xpose.msra.mxu0 0.0
    %1791 = vmatpush.xpose.msra.mxu0 0.0
    %1792 = vmatpush.xpose.msra.mxu0 0.0
    %1793 = vmatpush.xpose.msra.mxu0 0.0
    %1794 = vmatpush.xpose.msra.mxu0 0.0
    %1795 = vmatpush.xpose.msra.mxu0 0.0
    %1796 = vmatpush.xpose.msra.mxu0 0.0
    %1797 = vmatpush.xpose.msra.mxu0 0.0
    %1798 = vmatpush.xpose.msra.mxu0 0.0
    %1799 = vmatpush.xpose.msra.mxu0 %v1783
    %1800 = vmatpush.xpose.msra.mxu0 %v1780
    %1801 = vmatmul.f32.gmra.mxu0 %v1774
    %v1802 = vpop.f32.mrf.mxu0
    %v1803 = vadd.f32 %v172, %v1802
    %1804 = vmatmul.f32.gmra.mxu0 %v1777
    %v1805 = vpop.f32.mrf.mxu0
    %v1806 = vadd.f32 %v173, %v1805
    %1807 = vdwg.mxu0
    %v1809 = vsel %vm649, %v1767, 0
    %v1812 = vsel %vm649, %v1768, 0
    %v1815 = vsel %vm649, %v1647, 0
    %v1818 = vsel %vm649, %v1648, 0
    %1820 = vmatpush.xpose.msra.mxu0 0.0
    %1821 = vmatpush.xpose.msra.mxu0 0.0
    %1822 = vmatpush.xpose.msra.mxu0 0.0
    %1823 = vmatpush.xpose.msra.mxu0 0.0
    %1824 = vmatpush.xpose.msra.mxu0 0.0
    %1825 = vmatpush.xpose.msra.mxu0 0.0
    %1826 = vmatpush.xpose.msra.mxu0 0.0
    %1827 = vmatpush.xpose.msra.mxu0 0.0
    %1828 = vmatpush.xpose.msra.mxu0 0.0
    %1829 = vmatpush.xpose.msra.mxu0 0.0
    %1830 = vmatpush.xpose.msra.mxu0 0.0
    %1831 = vmatpush.xpose.msra.mxu0 0.0
    %1832 = vmatpush.xpose.msra.mxu0 0.0
    %1833 = vmatpush.xpose.msra.mxu0 0.0
    %1834 = vmatpush.xpose.msra.mxu0 %v1818
    %1835 = vmatpush.xpose.msra.mxu0 %v1815
    %1836 = vmatmul.f32.gmra.mxu0 %v1809
    %v1837 = vpop.f32.mrf.mxu0
    %v1838 = vadd.f32 %v172, %v1837
    %1839 = vmatmul.f32.gmra.mxu0 %v1812
    %v1840 = vpop.f32.mrf.mxu0
    %v1841 = vadd.f32 %v173, %v1840
    %1842 = vdwg.mxu0
    %v1844 = vsel %vm649, %v1769, 0
    %v1847 = vsel %vm649, %v1770, 0
    %v1850 = vsel %vm649, %v1649, 0
    %v1853 = vsel %vm649, %v1650, 0
    %1855 = vmatpush.xpose.msra.mxu0 0.0
    %1856 = vmatpush.xpose.msra.mxu0 0.0
    %1857 = vmatpush.xpose.msra.mxu0 0.0
    %1858 = vmatpush.xpose.msra.mxu0 0.0
    %1859 = vmatpush.xpose.msra.mxu0 0.0
    %1860 = vmatpush.xpose.msra.mxu0 0.0
    %1861 = vmatpush.xpose.msra.mxu0 0.0
    %1862 = vmatpush.xpose.msra.mxu0 0.0
    %1863 = vmatpush.xpose.msra.mxu0 0.0
    %1864 = vmatpush.xpose.msra.mxu0 0.0
    %1865 = vmatpush.xpose.msra.mxu0 0.0
    %1866 = vmatpush.xpose.msra.mxu0 0.0
    %1867 = vmatpush.xpose.msra.mxu0 0.0
    %1868 = vmatpush.xpose.msra.mxu0 0.0
    %1869 = vmatpush.xpose.msra.mxu0 %v1853
    %1870 = vmatpush.xpose.msra.mxu0 %v1850
    %1871 = vmatmul.f32.gmra.mxu0 %v1844
    %v1872 = vpop.f32.mrf.mxu0
    %v1873 = vadd.f32 %v172, %v1872
    %1874 = vmatmul.f32.gmra.mxu0 %v1847
    %v1875 = vpop.f32.mrf.mxu0
    %v1876 = vadd.f32 %v173, %v1875
    %1877 = vdwg.mxu0
    %v1879 = vsel %vm649, %v1771, 0
    %v1882 = vsel %vm649, %v1772, 0
    %v1885 = vsel %vm649, %v1651, 0
    %v1888 = vsel %vm649, %v1652, 0
    %1890 = vmatpush.xpose.msra.mxu0 0.0
    %1891 = vmatpush.xpose.msra.mxu0 0.0
    %1892 = vmatpush.xpose.msra.mxu0 0.0
    %1893 = vmatpush.xpose.msra.mxu0 0.0
    %1894 = vmatpush.xpose.msra.mxu0 0.0
    %1895 = vmatpush.xpose.msra.mxu0 0.0
    %1896 = vmatpush.xpose.msra.mxu0 0.0
    %1897 = vmatpush.xpose.msra.mxu0 0.0
    %1898 = vmatpush.xpose.msra.mxu0 0.0
    %1899 = vmatpush.xpose.msra.mxu0 0.0
    %1900 = vmatpush.xpose.msra.mxu0 0.0
    %1901 = vmatpush.xpose.msra.mxu0 0.0
    %1902 = vmatpush.xpose.msra.mxu0 0.0
    %1903 = vmatpush.xpose.msra.mxu0 0.0
    %1904 = vmatpush.xpose.msra.mxu0 %v1888
    %1905 = vmatpush.xpose.msra.mxu0 %v1885
    %1906 = vmatmul.f32.gmra.mxu0 %v1879
    %v1907 = vpop.f32.mrf.mxu0
    %v1908 = vadd.f32 %v172, %v1907
    %1909 = vmatmul.f32.gmra.mxu0 %v1882
    %v1910 = vpop.f32.mrf.mxu0
    %v1911 = vadd.f32 %v173, %v1910
    %1912 = vdwg.mxu0
    %v1913 = vsel %vm790, %v1803, -inf
    %1914 = vmax.xlane.f32.xlu0 %v1913
    %v1915 = vpop.xlane.xlu0 %1914
    %v1916 = vsel %vm794, %v1806, -inf
    %1917 = vmax.xlane.f32.xlu0 %v1916
    %v1918 = vpop.xlane.xlu0 %1917
    %v1919 = vsel %vm790, %v1838, -inf
    %1920 = vmax.xlane.f32.xlu0 %v1919
    %v1921 = vpop.xlane.xlu0 %1920
    %v1922 = vsel %vm794, %v1841, -inf
    %1923 = vmax.xlane.f32.xlu0 %v1922
    %v1924 = vpop.xlane.xlu0 %1923
    %v1925 = vsel %vm790, %v1873, -inf
    %1926 = vmax.xlane.f32.xlu0 %v1925
    %v1927 = vpop.xlane.xlu0 %1926
    %v1928 = vsel %vm794, %v1876, -inf
    %1929 = vmax.xlane.f32.xlu0 %v1928
    %v1930 = vpop.xlane.xlu0 %1929
    %v1931 = vsel %vm790, %v1908, -inf
    %1932 = vmax.xlane.f32.xlu0 %v1931
    %v1933 = vpop.xlane.xlu0 %1932
    %v1934 = vsel %vm794, %v1911, -inf
    %1935 = vmax.xlane.f32.xlu0 %v1934
    %v1936 = vpop.xlane.xlu0 %1935
    %v1937 = vsub.f32 %v1803, %v1915
    %v1938 = vsub.f32 %v1806, %v1918
    %v1939 = vsub.f32 %v1838, %v1921
    %v1940 = vsub.f32 %v1841, %v1924
    %v1941 = vsub.f32 %v1873, %v1927
    %v1942 = vsub.f32 %v1876, %v1930
    %v1943 = vsub.f32 %v1908, %v1933
    %v1944 = vsub.f32 %v1911, %v1936
    %v1945 = vmul.f32 %v1937, 1.442695
    %v1946 = vpow.pop %v1945
    %v1947 = vmul.f32 %v1938, 1.442695
    %v1948 = vpow.pop %v1947
    %v1949 = vmul.f32 %v1939, 1.442695
    %v1950 = vpow.pop %v1949
    %v1951 = vmul.f32 %v1940, 1.442695
    %v1952 = vpow.pop %v1951
    %v1953 = vmul.f32 %v1941, 1.442695
    %v1954 = vpow.pop %v1953
    %v1955 = vmul.f32 %v1942, 1.442695
    %v1956 = vpow.pop %v1955
    %v1957 = vmul.f32 %v1943, 1.442695
    %v1958 = vpow.pop %v1957
    %v1959 = vmul.f32 %v1944, 1.442695
    %v1960 = vpow.pop %v1959
    %v1961 = vsel %vm790, %v1946, 0.0
    %1962 = vadd.xlane.f32.xlu0 %v1961
    %v1963 = vpop.xlane.xlu0 %1962
    %v1964 = vsel %vm794, %v1948, 0.0
    %1965 = vadd.xlane.f32.xlu0 %v1964
    %v1966 = vpop.xlane.xlu0 %1965
    %v1967 = vsel %vm790, %v1950, 0.0
    %1968 = vadd.xlane.f32.xlu0 %v1967
    %v1969 = vpop.xlane.xlu0 %1968
    %v1970 = vsel %vm794, %v1952, 0.0
    %1971 = vadd.xlane.f32.xlu0 %v1970
    %v1972 = vpop.xlane.xlu0 %1971
    %v1973 = vsel %vm790, %v1954, 0.0
    %1974 = vadd.xlane.f32.xlu0 %v1973
    %v1975 = vpop.xlane.xlu0 %1974
    %v1976 = vsel %vm794, %v1956, 0.0
    %1977 = vadd.xlane.f32.xlu0 %v1976
    %v1978 = vpop.xlane.xlu0 %1977
    %v1979 = vsel %vm790, %v1958, 0.0
    %1980 = vadd.xlane.f32.xlu0 %v1979
    %v1981 = vpop.xlane.xlu0 %1980
    %v1982 = vsel %vm794, %v1960, 0.0
    %1983 = vadd.xlane.f32.xlu0 %v1982
    %v1984 = vpop.xlane.xlu0 %1983
    %v1985 = vrcp.pop %v1963
    %v1986 = vrcp.pop %v1966
    %v1987 = vrcp.pop %v1969
    %v1988 = vrcp.pop %v1972
    %v1989 = vrcp.pop %v1975
    %v1990 = vrcp.pop %v1978
    %v1991 = vrcp.pop %v1981
    %v1992 = vrcp.pop %v1984
    %v1993 = vmul.f32 %v1946, %v1985
    %v1994 = vmul.f32 %v1948, %v1986
    %v1995 = vmul.f32 %v1950, %v1987
    %v1996 = vmul.f32 %v1952, %v1988
    %v1997 = vmul.f32 %v1954, %v1989
    %v1998 = vmul.f32 %v1956, %v1990
    %v1999 = vmul.f32 %v1958, %v1991
    %v2000 = vmul.f32 %v1960, %v1992
    %v2002 = vsel %vm790, %v1993, 0
    %v2005 = vsel %vm790, %v1994, 0
    %v2008 = vsel %vm886, %v1758, 0
    %2010 = vmatpush.msra.mxu0 0.0
    %2011 = vmatpush.msra.mxu0 0.0
    %2012 = vmatpush.msra.mxu0 0.0
    %2013 = vmatpush.msra.mxu0 0.0
    %2014 = vmatpush.msra.mxu0 0.0
    %2015 = vmatpush.msra.mxu0 0.0
    %2016 = vmatpush.msra.mxu0 0.0
    %2017 = vmatpush.msra.mxu0 0.0
    %2018 = vmatpush.msra.mxu0 0.0
    %2019 = vmatpush.msra.mxu0 0.0
    %2020 = vmatpush.msra.mxu0 0.0
    %2021 = vmatpush.msra.mxu0 0.0
    %2022 = vmatpush.msra.mxu0 0.0
    %2023 = vmatpush.msra.mxu0 0.0
    %2024 = vmatpush.msra.mxu0 %v2008
    %2025 = vmatpush.msra.mxu0 %v1757
    %2026 = vmatmul.f32.gmra.mxu0 %v2002
    %v2027 = vpop.f32.mrf.mxu0
    %v2028 = vadd.f32 0.0, %v2027
    %2029 = vmatmul.f32.gmra.mxu0 %v2005
    %v2030 = vpop.f32.mrf.mxu0
    %v2031 = vadd.f32 0.0, %v2030
    %2032 = vdwg.mxu0
    %v2034 = vsel %vm790, %v1995, 0
    %v2037 = vsel %vm790, %v1996, 0
    %v2040 = vsel %vm886, %v1760, 0
    %2042 = vmatpush.msra.mxu0 0.0
    %2043 = vmatpush.msra.mxu0 0.0
    %2044 = vmatpush.msra.mxu0 0.0
    %2045 = vmatpush.msra.mxu0 0.0
    %2046 = vmatpush.msra.mxu0 0.0
    %2047 = vmatpush.msra.mxu0 0.0
    %2048 = vmatpush.msra.mxu0 0.0
    %2049 = vmatpush.msra.mxu0 0.0
    %2050 = vmatpush.msra.mxu0 0.0
    %2051 = vmatpush.msra.mxu0 0.0
    %2052 = vmatpush.msra.mxu0 0.0
    %2053 = vmatpush.msra.mxu0 0.0
    %2054 = vmatpush.msra.mxu0 0.0
    %2055 = vmatpush.msra.mxu0 0.0
    %2056 = vmatpush.msra.mxu0 %v2040
    %2057 = vmatpush.msra.mxu0 %v1759
    %2058 = vmatmul.f32.gmra.mxu0 %v2034
    %v2059 = vpop.f32.mrf.mxu0
    %v2060 = vadd.f32 0.0, %v2059
    %2061 = vmatmul.f32.gmra.mxu0 %v2037
    %v2062 = vpop.f32.mrf.mxu0
    %v2063 = vadd.f32 0.0, %v2062
    %2064 = vdwg.mxu0
    %v2066 = vsel %vm790, %v1997, 0
    %v2069 = vsel %vm790, %v1998, 0
    %v2072 = vsel %vm886, %v1762, 0
    %2074 = vmatpush.msra.mxu0 0.0
    %2075 = vmatpush.msra.mxu0 0.0
    %2076 = vmatpush.msra.mxu0 0.0
    %2077 = vmatpush.msra.mxu0 0.0
    %2078 = vmatpush.msra.mxu0 0.0
    %2079 = vmatpush.msra.mxu0 0.0
    %2080 = vmatpush.msra.mxu0 0.0
    %2081 = vmatpush.msra.mxu0 0.0
    %2082 = vmatpush.msra.mxu0 0.0
    %2083 = vmatpush.msra.mxu0 0.0
    %2084 = vmatpush.msra.mxu0 0.0
    %2085 = vmatpush.msra.mxu0 0.0
    %2086 = vmatpush.msra.mxu0 0.0
    %2087 = vmatpush.msra.mxu0 0.0
    %2088 = vmatpush.msra.mxu0 %v2072
    %2089 = vmatpush.msra.mxu0 %v1761
    %2090 = vmatmul.f32.gmra.mxu0 %v2066
    %v2091 = vpop.f32.mrf.mxu0
    %v2092 = vadd.f32 0.0, %v2091
    %2093 = vmatmul.f32.gmra.mxu0 %v2069
    %v2094 = vpop.f32.mrf.mxu0
    %v2095 = vadd.f32 0.0, %v2094
    %2096 = vdwg.mxu0
    %v2098 = vsel %vm790, %v1999, 0
    %v2101 = vsel %vm790, %v2000, 0
    %v2104 = vsel %vm886, %v1764, 0
    %2106 = vmatpush.msra.mxu0 0.0
    %2107 = vmatpush.msra.mxu0 0.0
    %2108 = vmatpush.msra.mxu0 0.0
    %2109 = vmatpush.msra.mxu0 0.0
    %2110 = vmatpush.msra.mxu0 0.0
    %2111 = vmatpush.msra.mxu0 0.0
    %2112 = vmatpush.msra.mxu0 0.0
    %2113 = vmatpush.msra.mxu0 0.0
    %2114 = vmatpush.msra.mxu0 0.0
    %2115 = vmatpush.msra.mxu0 0.0
    %2116 = vmatpush.msra.mxu0 0.0
    %2117 = vmatpush.msra.mxu0 0.0
    %2118 = vmatpush.msra.mxu0 0.0
    %2119 = vmatpush.msra.mxu0 0.0
    %2120 = vmatpush.msra.mxu0 %v2104
    %2121 = vmatpush.msra.mxu0 %v1763
    %2122 = vmatmul.f32.gmra.mxu0 %v2098
    %v2123 = vpop.f32.mrf.mxu0
    %v2124 = vadd.f32 0.0, %v2123
    %2125 = vmatmul.f32.gmra.mxu0 %v2101
    %v2126 = vpop.f32.mrf.mxu0
    %v2127 = vadd.f32 0.0, %v2126
    %2128 = vdwg.mxu0
    %s2129 = scalar_lea.vmem %s14, 32
    %v2130 = vld [vmem:[%s2129] sm:$0xff]
    %v2131 = vld [vmem:[%s2129 + $0x8] sm:$0xff]
    %v2132 = vld [vmem:[%s2129 + $0x10] sm:$0xff]
    %v2133 = vld [vmem:[%s2129 + $0x18] sm:$0xff]
    %v2135 = vsel %vm649, %v2060, 0
    %v2138 = vsel %vm649, %v2063, 0
    %2140 = vmatpush.msra.mxu0 0.0
    %2141 = vmatpush.msra.mxu0 0.0
    %2142 = vmatpush.msra.mxu0 0.0
    %2143 = vmatpush.msra.mxu0 0.0
    %2144 = vmatpush.msra.mxu0 0.0
    %2145 = vmatpush.msra.mxu0 0.0
    %2146 = vmatpush.msra.mxu0 0.0
    %2147 = vmatpush.msra.mxu0 0.0
    %2148 = vmatpush.msra.mxu0 0.0
    %2149 = vmatpush.msra.mxu0 0.0
    %2150 = vmatpush.msra.mxu0 0.0
    %2151 = vmatpush.msra.mxu0 0.0
    %2152 = vmatpush.msra.mxu0 0.0
    %2153 = vmatpush.msra.mxu0 0.0
    %2154 = vmatpush.msra.mxu0 0.0
    %2155 = vmatpush.msra.mxu0 %v2131
    %2156 = vmatmul.f32.gmra.mxu0 %v2135
    %v2157 = vpop.f32.mrf.mxu0
    %v2158 = vadd.f32 0.0, %v2157
    %2159 = vmatmul.f32.gmra.mxu0 %v2138
    %v2160 = vpop.f32.mrf.mxu0
    %v2161 = vadd.f32 0.0, %v2160
    %2162 = vdwg.mxu0
    %v2164 = vsel %vm649, %v2028, 0
    %v2167 = vsel %vm649, %v2031, 0
    %2169 = vmatpush.msra.mxu0 0.0
    %2170 = vmatpush.msra.mxu0 0.0
    %2171 = vmatpush.msra.mxu0 0.0
    %2172 = vmatpush.msra.mxu0 0.0
    %2173 = vmatpush.msra.mxu0 0.0
    %2174 = vmatpush.msra.mxu0 0.0
    %2175 = vmatpush.msra.mxu0 0.0
    %2176 = vmatpush.msra.mxu0 0.0
    %2177 = vmatpush.msra.mxu0 0.0
    %2178 = vmatpush.msra.mxu0 0.0
    %2179 = vmatpush.msra.mxu0 0.0
    %2180 = vmatpush.msra.mxu0 0.0
    %2181 = vmatpush.msra.mxu0 0.0
    %2182 = vmatpush.msra.mxu0 0.0
    %2183 = vmatpush.msra.mxu0 0.0
    %2184 = vmatpush.msra.mxu0 %v2130
    %2185 = vmatmul.f32.gmra.mxu0 %v2164
    %v2186 = vpop.f32.mrf.mxu0
    %v2187 = vadd.f32 %v2158, %v2186
    %2188 = vmatmul.f32.gmra.mxu0 %v2167
    %v2189 = vpop.f32.mrf.mxu0
    %v2190 = vadd.f32 %v2161, %v2189
    %2191 = vdwg.mxu0
    %v2193 = vsel %vm649, %v2092, 0
    %v2196 = vsel %vm649, %v2095, 0
    %2198 = vmatpush.msra.mxu0 0.0
    %2199 = vmatpush.msra.mxu0 0.0
    %2200 = vmatpush.msra.mxu0 0.0
    %2201 = vmatpush.msra.mxu0 0.0
    %2202 = vmatpush.msra.mxu0 0.0
    %2203 = vmatpush.msra.mxu0 0.0
    %2204 = vmatpush.msra.mxu0 0.0
    %2205 = vmatpush.msra.mxu0 0.0
    %2206 = vmatpush.msra.mxu0 0.0
    %2207 = vmatpush.msra.mxu0 0.0
    %2208 = vmatpush.msra.mxu0 0.0
    %2209 = vmatpush.msra.mxu0 0.0
    %2210 = vmatpush.msra.mxu0 0.0
    %2211 = vmatpush.msra.mxu0 0.0
    %2212 = vmatpush.msra.mxu0 0.0
    %2213 = vmatpush.msra.mxu0 %v2132
    %2214 = vmatmul.f32.gmra.mxu0 %v2193
    %v2215 = vpop.f32.mrf.mxu0
    %v2216 = vadd.f32 0.0, %v2215
    %2217 = vmatmul.f32.gmra.mxu0 %v2196
    %v2218 = vpop.f32.mrf.mxu0
    %v2219 = vadd.f32 0.0, %v2218
    %2220 = vdwg.mxu0
    %v2221 = vadd.f32 %v2187, %v2216
    %v2222 = vadd.f32 %v2190, %v2219
    %v2224 = vsel %vm649, %v2124, 0
    %v2227 = vsel %vm649, %v2127, 0
    %2229 = vmatpush.msra.mxu0 0.0
    %2230 = vmatpush.msra.mxu0 0.0
    %2231 = vmatpush.msra.mxu0 0.0
    %2232 = vmatpush.msra.mxu0 0.0
    %2233 = vmatpush.msra.mxu0 0.0
    %2234 = vmatpush.msra.mxu0 0.0
    %2235 = vmatpush.msra.mxu0 0.0
    %2236 = vmatpush.msra.mxu0 0.0
    %2237 = vmatpush.msra.mxu0 0.0
    %2238 = vmatpush.msra.mxu0 0.0
    %2239 = vmatpush.msra.mxu0 0.0
    %2240 = vmatpush.msra.mxu0 0.0
    %2241 = vmatpush.msra.mxu0 0.0
    %2242 = vmatpush.msra.mxu0 0.0
    %2243 = vmatpush.msra.mxu0 0.0
    %2244 = vmatpush.msra.mxu0 %v2133
    %2245 = vmatmul.f32.gmra.mxu0 %v2224
    %v2246 = vpop.f32.mrf.mxu0
    %v2247 = vadd.f32 0.0, %v2246
    %2248 = vmatmul.f32.gmra.mxu0 %v2227
    %v2249 = vpop.f32.mrf.mxu0
    %v2250 = vadd.f32 0.0, %v2249
    %2251 = vdwg.mxu0
    %v2252 = vadd.f32 %v2221, %v2247
    %v2253 = vadd.f32 %v2222, %v2250
    %v2254 = vadd.f32 %v1297, %v2252
    %v2255 = vadd.f32 %v1298, %v2253
    %s2256 = scalar_lea.vmem %s15, 1
    %v2257 = vld [vmem:[%s2256] sm:$0x1]
    %v2259 = vperm.slane %v2257, 0
    %v2261 = vadd.f32 %v2254, %v2259
    %v2262 = vadd.f32 %v2255, %v2259
    %s2263 = scalar_lea.vmem %s16, 1
    %v2264 = vld [vmem:[%s2263] sm:$0x1]
    %s2265 = scalar_lea.vmem %s17, 1
    %v2266 = vld [vmem:[%s2265] sm:$0x1]
    %v2267 = vsel %vm176, %v2261, 0.0
    %2268 = vadd.xlane.f32.xlu0 %v2267
    %v2269 = vpop.xlane.xlu0 %2268
    %v2270 = vsel %vm180, %v2262, 0.0
    %2271 = vadd.xlane.f32.xlu0 %v2270
    %v2272 = vpop.xlane.xlu0 %2271
    %v2273 = vmul.f32 %v2269, %v190
    %v2274 = vmul.f32 %v2272, %v190
    %v2275 = vsub.f32 %v2261, %v2273
    %v2276 = vsub.f32 %v2262, %v2274
    %v2277 = vmul.f32 %v2275, %v2275
    %v2278 = vmul.f32 %v2276, %v2276
    %v2279 = vsel %vm176, %v2277, 0.0
    %2280 = vadd.xlane.f32.xlu0 %v2279
    %v2281 = vpop.xlane.xlu0 %2280
    %v2282 = vsel %vm180, %v2278, 0.0
    %2283 = vadd.xlane.f32.xlu0 %v2282
    %v2284 = vpop.xlane.xlu0 %2283
    %v2285 = vmul.f32 %v2281, %v190
    %v2286 = vmul.f32 %v2284, %v190
    %v2287 = vadd.f32 %v2285, 1e-06
    %v2288 = vadd.f32 %v2286, 1e-06
    %v2289 = vrsqrt.pop %v2287
    %v2290 = vmul.f32 %v2289, %v2287
    %v2291 = vmul.f32 %v2290, %v2289
    %v2292 = vmul.f32 0.5, %v2291
    %v2293 = vsub.f32 1.5, %v2292
    %v2294 = vmul.f32 %v2289, %v2293
    %vm2295 = vweird.f32 %v2287
    %vm2296 = vweird.f32 %v2289
    %vm2297 = vmor %vm2295, %vm2296
    %v2298 = vsel %vm2297, %v2289, %v2294
    %v2299 = vrsqrt.pop %v2288
    %v2300 = vmul.f32 %v2299, %v2288
    %v2301 = vmul.f32 %v2300, %v2299
    %v2302 = vmul.f32 0.5, %v2301
    %v2303 = vsub.f32 1.5, %v2302
    %v2304 = vmul.f32 %v2299, %v2303
    %vm2305 = vweird.f32 %v2288
    %vm2306 = vweird.f32 %v2299
    %vm2307 = vmor %vm2305, %vm2306
    %v2308 = vsel %vm2307, %v2299, %v2304
    %v2309 = vmul.f32 %v2275, %v2298
    %v2310 = vmul.f32 %v2276, %v2308
    %v2312 = vperm.slane %v2264, 0
    %v2314 = vmul.f32 %v2309, %v2312
    %v2315 = vmul.f32 %v2310, %v2312
    %v2317 = vperm.slane %v2266, 0
    %v2319 = vadd.f32 %v2314, %v2317
    %v2320 = vadd.f32 %v2315, %v2317
    %s2321 = scalar_lea.vmem %s18, 32
    %v2322 = vld [vmem:[%s2321] sm:$0xff]
    %v2323 = vld [vmem:[%s2321 + $0x8] sm:$0xff]
    %v2324 = vld [vmem:[%s2321 + $0x10] sm:$0xff]
    %v2325 = vld [vmem:[%s2321 + $0x18] sm:$0xff]
    %s2326 = scalar_lea.vmem %s19, 1
    %v2327 = vld [vmem:[%s2326] sm:$0x1]
    %v2329 = vperm.slane %v2327, 0
    %v2332 = vsel %vm176, %v2319, 0
    %v2335 = vsel %vm176, %v2320, 0
    %2337 = vmatpush.msra.mxu0 0.0
    %2338 = vmatpush.msra.mxu0 0.0
    %2339 = vmatpush.msra.mxu0 0.0
    %2340 = vmatpush.msra.mxu0 0.0
    %2341 = vmatpush.msra.mxu0 0.0
    %2342 = vmatpush.msra.mxu0 0.0
    %2343 = vmatpush.msra.mxu0 0.0
    %2344 = vmatpush.msra.mxu0 0.0
    %2345 = vmatpush.msra.mxu0 0.0
    %2346 = vmatpush.msra.mxu0 0.0
    %2347 = vmatpush.msra.mxu0 0.0
    %2348 = vmatpush.msra.mxu0 0.0
    %2349 = vmatpush.msra.mxu0 %v2325
    %2350 = vmatpush.msra.mxu0 %v2324
    %2351 = vmatpush.msra.mxu0 %v2323
    %2352 = vmatpush.msra.mxu0 %v2322
    %2353 = vmatmul.f32.gmra.mxu0 %v2332
    %v2354 = vpop.f32.mrf.mxu0
    %v2355 = vadd.f32 %v2329, %v2354
    %2356 = vmatmul.f32.gmra.mxu0 %v2335
    %v2357 = vpop.f32.mrf.mxu0
    %v2358 = vadd.f32 %v2329, %v2357
    %2359 = vdwg.mxu0
    %v2360 = vmul.f32 %v2355, 0.5
    %v2361 = vmul.f32 %v2358, 0.5
    %v2362 = vmul.f32 %v2355, 0.044715
    %v2363 = vmul.f32 %v2358, 0.044715
    %v2364 = vmul.f32 %v2362, %v2355
    %v2365 = vmul.f32 %v2363, %v2358
    %v2366 = vmul.f32 %v2364, %v2355
    %v2367 = vmul.f32 %v2365, %v2358
    %v2368 = vadd.f32 %v2355, %v2366
    %v2369 = vadd.f32 %v2358, %v2367
    %v2370 = vmul.f32 %v2368, 0.7978846
    %v2371 = vmul.f32 %v2369, 0.7978846
    %v2372 = vtanh.pop %v2370
    %v2373 = vtanh.pop %v2371
    %v2374 = vadd.f32 %v2372, 1.0
    %v2375 = vadd.f32 %v2373, 1.0
    %v2376 = vmul.f32 %v2360, %v2374
    %v2377 = vmul.f32 %v2361, %v2375
    %s2378 = scalar_lea.vmem %s20, 128
    %v2379 = vld [vmem:[%s2378] sm:$0xff]
    %v2380 = vld [vmem:[%s2378 + $0x8] sm:$0xff]
    %v2381 = vld [vmem:[%s2378 + $0x10] sm:$0xff]
    %v2382 = vld [vmem:[%s2378 + $0x18] sm:$0xff]
    %v2383 = vld [vmem:[%s2378 + $0x20] sm:$0xff]
    %v2384 = vld [vmem:[%s2378 + $0x28] sm:$0xff]
    %v2385 = vld [vmem:[%s2378 + $0x30] sm:$0xff]
    %v2386 = vld [vmem:[%s2378 + $0x38] sm:$0xff]
    %v2387 = vld [vmem:[%s2378 + $0x40] sm:$0xff]
    %v2388 = vld [vmem:[%s2378 + $0x48] sm:$0xff]
    %v2389 = vld [vmem:[%s2378 + $0x50] sm:$0xff]
    %v2390 = vld [vmem:[%s2378 + $0x58] sm:$0xff]
    %v2391 = vld [vmem:[%s2378 + $0x60] sm:$0xff]
    %v2392 = vld [vmem:[%s2378 + $0x68] sm:$0xff]
    %v2393 = vld [vmem:[%s2378 + $0x70] sm:$0xff]
    %v2394 = vld [vmem:[%s2378 + $0x78] sm:$0xff]
    %2395 = vmatpush.msra.mxu0 %v2394
    %2396 = vmatpush.msra.mxu0 %v2393
    %2397 = vmatpush.msra.mxu0 %v2392
    %2398 = vmatpush.msra.mxu0 %v2391
    %2399 = vmatpush.msra.mxu0 %v2390
    %2400 = vmatpush.msra.mxu0 %v2389
    %2401 = vmatpush.msra.mxu0 %v2388
    %2402 = vmatpush.msra.mxu0 %v2387
    %2403 = vmatpush.msra.mxu0 %v2386
    %2404 = vmatpush.msra.mxu0 %v2385
    %2405 = vmatpush.msra.mxu0 %v2384
    %2406 = vmatpush.msra.mxu0 %v2383
    %2407 = vmatpush.msra.mxu0 %v2382
    %2408 = vmatpush.msra.mxu0 %v2381
    %2409 = vmatpush.msra.mxu0 %v2380
    %2410 = vmatpush.msra.mxu0 %v2379
    %2411 = vmatmul.f32.gmra.mxu0 %v2376
    %v2412 = vpop.f32.mrf.mxu0
    %v2413 = vadd.f32 0.0, %v2412
    %2414 = vmatmul.f32.gmra.mxu0 %v2377
    %v2415 = vpop.f32.mrf.mxu0
    %2416 = vdwg.mxu0
    %v2417 = vadd.f32 %v2261, %v2413
    %s2418 = scalar_lea.vmem %s21, 1
    %v2419 = vld [vmem:[%s2418] sm:$0x1]
    %v2421 = vperm.slane %v2419, 0
    %v2423 = vadd.f32 %v2417, %v2421
    %v2425 = vrot.slane %v2423, 4
    %v2427 = vsel %vm162, %v2423, %v2425
    %v2428 = vld [vmem:[%s22] sm:$0x1]
    %v2429 = vld [vmem:[%s23] sm:$0x1]
    %v2430 = vsel %vm180, %v2427, 0.0
    %2431 = vadd.xlane.f32.xlu0 %v2430
    %v2432 = vpop.xlane.xlu0 %2431
    %v2433 = vmul.f32 %v2432, %v190
    %v2434 = vsub.f32 %v2427, %v2433
    %v2435 = vmul.f32 %v2434, %v2434
    %v2436 = vsel %vm180, %v2435, 0.0
    %2437 = vadd.xlane.f32.xlu0 %v2436
    %v2438 = vpop.xlane.xlu0 %2437
    %v2439 = vmul.f32 %v2438, %v190
    %v2440 = vadd.f32 %v2439, 1e-06
    %v2441 = vrsqrt.pop %v2440
    %v2442 = vmul.f32 %v2441, %v2440
    %v2443 = vmul.f32 %v2442, %v2441
    %v2444 = vmul.f32 0.5, %v2443
    %v2445 = vsub.f32 1.5, %v2444
    %v2446 = vmul.f32 %v2441, %v2445
    %vm2447 = vweird.f32 %v2440
    %vm2448 = vweird.f32 %v2441
    %vm2449 = vmor %vm2447, %vm2448
    %v2450 = vsel %vm2449, %v2441, %v2446
    %v2451 = vmul.f32 %v2434, %v2450
    %v2453 = vperm.slane %v2428, 0
    %v2455 = vmul.f32 %v2451, %v2453
    %v2457 = vperm.slane %v2429, 0
    %v2459 = vadd.f32 %v2455, %v2457
    %2460 = vst.msk [vmem:[#allocation2] sm:$0x3] %vm180, %v2459
    // Predicated region
    $region98: #{tpu_custom_call.1} parent=1 // pred_check
      _
    $region99: #{tpu_custom_call.1} parent=1 // pred_check_branch
      %2462 = sbr.rel (0) target = $region101
    $region100: #{tpu_custom_call.1} parent=1 // pred_region
      %2464 = vsyncadd [#allocation3], 0
      %s2466 = sshll.u32 [#allocation2], 4
      %s2467 = int_to_ptr.vmem [resolvable:$true] %s2466
      %s2468 = sshll.u32 %s24, 4
      %s2469 = int_to_ptr.hbm [resolvable:$true] %s2468
      %2471 = dma.vmem_to_hbm [thread:$0]  %s2467, 32, %s2469, [#allocation3]
    $region101: #{tpu_custom_call.1} parent=1 // pred_fallthru
      _
    // Predicated region
    $region102: #{tpu_custom_call.1} parent=1 // pred_check
      _
    $region103: #{tpu_custom_call.1} parent=1 // pred_check_branch
      %2473 = sbr.rel (0) target = $region105
    $region104: #{tpu_custom_call.1} parent=1 // pred_region
      %2475 = dma.done [#allocation3], 32
    $region105: #{tpu_custom_call.1} parent=1 // pred_fallthru
      _
    %2476 = vsyncpa [#allocation3], 1

</llo_original>
